<compile_context>
chip_gen: v7x
topology: tpu7x:2x2x1
jax: 0.10.0
libtpu: 0.0.40
codegen_flags: <defaults>
</compile_context>

<pallas_src>
import functools
import math

import jax
import jax.numpy as jnp
from jax.experimental import pallas as pl
from jax.experimental.pallas import tpu as pltpu


def _round_up(x, m):
    return ((x + m - 1) // m) * m


# ---------------------------------------------------------------------------
# Pallas kernel 1: one full bidirectional GRU layer (both directions), single
# invocation (no grid), recurrence as an in-kernel fori_loop.
#
# Shapes (Hp = n_hidden padded to a multiple of 128, G = 3*Hp, gate order
# [r, z, n] as in PyTorch):
#   x_ref  : (L, N, I)      f32   layer input (L = recurrence axis)
#   wi_ref : (2, I, G)      bf16  stacked/padded input-to-hidden weights
#   wh_ref : (2, Hp, G)     bf16  stacked/padded hidden-to-hidden weights
#   bi_ref : (2, 1, G)      f32
#   bh_ref : (2, 1, G)      f32
#   out_ref: (L, N, 2*Hp)   f32   fwd hidden in lanes [0:Hp], bwd in [Hp:2Hp]
#   gx_ref : (2, L, N, G)   f32   VMEM scratch for precomputed x@Wi + bi
# ---------------------------------------------------------------------------
def _bigru_layer_kernel(x_ref, wi_ref, wh_ref, bi_ref, bh_ref, out_ref, gx_ref):
    L, N, I = x_ref.shape
    Hp = wh_ref.shape[1]
    G = 3 * Hp

    # Hoisted input projections: one wide MXU matmul per direction covering all
    # recurrence steps, with the input bias folded in once.
    x2d = x_ref[...].reshape(L * N, I).astype(jnp.bfloat16)
    for d in range(2):
        g = jnp.dot(x2d, wi_ref[d], preferred_element_type=jnp.float32)
        gx_ref[d] = (g + bi_ref[d]).reshape(L, N, G)

    def gru_step(g, h, d):
        # Single stacked (Hp, 3Hp) matmul per step; all lane slices are
        # 128-aligned.  bf16 MXU operands, f32 accumulation, f32 gate math.
        gh = jnp.dot(h.astype(jnp.bfloat16), wh_ref[d],
                     preferred_element_type=jnp.float32) + bh_ref[d]
        r = jax.nn.sigmoid(g[:, 0:Hp] + gh[:, 0:Hp])
        z = jax.nn.sigmoid(g[:, Hp:2 * Hp] + gh[:, Hp:2 * Hp])
        n = jnp.tanh(g[:, 2 * Hp:G] + r * gh[:, 2 * Hp:G])
        return (1.0 - z) * n + z * h

    h0 = jnp.zeros((N, Hp), jnp.float32)

    def body(t, carry):
        hf, hb = carry
        rt = L - 1 - t                      # reversed index; no [::-1] copies
        hf = gru_step(gx_ref[0, t], hf, 0)
        hb = gru_step(gx_ref[1, rt], hb, 1)
        out_ref[t, :, 0:Hp] = hf            # 128-lane-aligned stores
        out_ref[rt, :, Hp:2 * Hp] = hb
        return hf, hb

    jax.lax.fori_loop(0, L, body, (h0, h0), unroll=(L <= 32))


def bigru_layer(x, wi, wh, bi, bh):
    """x: (L, N, I) f32 -> (L, N, 2*Hp) f32 (fwd lanes [0:Hp], bwd [Hp:2Hp])."""
    L, N, _ = x.shape
    Hp = wh.shape[1]
    G = 3 * Hp
    return pl.pallas_call(
        _bigru_layer_kernel,
        out_shape=jax.ShapeDtypeStruct((L, N, 2 * Hp), jnp.float32),
        scratch_shapes=[pltpu.VMEM((2, L, N, G), jnp.float32)],
    )(x, wi, wh, bi, bh)


# ---------------------------------------------------------------------------
# Pallas kernel 2: classifier head  Linear -> ReLU -> Linear  (single block,
# everything resident in VMEM).
# ---------------------------------------------------------------------------
def _fc_head_kernel(x_ref, w1_ref, b1_ref, w2_ref, b2_ref, o_ref):
    h = jnp.dot(x_ref[...], w1_ref[...], preferred_element_type=jnp.float32) + b1_ref[...]
    h = jnp.maximum(h, 0.0)
    o_ref[...] = jnp.dot(h, w2_ref[...], preferred_element_type=jnp.float32) + b2_ref[...]


def fc_head(x, w1, b1, w2, b2):
    B = x.shape[0]
    out = w2.shape[-1]
    return pl.pallas_call(
        _fc_head_kernel,
        out_shape=jax.ShapeDtypeStruct((B, out), jnp.float32),
    )(x, w1, b1, w2, b2)


# ---------------------------------------------------------------------------
# kmax pooling (torch: topk -> sort indices -> gather, preserving time order).
# TODO(synk): order-preserving top-k (sort + gather) has no clean tiled Pallas
# form at these sizes; kept as JAX glue (XLA fuses the transpose into it).
# ---------------------------------------------------------------------------
def kmax_pooling_jax(x, k):
    # x: (B, C, T); pick the k largest along the last axis, in original order.
    _, idx = jax.lax.top_k(x, k)
    idx = jnp.sort(idx, axis=-1)
    return jnp.take_along_axis(x, idx, axis=-1)


# ---------------------------------------------------------------------------
# Parameter construction (deterministic, shapes from the torch __init__).
# GRU weights are generated in the per-gate torch layout and then stacked
# along the output dim + zero-padded to Hp = round_up(H, 128) lanes per gate,
# cast to bf16 for the MXU.  Zero padding is self-consistent: padded hidden
# lanes stay exactly 0 through the recurrence.
# ---------------------------------------------------------------------------
def init_params(key, n_dict, n_emb, n_hidden, n_layer, output_size, k_max):
    H = n_hidden
    Hp = _round_up(H, 128)
    gru_hidden = 2 * H
    keys = iter(jax.random.split(key, 16 * n_layer + 8))
    params = {}

    # word_embedding weight (frozen in torch; padding_idx only affects grads)
    params["embedding"] = 0.1 * jax.random.normal(next(keys), (n_dict, n_emb), jnp.float32)

    scale = 1.0 / math.sqrt(H)
    gru = []
    for layer in range(n_layer):
        if layer == 0:
            in_real, in_pad = n_emb, n_emb
            row_starts, row_blocks = [0], [n_emb]
        else:
            # previous layer's padded output: fwd features at rows [0:H],
            # bwd features at rows [Hp:Hp+H]
            in_real, in_pad = 2 * H, 2 * Hp
            row_starts, row_blocks = [0, Hp], [H, H]

        wi = jnp.zeros((2, in_pad, 3 * Hp), jnp.float32)
        wh = jnp.zeros((2, Hp, 3 * Hp), jnp.float32)
        bi = jnp.zeros((2, 1, 3 * Hp), jnp.float32)
        bh = jnp.zeros((2, 1, 3 * Hp), jnp.float32)
        for d in range(2):  # bidirectional
            wi_real = jax.random.uniform(next(keys), (3, in_real, H), jnp.float32, -scale, scale)
            wh_real = jax.random.uniform(next(keys), (3, H, H), jnp.float32, -scale, scale)
            bi_real = jax.random.uniform(next(keys), (3, H), jnp.float32, -scale, scale)
            bh_real = jax.random.uniform(next(keys), (3, H), jnp.float32, -scale, scale)
            for g in range(3):  # gate order [r, z, n]
                col = g * Hp
                r_off = 0
                for rs, rb in zip(row_starts, row_blocks):
                    wi = wi.at[d, rs:rs + rb, col:col + H].set(wi_real[g, r_off:r_off + rb, :])
                    r_off += rb
                wh = wh.at[d, 0:H, col:col + H].set(wh_real[g])
                bi = bi.at[d, 0, col:col + H].set(bi_real[g])
                bh = bh.at[d, 0, col:col + H].set(bh_real[g])
        gru.append({
            "wi": wi.astype(jnp.bfloat16),
            "wh": wh.astype(jnp.bfloat16),
            "bi": bi,
            "bh": bh,
        })
    params["gru"] = gru

    in1 = k_max * gru_hidden
    s1 = 1.0 / math.sqrt(in1)
    params["w1"] = jax.random.uniform(next(keys), (in1, gru_hidden), jnp.float32, -s1, s1)
    params["b1"] = jax.random.uniform(next(keys), (1, gru_hidden), jnp.float32, -s1, s1)
    s2 = 1.0 / math.sqrt(gru_hidden)
    params["w2"] = jax.random.uniform(next(keys), (gru_hidden, output_size), jnp.float32, -s2, s2)
    params["b2"] = jax.random.uniform(next(keys), (1, output_size), jnp.float32, -s2, s2)
    return params


# ---------------------------------------------------------------------------
# Full forward pass (mirrors TextRNN.forward; x_pre/x_alt/x_cur/seq_lens are
# accepted but unused, exactly as in the torch module).
# ---------------------------------------------------------------------------
@functools.partial(jax.jit, static_argnames=("k_max", "n_hidden"))
def textrnn_forward(params, x, k_max, n_hidden,
                    x_pre=None, x_alt=None, x_cur=None, seq_lens=None):
    H = n_hidden
    Hp = _round_up(H, 128)

    x_emb = jnp.take(params["embedding"], x, axis=0)      # (B, T, E) gather glue
    # Faithful to torch: batch-first input into a batch_first=False nn.GRU, so
    # the recurrence runs over axis 0 and axis 1 rides along as rows.
    h = x_emb
    for lp in params["gru"]:
        h = bigru_layer(h, lp["wi"], lp["wh"], lp["bi"], lp["bh"])  # (B, T, 2Hp)
        # torch GRU inter-layer dropout is train-only; identity at inference.

    # Strip lane padding: real fwd features at [0:H], real bwd at [Hp:Hp+H].
    h = jnp.concatenate([h[..., :H], h[..., Hp:Hp + H]], axis=-1)   # (B, T, 2H)

    output = jnp.transpose(h, (0, 2, 1))                   # .permute(0, 2, 1) -> (B, 2H, T)
    pooled = kmax_pooling_jax(output, k_max)               # (B, 2H, k)
    flat = pooled.reshape(pooled.shape[0], -1)             # (B, 2H*k)
    return fc_head(flat, params["w1"], params["b1"], params["w2"], params["b2"])


if __name__ == "__main__":
    B, T = 2, 8            # batch, sequence length
    n_dict, n_emb = 50, 16
    n_hidden, n_layer = 32, 2
    output_size = 5
    k_max = 2

    key = jax.random.PRNGKey(0)
    pkey, xkey = jax.random.split(key)
    params = init_params(pkey, n_dict, n_emb, n_hidden, n_layer, output_size, k_max)
    x = jax.random.randint(xkey, (B, T), 0, n_dict, dtype=jnp.int32)

    out = textrnn_forward(params, x, k_max=k_max, n_hidden=n_hidden)
    jax.block_until_ready(out)
    assert out.shape == (B, output_size) and out.dtype == jnp.float32
    print("KERNEL_OK")
</pallas_src>

<mosaic_0001>
module attributes {stable_mosaic.version = 11 : i64} {
  func.func @_bigru_layer_kernel(%arg0: memref<2x8x16xf32, #tpu.memory_space<vmem>>, %arg1: memref<2x16x384xbf16, #tpu.memory_space<vmem>>, %arg2: memref<2x128x384xbf16, #tpu.memory_space<vmem>>, %arg3: memref<2x1x384xf32, #tpu.memory_space<vmem>>, %arg4: memref<2x1x384xf32, #tpu.memory_space<vmem>>, %arg5: memref<2x8x256xf32, #tpu.memory_space<vmem>>, %arg6: memref<2x2x8x384xf32, #tpu.memory_space<vmem>>) attributes {dimension_semantics = [], scalar_prefetch = 0 : i64, scratch_operands = 1 : i64, tpu.core_type = #tpu.core_type<tc>} {
    %c0 = arith.constant 0 : index
    %c0_0 = arith.constant 0 : index
    %c0_1 = arith.constant 0 : index
    %0 = vector.load %arg0[%c0, %c0_0, %c0_1] : memref<2x8x16xf32, #tpu.memory_space<vmem>>, vector<2x8x16xf32>
    %1 = vector.shape_cast %0 : vector<2x8x16xf32> to vector<16x16xf32>
    %2 = arith.truncf %1 : vector<16x16xf32> to vector<16x16xbf16>
    %c0_2 = arith.constant 0 : index
    %c0_3 = arith.constant 0 : index
    %c0_4 = arith.constant 0 : index
    %3 = vector.load %arg1[%c0_2, %c0_3, %c0_4] : memref<2x16x384xbf16, #tpu.memory_space<vmem>>, vector<1x16x384xbf16>
    %4 = vector.shape_cast %3 : vector<1x16x384xbf16> to vector<16x384xbf16>
    %cst = arith.constant dense<0.000000e+00> : vector<16x384xf32>
    %5 = tpu.matmul %2, %4, %cst {dimension_numbers = #tpu.dot_dimension_numbers<[1], [0], [0], [1], [0, 0, 1, 1], [], []>} : vector<16x16xbf16>, vector<16x384xbf16>, vector<16x384xf32> -> vector<16x384xf32>
    %c0_5 = arith.constant 0 : index
    %c0_6 = arith.constant 0 : index
    %c0_7 = arith.constant 0 : index
    %6 = vector.load %arg3[%c0_5, %c0_6, %c0_7] : memref<2x1x384xf32, #tpu.memory_space<vmem>>, vector<1x1x384xf32>
    %7 = vector.shape_cast %6 : vector<1x1x384xf32> to vector<1x384xf32>
    %8 = vector.broadcast %7 : vector<1x384xf32> to vector<16x384xf32>
    %9 = arith.addf %5, %8 : vector<16x384xf32>
    %10 = vector.shape_cast %9 : vector<16x384xf32> to vector<2x8x384xf32>
    %c0_8 = arith.constant 0 : index
    %c0_9 = arith.constant 0 : index
    %c0_10 = arith.constant 0 : index
    %c0_11 = arith.constant 0 : index
    %11 = vector.load %arg6[%c0_8, %c0_9, %c0_10, %c0_11] : memref<2x2x8x384xf32, #tpu.memory_space<vmem>>, vector<1x2x8x384xf32>
    %12 = vector.shape_cast %11 : vector<1x2x8x384xf32> to vector<2x8x384xf32>
    %13 = vector.shape_cast %10 : vector<2x8x384xf32> to vector<1x2x8x384xf32>
    tpu.vector_store %arg6[%c0_8, %c0_9, %c0_10, %c0_11], %13 {strides = array<i32>} : memref<2x2x8x384xf32, #tpu.memory_space<vmem>>, vector<1x2x8x384xf32>,
    %c1 = arith.constant 1 : index
    %c0_12 = arith.constant 0 : index
    %c0_13 = arith.constant 0 : index
    %14 = vector.load %arg1[%c1, %c0_12, %c0_13] : memref<2x16x384xbf16, #tpu.memory_space<vmem>>, vector<1x16x384xbf16>
    %15 = vector.shape_cast %14 : vector<1x16x384xbf16> to vector<16x384xbf16>
    %cst_14 = arith.constant dense<0.000000e+00> : vector<16x384xf32>
    %16 = tpu.matmul %2, %15, %cst_14 {dimension_numbers = #tpu.dot_dimension_numbers<[1], [0], [0], [1], [0, 0, 1, 1], [], []>} : vector<16x16xbf16>, vector<16x384xbf16>, vector<16x384xf32> -> vector<16x384xf32>
    %c1_15 = arith.constant 1 : index
    %c0_16 = arith.constant 0 : index
    %c0_17 = arith.constant 0 : index
    %17 = vector.load %arg3[%c1_15, %c0_16, %c0_17] : memref<2x1x384xf32, #tpu.memory_space<vmem>>, vector<1x1x384xf32>
    %18 = vector.shape_cast %17 : vector<1x1x384xf32> to vector<1x384xf32>
    %19 = vector.broadcast %18 : vector<1x384xf32> to vector<16x384xf32>
    %20 = arith.addf %16, %19 : vector<16x384xf32>
    %21 = vector.shape_cast %20 : vector<16x384xf32> to vector<2x8x384xf32>
    %c1_18 = arith.constant 1 : index
    %c0_19 = arith.constant 0 : index
    %c0_20 = arith.constant 0 : index
    %c0_21 = arith.constant 0 : index
    %22 = vector.load %arg6[%c1_18, %c0_19, %c0_20, %c0_21] : memref<2x2x8x384xf32, #tpu.memory_space<vmem>>, vector<1x2x8x384xf32>
    %23 = vector.shape_cast %22 : vector<1x2x8x384xf32> to vector<2x8x384xf32>
    %24 = vector.shape_cast %21 : vector<2x8x384xf32> to vector<1x2x8x384xf32>
    tpu.vector_store %arg6[%c1_18, %c0_19, %c0_20, %c0_21], %24 {strides = array<i32>} : memref<2x2x8x384xf32, #tpu.memory_space<vmem>>, vector<1x2x8x384xf32>,
    %cst_22 = arith.constant 0.000000e+00 : f32
    %25 = vector.broadcast %cst_22 : f32 to vector<8x128xf32>
    %c0_i32 = arith.constant 0 : i32
    %c1_i32 = arith.constant 1 : i32
    %26 = arith.subi %c1_i32, %c0_i32 : i32
    %c0_23 = arith.constant 0 : index
    %27 = arith.index_cast %c0_i32 : i32 to index
    %c0_24 = arith.constant 0 : index
    %c0_25 = arith.constant 0 : index
    %28 = vector.load %arg6[%c0_23, %27, %c0_24, %c0_25] : memref<2x2x8x384xf32, #tpu.memory_space<vmem>>, vector<1x1x8x384xf32>
    %29 = vector.shape_cast %28 : vector<1x1x8x384xf32> to vector<8x384xf32>
    %30 = arith.truncf %25 : vector<8x128xf32> to vector<8x128xbf16>
    %c0_26 = arith.constant 0 : index
    %c0_27 = arith.constant 0 : index
    %c0_28 = arith.constant 0 : index
    %31 = vector.load %arg2[%c0_26, %c0_27, %c0_28] : memref<2x128x384xbf16, #tpu.memory_space<vmem>>, vector<1x128x384xbf16>
    %32 = vector.shape_cast %31 : vector<1x128x384xbf16> to vector<128x384xbf16>
    %cst_29 = arith.constant dense<0.000000e+00> : vector<8x384xf32>
    %33 = tpu.matmul %30, %32, %cst_29 {dimension_numbers = #tpu.dot_dimension_numbers<[1], [0], [0], [1], [0, 0, 1, 1], [], []>} : vector<8x128xbf16>, vector<128x384xbf16>, vector<8x384xf32> -> vector<8x384xf32>
    %c0_30 = arith.constant 0 : index
    %c0_31 = arith.constant 0 : index
    %c0_32 = arith.constant 0 : index
    %34 = vector.load %arg4[%c0_30, %c0_31, %c0_32] : memref<2x1x384xf32, #tpu.memory_space<vmem>>, vector<1x1x384xf32>
    %35 = vector.shape_cast %34 : vector<1x1x384xf32> to vector<1x384xf32>
    %36 = vector.broadcast %35 : vector<1x384xf32> to vector<8x384xf32>
    %37 = arith.addf %33, %36 : vector<8x384xf32>
    %38 = vector.extract_strided_slice %29 {offsets = [0, 0], sizes = [8, 128], strides = [1, 1]} : vector<8x384xf32> to vector<8x128xf32>
    %39 = vector.extract_strided_slice %37 {offsets = [0, 0], sizes = [8, 128], strides = [1, 1]} : vector<8x384xf32> to vector<8x128xf32>
    %40 = arith.addf %38, %39 : vector<8x128xf32>
    %41 = arith.negf %40 : vector<8x128xf32>
    %42 = math.exp %41 : vector<8x128xf32>
    %cst_33 = arith.constant 1.000000e+00 : f32
    %43 = vector.broadcast %cst_33 : f32 to vector<8x128xf32>
    %44 = arith.addf %43, %42 : vector<8x128xf32>
    %45 = arith.divf %43, %44 : vector<8x128xf32>
    %46 = vector.extract_strided_slice %29 {offsets = [0, 128], sizes = [8, 128], strides = [1, 1]} : vector<8x384xf32> to vector<8x128xf32>
    %47 = vector.extract_strided_slice %37 {offsets = [0, 128], sizes = [8, 128], strides = [1, 1]} : vector<8x384xf32> to vector<8x128xf32>
    %48 = arith.addf %46, %47 : vector<8x128xf32>
    %49 = arith.negf %48 : vector<8x128xf32>
    %50 = math.exp %49 : vector<8x128xf32>
    %cst_34 = arith.constant 1.000000e+00 : f32
    %51 = vector.broadcast %cst_34 : f32 to vector<8x128xf32>
    %52 = arith.addf %51, %50 : vector<8x128xf32>
    %53 = arith.divf %51, %52 : vector<8x128xf32>
    %54 = vector.extract_strided_slice %29 {offsets = [0, 256], sizes = [8, 128], strides = [1, 1]} : vector<8x384xf32> to vector<8x128xf32>
    %55 = vector.extract_strided_slice %37 {offsets = [0, 256], sizes = [8, 128], strides = [1, 1]} : vector<8x384xf32> to vector<8x128xf32>
    %56 = arith.mulf %45, %55 : vector<8x128xf32>
    %57 = arith.addf %54, %56 : vector<8x128xf32>
    %58 = math.tanh %57 : vector<8x128xf32>
    %cst_35 = arith.constant 1.000000e+00 : f32
    %59 = vector.broadcast %cst_35 : f32 to vector<8x128xf32>
    %60 = arith.subf %59, %53 : vector<8x128xf32>
    %61 = arith.mulf %60, %58 : vector<8x128xf32>
    %62 = arith.mulf %53, %25 : vector<8x128xf32>
    %63 = arith.addf %61, %62 : vector<8x128xf32>
    %c1_36 = arith.constant 1 : index
    %64 = arith.index_cast %26 : i32 to index
    %c0_37 = arith.constant 0 : index
    %c0_38 = arith.constant 0 : index
    %65 = vector.load %arg6[%c1_36, %64, %c0_37, %c0_38] : memref<2x2x8x384xf32, #tpu.memory_space<vmem>>, vector<1x1x8x384xf32>
    %66 = vector.shape_cast %65 : vector<1x1x8x384xf32> to vector<8x384xf32>
    %67 = arith.truncf %25 : vector<8x128xf32> to vector<8x128xbf16>
    %c1_39 = arith.constant 1 : index
    %c0_40 = arith.constant 0 : index
    %c0_41 = arith.constant 0 : index
    %68 = vector.load %arg2[%c1_39, %c0_40, %c0_41] : memref<2x128x384xbf16, #tpu.memory_space<vmem>>, vector<1x128x384xbf16>
    %69 = vector.shape_cast %68 : vector<1x128x384xbf16> to vector<128x384xbf16>
    %cst_42 = arith.constant dense<0.000000e+00> : vector<8x384xf32>
    %70 = tpu.matmul %67, %69, %cst_42 {dimension_numbers = #tpu.dot_dimension_numbers<[1], [0], [0], [1], [0, 0, 1, 1], [], []>} : vector<8x128xbf16>, vector<128x384xbf16>, vector<8x384xf32> -> vector<8x384xf32>
    %c1_43 = arith.constant 1 : index
    %c0_44 = arith.constant 0 : index
    %c0_45 = arith.constant 0 : index
    %71 = vector.load %arg4[%c1_43, %c0_44, %c0_45] : memref<2x1x384xf32, #tpu.memory_space<vmem>>, vector<1x1x384xf32>
    %72 = vector.shape_cast %71 : vector<1x1x384xf32> to vector<1x384xf32>
    %73 = vector.broadcast %72 : vector<1x384xf32> to vector<8x384xf32>
    %74 = arith.addf %70, %73 : vector<8x384xf32>
    %75 = vector.extract_strided_slice %66 {offsets = [0, 0], sizes = [8, 128], strides = [1, 1]} : vector<8x384xf32> to vector<8x128xf32>
    %76 = vector.extract_strided_slice %74 {offsets = [0, 0], sizes = [8, 128], strides = [1, 1]} : vector<8x384xf32> to vector<8x128xf32>
    %77 = arith.addf %75, %76 : vector<8x128xf32>
    %78 = arith.negf %77 : vector<8x128xf32>
    %79 = math.exp %78 : vector<8x128xf32>
    %cst_46 = arith.constant 1.000000e+00 : f32
    %80 = vector.broadcast %cst_46 : f32 to vector<8x128xf32>
    %81 = arith.addf %80, %79 : vector<8x128xf32>
    %82 = arith.divf %80, %81 : vector<8x128xf32>
    %83 = vector.extract_strided_slice %66 {offsets = [0, 128], sizes = [8, 128], strides = [1, 1]} : vector<8x384xf32> to vector<8x128xf32>
    %84 = vector.extract_strided_slice %74 {offsets = [0, 128], sizes = [8, 128], strides = [1, 1]} : vector<8x384xf32> to vector<8x128xf32>
    %85 = arith.addf %83, %84 : vector<8x128xf32>
    %86 = arith.negf %85 : vector<8x128xf32>
    %87 = math.exp %86 : vector<8x128xf32>
    %cst_47 = arith.constant 1.000000e+00 : f32
    %88 = vector.broadcast %cst_47 : f32 to vector<8x128xf32>
    %89 = arith.addf %88, %87 : vector<8x128xf32>
    %90 = arith.divf %88, %89 : vector<8x128xf32>
    %91 = vector.extract_strided_slice %66 {offsets = [0, 256], sizes = [8, 128], strides = [1, 1]} : vector<8x384xf32> to vector<8x128xf32>
    %92 = vector.extract_strided_slice %74 {offsets = [0, 256], sizes = [8, 128], strides = [1, 1]} : vector<8x384xf32> to vector<8x128xf32>
    %93 = arith.mulf %82, %92 : vector<8x128xf32>
    %94 = arith.addf %91, %93 : vector<8x128xf32>
    %95 = math.tanh %94 : vector<8x128xf32>
    %cst_48 = arith.constant 1.000000e+00 : f32
    %96 = vector.broadcast %cst_48 : f32 to vector<8x128xf32>
    %97 = arith.subf %96, %90 : vector<8x128xf32>
    %98 = arith.mulf %97, %95 : vector<8x128xf32>
    %99 = arith.mulf %90, %25 : vector<8x128xf32>
    %100 = arith.addf %98, %99 : vector<8x128xf32>
    %101 = arith.index_cast %c0_i32 : i32 to index
    %c0_49 = arith.constant 0 : index
    %c0_50 = arith.constant 0 : index
    %102 = vector.load %arg5[%101, %c0_49, %c0_50] : memref<2x8x256xf32, #tpu.memory_space<vmem>>, vector<1x8x128xf32>
    %103 = vector.shape_cast %102 : vector<1x8x128xf32> to vector<8x128xf32>
    %104 = vector.shape_cast %63 : vector<8x128xf32> to vector<1x8x128xf32>
    tpu.vector_store %arg5[%101, %c0_49, %c0_50], %104 {strides = array<i32>} : memref<2x8x256xf32, #tpu.memory_space<vmem>>, vector<1x8x128xf32>,
    %105 = arith.index_cast %26 : i32 to index
    %c0_51 = arith.constant 0 : index
    %c128 = arith.constant 128 : index
    %106 = vector.load %arg5[%105, %c0_51, %c128] : memref<2x8x256xf32, #tpu.memory_space<vmem>>, vector<1x8x128xf32>
    %107 = vector.shape_cast %106 : vector<1x8x128xf32> to vector<8x128xf32>
    %108 = vector.shape_cast %100 : vector<8x128xf32> to vector<1x8x128xf32>
    tpu.vector_store %arg5[%105, %c0_51, %c128], %108 {strides = array<i32>} : memref<2x8x256xf32, #tpu.memory_space<vmem>>, vector<1x8x128xf32>,
    %c1_i32_52 = arith.constant 1 : i32
    %c1_i32_53 = arith.constant 1 : i32
    %109 = arith.subi %c1_i32_53, %c1_i32_52 : i32
    %c0_54 = arith.constant 0 : index
    %110 = arith.index_cast %c1_i32_52 : i32 to index
    %c0_55 = arith.constant 0 : index
    %c0_56 = arith.constant 0 : index
    %111 = vector.load %arg6[%c0_54, %110, %c0_55, %c0_56] : memref<2x2x8x384xf32, #tpu.memory_space<vmem>>, vector<1x1x8x384xf32>
    %112 = vector.shape_cast %111 : vector<1x1x8x384xf32> to vector<8x384xf32>
    %113 = arith.truncf %63 : vector<8x128xf32> to vector<8x128xbf16>
    %c0_57 = arith.constant 0 : index
    %c0_58 = arith.constant 0 : index
    %c0_59 = arith.constant 0 : index
    %114 = vector.load %arg2[%c0_57, %c0_58, %c0_59] : memref<2x128x384xbf16, #tpu.memory_space<vmem>>, vector<1x128x384xbf16>
    %115 = vector.shape_cast %114 : vector<1x128x384xbf16> to vector<128x384xbf16>
    %cst_60 = arith.constant dense<0.000000e+00> : vector<8x384xf32>
    %116 = tpu.matmul %113, %115, %cst_60 {dimension_numbers = #tpu.dot_dimension_numbers<[1], [0], [0], [1], [0, 0, 1, 1], [], []>} : vector<8x128xbf16>, vector<128x384xbf16>, vector<8x384xf32> -> vector<8x384xf32>
    %c0_61 = arith.constant 0 : index
    %c0_62 = arith.constant 0 : index
    %c0_63 = arith.constant 0 : index
    %117 = vector.load %arg4[%c0_61, %c0_62, %c0_63] : memref<2x1x384xf32, #tpu.memory_space<vmem>>, vector<1x1x384xf32>
    %118 = vector.shape_cast %117 : vector<1x1x384xf32> to vector<1x384xf32>
    %119 = vector.broadcast %118 : vector<1x384xf32> to vector<8x384xf32>
    %120 = arith.addf %116, %119 : vector<8x384xf32>
    %121 = vector.extract_strided_slice %112 {offsets = [0, 0], sizes = [8, 128], strides = [1, 1]} : vector<8x384xf32> to vector<8x128xf32>
    %122 = vector.extract_strided_slice %120 {offsets = [0, 0], sizes = [8, 128], strides = [1, 1]} : vector<8x384xf32> to vector<8x128xf32>
    %123 = arith.addf %121, %122 : vector<8x128xf32>
    %124 = arith.negf %123 : vector<8x128xf32>
    %125 = math.exp %124 : vector<8x128xf32>
    %cst_64 = arith.constant 1.000000e+00 : f32
    %126 = vector.broadcast %cst_64 : f32 to vector<8x128xf32>
    %127 = arith.addf %126, %125 : vector<8x128xf32>
    %128 = arith.divf %126, %127 : vector<8x128xf32>
    %129 = vector.extract_strided_slice %112 {offsets = [0, 128], sizes = [8, 128], strides = [1, 1]} : vector<8x384xf32> to vector<8x128xf32>
    %130 = vector.extract_strided_slice %120 {offsets = [0, 128], sizes = [8, 128], strides = [1, 1]} : vector<8x384xf32> to vector<8x128xf32>
    %131 = arith.addf %129, %130 : vector<8x128xf32>
    %132 = arith.negf %131 : vector<8x128xf32>
    %133 = math.exp %132 : vector<8x128xf32>
    %cst_65 = arith.constant 1.000000e+00 : f32
    %134 = vector.broadcast %cst_65 : f32 to vector<8x128xf32>
    %135 = arith.addf %134, %133 : vector<8x128xf32>
    %136 = arith.divf %134, %135 : vector<8x128xf32>
    %137 = vector.extract_strided_slice %112 {offsets = [0, 256], sizes = [8, 128], strides = [1, 1]} : vector<8x384xf32> to vector<8x128xf32>
    %138 = vector.extract_strided_slice %120 {offsets = [0, 256], sizes = [8, 128], strides = [1, 1]} : vector<8x384xf32> to vector<8x128xf32>
    %139 = arith.mulf %128, %138 : vector<8x128xf32>
    %140 = arith.addf %137, %139 : vector<8x128xf32>
    %141 = math.tanh %140 : vector<8x128xf32>
    %cst_66 = arith.constant 1.000000e+00 : f32
    %142 = vector.broadcast %cst_66 : f32 to vector<8x128xf32>
    %143 = arith.subf %142, %136 : vector<8x128xf32>
    %144 = arith.mulf %143, %141 : vector<8x128xf32>
    %145 = arith.mulf %136, %63 : vector<8x128xf32>
    %146 = arith.addf %144, %145 : vector<8x128xf32>
    %c1_67 = arith.constant 1 : index
    %147 = arith.index_cast %109 : i32 to index
    %c0_68 = arith.constant 0 : index
    %c0_69 = arith.constant 0 : index
    %148 = vector.load %arg6[%c1_67, %147, %c0_68, %c0_69] : memref<2x2x8x384xf32, #tpu.memory_space<vmem>>, vector<1x1x8x384xf32>
    %149 = vector.shape_cast %148 : vector<1x1x8x384xf32> to vector<8x384xf32>
    %150 = arith.truncf %100 : vector<8x128xf32> to vector<8x128xbf16>
    %c1_70 = arith.constant 1 : index
    %c0_71 = arith.constant 0 : index
    %c0_72 = arith.constant 0 : index
    %151 = vector.load %arg2[%c1_70, %c0_71, %c0_72] : memref<2x128x384xbf16, #tpu.memory_space<vmem>>, vector<1x128x384xbf16>
    %152 = vector.shape_cast %151 : vector<1x128x384xbf16> to vector<128x384xbf16>
    %cst_73 = arith.constant dense<0.000000e+00> : vector<8x384xf32>
    %153 = tpu.matmul %150, %152, %cst_73 {dimension_numbers = #tpu.dot_dimension_numbers<[1], [0], [0], [1], [0, 0, 1, 1], [], []>} : vector<8x128xbf16>, vector<128x384xbf16>, vector<8x384xf32> -> vector<8x384xf32>
    %c1_74 = arith.constant 1 : index
    %c0_75 = arith.constant 0 : index
    %c0_76 = arith.constant 0 : index
    %154 = vector.load %arg4[%c1_74, %c0_75, %c0_76] : memref<2x1x384xf32, #tpu.memory_space<vmem>>, vector<1x1x384xf32>
    %155 = vector.shape_cast %154 : vector<1x1x384xf32> to vector<1x384xf32>
    %156 = vector.broadcast %155 : vector<1x384xf32> to vector<8x384xf32>
    %157 = arith.addf %153, %156 : vector<8x384xf32>
    %158 = vector.extract_strided_slice %149 {offsets = [0, 0], sizes = [8, 128], strides = [1, 1]} : vector<8x384xf32> to vector<8x128xf32>
    %159 = vector.extract_strided_slice %157 {offsets = [0, 0], sizes = [8, 128], strides = [1, 1]} : vector<8x384xf32> to vector<8x128xf32>
    %160 = arith.addf %158, %159 : vector<8x128xf32>
    %161 = arith.negf %160 : vector<8x128xf32>
    %162 = math.exp %161 : vector<8x128xf32>
    %cst_77 = arith.constant 1.000000e+00 : f32
    %163 = vector.broadcast %cst_77 : f32 to vector<8x128xf32>
    %164 = arith.addf %163, %162 : vector<8x128xf32>
    %165 = arith.divf %163, %164 : vector<8x128xf32>
    %166 = vector.extract_strided_slice %149 {offsets = [0, 128], sizes = [8, 128], strides = [1, 1]} : vector<8x384xf32> to vector<8x128xf32>
    %167 = vector.extract_strided_slice %157 {offsets = [0, 128], sizes = [8, 128], strides = [1, 1]} : vector<8x384xf32> to vector<8x128xf32>
    %168 = arith.addf %166, %167 : vector<8x128xf32>
    %169 = arith.negf %168 : vector<8x128xf32>
    %170 = math.exp %169 : vector<8x128xf32>
    %cst_78 = arith.constant 1.000000e+00 : f32
    %171 = vector.broadcast %cst_78 : f32 to vector<8x128xf32>
    %172 = arith.addf %171, %170 : vector<8x128xf32>
    %173 = arith.divf %171, %172 : vector<8x128xf32>
    %174 = vector.extract_strided_slice %149 {offsets = [0, 256], sizes = [8, 128], strides = [1, 1]} : vector<8x384xf32> to vector<8x128xf32>
    %175 = vector.extract_strided_slice %157 {offsets = [0, 256], sizes = [8, 128], strides = [1, 1]} : vector<8x384xf32> to vector<8x128xf32>
    %176 = arith.mulf %165, %175 : vector<8x128xf32>
    %177 = arith.addf %174, %176 : vector<8x128xf32>
    %178 = math.tanh %177 : vector<8x128xf32>
    %cst_79 = arith.constant 1.000000e+00 : f32
    %179 = vector.broadcast %cst_79 : f32 to vector<8x128xf32>
    %180 = arith.subf %179, %173 : vector<8x128xf32>
    %181 = arith.mulf %180, %178 : vector<8x128xf32>
    %182 = arith.mulf %173, %100 : vector<8x128xf32>
    %183 = arith.addf %181, %182 : vector<8x128xf32>
    %184 = arith.index_cast %c1_i32_52 : i32 to index
    %c0_80 = arith.constant 0 : index
    %c0_81 = arith.constant 0 : index
    %185 = vector.load %arg5[%184, %c0_80, %c0_81] : memref<2x8x256xf32, #tpu.memory_space<vmem>>, vector<1x8x128xf32>
    %186 = vector.shape_cast %185 : vector<1x8x128xf32> to vector<8x128xf32>
    %187 = vector.shape_cast %146 : vector<8x128xf32> to vector<1x8x128xf32>
    tpu.vector_store %arg5[%184, %c0_80, %c0_81], %187 {strides = array<i32>} : memref<2x8x256xf32, #tpu.memory_space<vmem>>, vector<1x8x128xf32>,
    %188 = arith.index_cast %109 : i32 to index
    %c0_82 = arith.constant 0 : index
    %c128_83 = arith.constant 128 : index
    %189 = vector.load %arg5[%188, %c0_82, %c128_83] : memref<2x8x256xf32, #tpu.memory_space<vmem>>, vector<1x8x128xf32>
    %190 = vector.shape_cast %189 : vector<1x8x128xf32> to vector<8x128xf32>
    %191 = vector.shape_cast %183 : vector<8x128xf32> to vector<1x8x128xf32>
    tpu.vector_store %arg5[%188, %c0_82, %c128_83], %191 {strides = array<i32>} : memref<2x8x256xf32, #tpu.memory_space<vmem>>, vector<1x8x128xf32>,
    %c2_i32 = arith.constant 2 : i32
    return
  }
}

module attributes {stable_mosaic.version = 11 : i64} {
  func.func @_bigru_layer_kernel(%arg0: memref<2x8x256xf32, #tpu.memory_space<vmem>>, %arg1: memref<2x256x384xbf16, #tpu.memory_space<vmem>>, %arg2: memref<2x128x384xbf16, #tpu.memory_space<vmem>>, %arg3: memref<2x1x384xf32, #tpu.memory_space<vmem>>, %arg4: memref<2x1x384xf32, #tpu.memory_space<vmem>>, %arg5: memref<2x8x256xf32, #tpu.memory_space<vmem>>, %arg6: memref<2x2x8x384xf32, #tpu.memory_space<vmem>>) attributes {dimension_semantics = [], scalar_prefetch = 0 : i64, scratch_operands = 1 : i64, tpu.core_type = #tpu.core_type<tc>} {
    %c0 = arith.constant 0 : index
    %c0_0 = arith.constant 0 : index
    %c0_1 = arith.constant 0 : index
    %0 = vector.load %arg0[%c0, %c0_0, %c0_1] : memref<2x8x256xf32, #tpu.memory_space<vmem>>, vector<2x8x256xf32>
    %1 = vector.shape_cast %0 : vector<2x8x256xf32> to vector<16x256xf32>
    %2 = arith.truncf %1 : vector<16x256xf32> to vector<16x256xbf16>
    %c0_2 = arith.constant 0 : index
    %c0_3 = arith.constant 0 : index
    %c0_4 = arith.constant 0 : index
    %3 = vector.load %arg1[%c0_2, %c0_3, %c0_4] : memref<2x256x384xbf16, #tpu.memory_space<vmem>>, vector<1x256x384xbf16>
    %4 = vector.shape_cast %3 : vector<1x256x384xbf16> to vector<256x384xbf16>
    %cst = arith.constant dense<0.000000e+00> : vector<16x384xf32>
    %5 = tpu.matmul %2, %4, %cst {dimension_numbers = #tpu.dot_dimension_numbers<[1], [0], [0], [1], [0, 0, 1, 1], [], []>} : vector<16x256xbf16>, vector<256x384xbf16>, vector<16x384xf32> -> vector<16x384xf32>
    %c0_5 = arith.constant 0 : index
    %c0_6 = arith.constant 0 : index
    %c0_7 = arith.constant 0 : index
    %6 = vector.load %arg3[%c0_5, %c0_6, %c0_7] : memref<2x1x384xf32, #tpu.memory_space<vmem>>, vector<1x1x384xf32>
    %7 = vector.shape_cast %6 : vector<1x1x384xf32> to vector<1x384xf32>
    %8 = vector.broadcast %7 : vector<1x384xf32> to vector<16x384xf32>
    %9 = arith.addf %5, %8 : vector<16x384xf32>
    %10 = vector.shape_cast %9 : vector<16x384xf32> to vector<2x8x384xf32>
    %c0_8 = arith.constant 0 : index
    %c0_9 = arith.constant 0 : index
    %c0_10 = arith.constant 0 : index
    %c0_11 = arith.constant 0 : index
    %11 = vector.load %arg6[%c0_8, %c0_9, %c0_10, %c0_11] : memref<2x2x8x384xf32, #tpu.memory_space<vmem>>, vector<1x2x8x384xf32>
    %12 = vector.shape_cast %11 : vector<1x2x8x384xf32> to vector<2x8x384xf32>
    %13 = vector.shape_cast %10 : vector<2x8x384xf32> to vector<1x2x8x384xf32>
    tpu.vector_store %arg6[%c0_8, %c0_9, %c0_10, %c0_11], %13 {strides = array<i32>} : memref<2x2x8x384xf32, #tpu.memory_space<vmem>>, vector<1x2x8x384xf32>,
    %c1 = arith.constant 1 : index
    %c0_12 = arith.constant 0 : index
    %c0_13 = arith.constant 0 : index
    %14 = vector.load %arg1[%c1, %c0_12, %c0_13] : memref<2x256x384xbf16, #tpu.memory_space<vmem>>, vector<1x256x384xbf16>
    %15 = vector.shape_cast %14 : vector<1x256x384xbf16> to vector<256x384xbf16>
    %cst_14 = arith.constant dense<0.000000e+00> : vector<16x384xf32>
    %16 = tpu.matmul %2, %15, %cst_14 {dimension_numbers = #tpu.dot_dimension_numbers<[1], [0], [0], [1], [0, 0, 1, 1], [], []>} : vector<16x256xbf16>, vector<256x384xbf16>, vector<16x384xf32> -> vector<16x384xf32>
    %c1_15 = arith.constant 1 : index
    %c0_16 = arith.constant 0 : index
    %c0_17 = arith.constant 0 : index
    %17 = vector.load %arg3[%c1_15, %c0_16, %c0_17] : memref<2x1x384xf32, #tpu.memory_space<vmem>>, vector<1x1x384xf32>
    %18 = vector.shape_cast %17 : vector<1x1x384xf32> to vector<1x384xf32>
    %19 = vector.broadcast %18 : vector<1x384xf32> to vector<16x384xf32>
    %20 = arith.addf %16, %19 : vector<16x384xf32>
    %21 = vector.shape_cast %20 : vector<16x384xf32> to vector<2x8x384xf32>
    %c1_18 = arith.constant 1 : index
    %c0_19 = arith.constant 0 : index
    %c0_20 = arith.constant 0 : index
    %c0_21 = arith.constant 0 : index
    %22 = vector.load %arg6[%c1_18, %c0_19, %c0_20, %c0_21] : memref<2x2x8x384xf32, #tpu.memory_space<vmem>>, vector<1x2x8x384xf32>
    %23 = vector.shape_cast %22 : vector<1x2x8x384xf32> to vector<2x8x384xf32>
    %24 = vector.shape_cast %21 : vector<2x8x384xf32> to vector<1x2x8x384xf32>
    tpu.vector_store %arg6[%c1_18, %c0_19, %c0_20, %c0_21], %24 {strides = array<i32>} : memref<2x2x8x384xf32, #tpu.memory_space<vmem>>, vector<1x2x8x384xf32>,
    %cst_22 = arith.constant 0.000000e+00 : f32
    %25 = vector.broadcast %cst_22 : f32 to vector<8x128xf32>
    %c0_i32 = arith.constant 0 : i32
    %c1_i32 = arith.constant 1 : i32
    %26 = arith.subi %c1_i32, %c0_i32 : i32
    %c0_23 = arith.constant 0 : index
    %27 = arith.index_cast %c0_i32 : i32 to index
    %c0_24 = arith.constant 0 : index
    %c0_25 = arith.constant 0 : index
    %28 = vector.load %arg6[%c0_23, %27, %c0_24, %c0_25] : memref<2x2x8x384xf32, #tpu.memory_space<vmem>>, vector<1x1x8x384xf32>
    %29 = vector.shape_cast %28 : vector<1x1x8x384xf32> to vector<8x384xf32>
    %30 = arith.truncf %25 : vector<8x128xf32> to vector<8x128xbf16>
    %c0_26 = arith.constant 0 : index
    %c0_27 = arith.constant 0 : index
    %c0_28 = arith.constant 0 : index
    %31 = vector.load %arg2[%c0_26, %c0_27, %c0_28] : memref<2x128x384xbf16, #tpu.memory_space<vmem>>, vector<1x128x384xbf16>
    %32 = vector.shape_cast %31 : vector<1x128x384xbf16> to vector<128x384xbf16>
    %cst_29 = arith.constant dense<0.000000e+00> : vector<8x384xf32>
    %33 = tpu.matmul %30, %32, %cst_29 {dimension_numbers = #tpu.dot_dimension_numbers<[1], [0], [0], [1], [0, 0, 1, 1], [], []>} : vector<8x128xbf16>, vector<128x384xbf16>, vector<8x384xf32> -> vector<8x384xf32>
    %c0_30 = arith.constant 0 : index
    %c0_31 = arith.constant 0 : index
    %c0_32 = arith.constant 0 : index
    %34 = vector.load %arg4[%c0_30, %c0_31, %c0_32] : memref<2x1x384xf32, #tpu.memory_space<vmem>>, vector<1x1x384xf32>
    %35 = vector.shape_cast %34 : vector<1x1x384xf32> to vector<1x384xf32>
    %36 = vector.broadcast %35 : vector<1x384xf32> to vector<8x384xf32>
    %37 = arith.addf %33, %36 : vector<8x384xf32>
    %38 = vector.extract_strided_slice %29 {offsets = [0, 0], sizes = [8, 128], strides = [1, 1]} : vector<8x384xf32> to vector<8x128xf32>
    %39 = vector.extract_strided_slice %37 {offsets = [0, 0], sizes = [8, 128], strides = [1, 1]} : vector<8x384xf32> to vector<8x128xf32>
    %40 = arith.addf %38, %39 : vector<8x128xf32>
    %41 = arith.negf %40 : vector<8x128xf32>
    %42 = math.exp %41 : vector<8x128xf32>
    %cst_33 = arith.constant 1.000000e+00 : f32
    %43 = vector.broadcast %cst_33 : f32 to vector<8x128xf32>
    %44 = arith.addf %43, %42 : vector<8x128xf32>
    %45 = arith.divf %43, %44 : vector<8x128xf32>
    %46 = vector.extract_strided_slice %29 {offsets = [0, 128], sizes = [8, 128], strides = [1, 1]} : vector<8x384xf32> to vector<8x128xf32>
    %47 = vector.extract_strided_slice %37 {offsets = [0, 128], sizes = [8, 128], strides = [1, 1]} : vector<8x384xf32> to vector<8x128xf32>
    %48 = arith.addf %46, %47 : vector<8x128xf32>
    %49 = arith.negf %48 : vector<8x128xf32>
    %50 = math.exp %49 : vector<8x128xf32>
    %cst_34 = arith.constant 1.000000e+00 : f32
    %51 = vector.broadcast %cst_34 : f32 to vector<8x128xf32>
    %52 = arith.addf %51, %50 : vector<8x128xf32>
    %53 = arith.divf %51, %52 : vector<8x128xf32>
    %54 = vector.extract_strided_slice %29 {offsets = [0, 256], sizes = [8, 128], strides = [1, 1]} : vector<8x384xf32> to vector<8x128xf32>
    %55 = vector.extract_strided_slice %37 {offsets = [0, 256], sizes = [8, 128], strides = [1, 1]} : vector<8x384xf32> to vector<8x128xf32>
    %56 = arith.mulf %45, %55 : vector<8x128xf32>
    %57 = arith.addf %54, %56 : vector<8x128xf32>
    %58 = math.tanh %57 : vector<8x128xf32>
    %cst_35 = arith.constant 1.000000e+00 : f32
    %59 = vector.broadcast %cst_35 : f32 to vector<8x128xf32>
    %60 = arith.subf %59, %53 : vector<8x128xf32>
    %61 = arith.mulf %60, %58 : vector<8x128xf32>
    %62 = arith.mulf %53, %25 : vector<8x128xf32>
    %63 = arith.addf %61, %62 : vector<8x128xf32>
    %c1_36 = arith.constant 1 : index
    %64 = arith.index_cast %26 : i32 to index
    %c0_37 = arith.constant 0 : index
    %c0_38 = arith.constant 0 : index
    %65 = vector.load %arg6[%c1_36, %64, %c0_37, %c0_38] : memref<2x2x8x384xf32, #tpu.memory_space<vmem>>, vector<1x1x8x384xf32>
    %66 = vector.shape_cast %65 : vector<1x1x8x384xf32> to vector<8x384xf32>
    %67 = arith.truncf %25 : vector<8x128xf32> to vector<8x128xbf16>
    %c1_39 = arith.constant 1 : index
    %c0_40 = arith.constant 0 : index
    %c0_41 = arith.constant 0 : index
    %68 = vector.load %arg2[%c1_39, %c0_40, %c0_41] : memref<2x128x384xbf16, #tpu.memory_space<vmem>>, vector<1x128x384xbf16>
    %69 = vector.shape_cast %68 : vector<1x128x384xbf16> to vector<128x384xbf16>
    %cst_42 = arith.constant dense<0.000000e+00> : vector<8x384xf32>
    %70 = tpu.matmul %67, %69, %cst_42 {dimension_numbers = #tpu.dot_dimension_numbers<[1], [0], [0], [1], [0, 0, 1, 1], [], []>} : vector<8x128xbf16>, vector<128x384xbf16>, vector<8x384xf32> -> vector<8x384xf32>
    %c1_43 = arith.constant 1 : index
    %c0_44 = arith.constant 0 : index
    %c0_45 = arith.constant 0 : index
    %71 = vector.load %arg4[%c1_43, %c0_44, %c0_45] : memref<2x1x384xf32, #tpu.memory_space<vmem>>, vector<1x1x384xf32>
    %72 = vector.shape_cast %71 : vector<1x1x384xf32> to vector<1x384xf32>
    %73 = vector.broadcast %72 : vector<1x384xf32> to vector<8x384xf32>
    %74 = arith.addf %70, %73 : vector<8x384xf32>
    %75 = vector.extract_strided_slice %66 {offsets = [0, 0], sizes = [8, 128], strides = [1, 1]} : vector<8x384xf32> to vector<8x128xf32>
    %76 = vector.extract_strided_slice %74 {offsets = [0, 0], sizes = [8, 128], strides = [1, 1]} : vector<8x384xf32> to vector<8x128xf32>
    %77 = arith.addf %75, %76 : vector<8x128xf32>
    %78 = arith.negf %77 : vector<8x128xf32>
    %79 = math.exp %78 : vector<8x128xf32>
    %cst_46 = arith.constant 1.000000e+00 : f32
    %80 = vector.broadcast %cst_46 : f32 to vector<8x128xf32>
    %81 = arith.addf %80, %79 : vector<8x128xf32>
    %82 = arith.divf %80, %81 : vector<8x128xf32>
    %83 = vector.extract_strided_slice %66 {offsets = [0, 128], sizes = [8, 128], strides = [1, 1]} : vector<8x384xf32> to vector<8x128xf32>
    %84 = vector.extract_strided_slice %74 {offsets = [0, 128], sizes = [8, 128], strides = [1, 1]} : vector<8x384xf32> to vector<8x128xf32>
    %85 = arith.addf %83, %84 : vector<8x128xf32>
    %86 = arith.negf %85 : vector<8x128xf32>
    %87 = math.exp %86 : vector<8x128xf32>
    %cst_47 = arith.constant 1.000000e+00 : f32
    %88 = vector.broadcast %cst_47 : f32 to vector<8x128xf32>
    %89 = arith.addf %88, %87 : vector<8x128xf32>
    %90 = arith.divf %88, %89 : vector<8x128xf32>
    %91 = vector.extract_strided_slice %66 {offsets = [0, 256], sizes = [8, 128], strides = [1, 1]} : vector<8x384xf32> to vector<8x128xf32>
    %92 = vector.extract_strided_slice %74 {offsets = [0, 256], sizes = [8, 128], strides = [1, 1]} : vector<8x384xf32> to vector<8x128xf32>
    %93 = arith.mulf %82, %92 : vector<8x128xf32>
    %94 = arith.addf %91, %93 : vector<8x128xf32>
    %95 = math.tanh %94 : vector<8x128xf32>
    %cst_48 = arith.constant 1.000000e+00 : f32
    %96 = vector.broadcast %cst_48 : f32 to vector<8x128xf32>
    %97 = arith.subf %96, %90 : vector<8x128xf32>
    %98 = arith.mulf %97, %95 : vector<8x128xf32>
    %99 = arith.mulf %90, %25 : vector<8x128xf32>
    %100 = arith.addf %98, %99 : vector<8x128xf32>
    %101 = arith.index_cast %c0_i32 : i32 to index
    %c0_49 = arith.constant 0 : index
    %c0_50 = arith.constant 0 : index
    %102 = vector.load %arg5[%101, %c0_49, %c0_50] : memref<2x8x256xf32, #tpu.memory_space<vmem>>, vector<1x8x128xf32>
    %103 = vector.shape_cast %102 : vector<1x8x128xf32> to vector<8x128xf32>
    %104 = vector.shape_cast %63 : vector<8x128xf32> to vector<1x8x128xf32>
    tpu.vector_store %arg5[%101, %c0_49, %c0_50], %104 {strides = array<i32>} : memref<2x8x256xf32, #tpu.memory_space<vmem>>, vector<1x8x128xf32>,
    %105 = arith.index_cast %26 : i32 to index
    %c0_51 = arith.constant 0 : index
    %c128 = arith.constant 128 : index
    %106 = vector.load %arg5[%105, %c0_51, %c128] : memref<2x8x256xf32, #tpu.memory_space<vmem>>, vector<1x8x128xf32>
    %107 = vector.shape_cast %106 : vector<1x8x128xf32> to vector<8x128xf32>
    %108 = vector.shape_cast %100 : vector<8x128xf32> to vector<1x8x128xf32>
    tpu.vector_store %arg5[%105, %c0_51, %c128], %108 {strides = array<i32>} : memref<2x8x256xf32, #tpu.memory_space<vmem>>, vector<1x8x128xf32>,
    %c1_i32_52 = arith.constant 1 : i32
    %c1_i32_53 = arith.constant 1 : i32
    %109 = arith.subi %c1_i32_53, %c1_i32_52 : i32
    %c0_54 = arith.constant 0 : index
    %110 = arith.index_cast %c1_i32_52 : i32 to index
    %c0_55 = arith.constant 0 : index
    %c0_56 = arith.constant 0 : index
    %111 = vector.load %arg6[%c0_54, %110, %c0_55, %c0_56] : memref<2x2x8x384xf32, #tpu.memory_space<vmem>>, vector<1x1x8x384xf32>
    %112 = vector.shape_cast %111 : vector<1x1x8x384xf32> to vector<8x384xf32>
    %113 = arith.truncf %63 : vector<8x128xf32> to vector<8x128xbf16>
    %c0_57 = arith.constant 0 : index
    %c0_58 = arith.constant 0 : index
    %c0_59 = arith.constant 0 : index
    %114 = vector.load %arg2[%c0_57, %c0_58, %c0_59] : memref<2x128x384xbf16, #tpu.memory_space<vmem>>, vector<1x128x384xbf16>
    %115 = vector.shape_cast %114 : vector<1x128x384xbf16> to vector<128x384xbf16>
    %cst_60 = arith.constant dense<0.000000e+00> : vector<8x384xf32>
    %116 = tpu.matmul %113, %115, %cst_60 {dimension_numbers = #tpu.dot_dimension_numbers<[1], [0], [0], [1], [0, 0, 1, 1], [], []>} : vector<8x128xbf16>, vector<128x384xbf16>, vector<8x384xf32> -> vector<8x384xf32>
    %c0_61 = arith.constant 0 : index
    %c0_62 = arith.constant 0 : index
    %c0_63 = arith.constant 0 : index
    %117 = vector.load %arg4[%c0_61, %c0_62, %c0_63] : memref<2x1x384xf32, #tpu.memory_space<vmem>>, vector<1x1x384xf32>
    %118 = vector.shape_cast %117 : vector<1x1x384xf32> to vector<1x384xf32>
    %119 = vector.broadcast %118 : vector<1x384xf32> to vector<8x384xf32>
    %120 = arith.addf %116, %119 : vector<8x384xf32>
    %121 = vector.extract_strided_slice %112 {offsets = [0, 0], sizes = [8, 128], strides = [1, 1]} : vector<8x384xf32> to vector<8x128xf32>
    %122 = vector.extract_strided_slice %120 {offsets = [0, 0], sizes = [8, 128], strides = [1, 1]} : vector<8x384xf32> to vector<8x128xf32>
    %123 = arith.addf %121, %122 : vector<8x128xf32>
    %124 = arith.negf %123 : vector<8x128xf32>
    %125 = math.exp %124 : vector<8x128xf32>
    %cst_64 = arith.constant 1.000000e+00 : f32
    %126 = vector.broadcast %cst_64 : f32 to vector<8x128xf32>
    %127 = arith.addf %126, %125 : vector<8x128xf32>
    %128 = arith.divf %126, %127 : vector<8x128xf32>
    %129 = vector.extract_strided_slice %112 {offsets = [0, 128], sizes = [8, 128], strides = [1, 1]} : vector<8x384xf32> to vector<8x128xf32>
    %130 = vector.extract_strided_slice %120 {offsets = [0, 128], sizes = [8, 128], strides = [1, 1]} : vector<8x384xf32> to vector<8x128xf32>
    %131 = arith.addf %129, %130 : vector<8x128xf32>
    %132 = arith.negf %131 : vector<8x128xf32>
    %133 = math.exp %132 : vector<8x128xf32>
    %cst_65 = arith.constant 1.000000e+00 : f32
    %134 = vector.broadcast %cst_65 : f32 to vector<8x128xf32>
    %135 = arith.addf %134, %133 : vector<8x128xf32>
    %136 = arith.divf %134, %135 : vector<8x128xf32>
    %137 = vector.extract_strided_slice %112 {offsets = [0, 256], sizes = [8, 128], strides = [1, 1]} : vector<8x384xf32> to vector<8x128xf32>
    %138 = vector.extract_strided_slice %120 {offsets = [0, 256], sizes = [8, 128], strides = [1, 1]} : vector<8x384xf32> to vector<8x128xf32>
    %139 = arith.mulf %128, %138 : vector<8x128xf32>
    %140 = arith.addf %137, %139 : vector<8x128xf32>
    %141 = math.tanh %140 : vector<8x128xf32>
    %cst_66 = arith.constant 1.000000e+00 : f32
    %142 = vector.broadcast %cst_66 : f32 to vector<8x128xf32>
    %143 = arith.subf %142, %136 : vector<8x128xf32>
    %144 = arith.mulf %143, %141 : vector<8x128xf32>
    %145 = arith.mulf %136, %63 : vector<8x128xf32>
    %146 = arith.addf %144, %145 : vector<8x128xf32>
    %c1_67 = arith.constant 1 : index
    %147 = arith.index_cast %109 : i32 to index
    %c0_68 = arith.constant 0 : index
    %c0_69 = arith.constant 0 : index
    %148 = vector.load %arg6[%c1_67, %147, %c0_68, %c0_69] : memref<2x2x8x384xf32, #tpu.memory_space<vmem>>, vector<1x1x8x384xf32>
    %149 = vector.shape_cast %148 : vector<1x1x8x384xf32> to vector<8x384xf32>
    %150 = arith.truncf %100 : vector<8x128xf32> to vector<8x128xbf16>
    %c1_70 = arith.constant 1 : index
    %c0_71 = arith.constant 0 : index
    %c0_72 = arith.constant 0 : index
    %151 = vector.load %arg2[%c1_70, %c0_71, %c0_72] : memref<2x128x384xbf16, #tpu.memory_space<vmem>>, vector<1x128x384xbf16>
    %152 = vector.shape_cast %151 : vector<1x128x384xbf16> to vector<128x384xbf16>
    %cst_73 = arith.constant dense<0.000000e+00> : vector<8x384xf32>
    %153 = tpu.matmul %150, %152, %cst_73 {dimension_numbers = #tpu.dot_dimension_numbers<[1], [0], [0], [1], [0, 0, 1, 1], [], []>} : vector<8x128xbf16>, vector<128x384xbf16>, vector<8x384xf32> -> vector<8x384xf32>
    %c1_74 = arith.constant 1 : index
    %c0_75 = arith.constant 0 : index
    %c0_76 = arith.constant 0 : index
    %154 = vector.load %arg4[%c1_74, %c0_75, %c0_76] : memref<2x1x384xf32, #tpu.memory_space<vmem>>, vector<1x1x384xf32>
    %155 = vector.shape_cast %154 : vector<1x1x384xf32> to vector<1x384xf32>
    %156 = vector.broadcast %155 : vector<1x384xf32> to vector<8x384xf32>
    %157 = arith.addf %153, %156 : vector<8x384xf32>
    %158 = vector.extract_strided_slice %149 {offsets = [0, 0], sizes = [8, 128], strides = [1, 1]} : vector<8x384xf32> to vector<8x128xf32>
    %159 = vector.extract_strided_slice %157 {offsets = [0, 0], sizes = [8, 128], strides = [1, 1]} : vector<8x384xf32> to vector<8x128xf32>
    %160 = arith.addf %158, %159 : vector<8x128xf32>
    %161 = arith.negf %160 : vector<8x128xf32>
    %162 = math.exp %161 : vector<8x128xf32>
    %cst_77 = arith.constant 1.000000e+00 : f32
    %163 = vector.broadcast %cst_77 : f32 to vector<8x128xf32>
    %164 = arith.addf %163, %162 : vector<8x128xf32>
    %165 = arith.divf %163, %164 : vector<8x128xf32>
    %166 = vector.extract_strided_slice %149 {offsets = [0, 128], sizes = [8, 128], strides = [1, 1]} : vector<8x384xf32> to vector<8x128xf32>
    %167 = vector.extract_strided_slice %157 {offsets = [0, 128], sizes = [8, 128], strides = [1, 1]} : vector<8x384xf32> to vector<8x128xf32>
    %168 = arith.addf %166, %167 : vector<8x128xf32>
    %169 = arith.negf %168 : vector<8x128xf32>
    %170 = math.exp %169 : vector<8x128xf32>
    %cst_78 = arith.constant 1.000000e+00 : f32
    %171 = vector.broadcast %cst_78 : f32 to vector<8x128xf32>
    %172 = arith.addf %171, %170 : vector<8x128xf32>
    %173 = arith.divf %171, %172 : vector<8x128xf32>
    %174 = vector.extract_strided_slice %149 {offsets = [0, 256], sizes = [8, 128], strides = [1, 1]} : vector<8x384xf32> to vector<8x128xf32>
    %175 = vector.extract_strided_slice %157 {offsets = [0, 256], sizes = [8, 128], strides = [1, 1]} : vector<8x384xf32> to vector<8x128xf32>
    %176 = arith.mulf %165, %175 : vector<8x128xf32>
    %177 = arith.addf %174, %176 : vector<8x128xf32>
    %178 = math.tanh %177 : vector<8x128xf32>
    %cst_79 = arith.constant 1.000000e+00 : f32
    %179 = vector.broadcast %cst_79 : f32 to vector<8x128xf32>
    %180 = arith.subf %179, %173 : vector<8x128xf32>
    %181 = arith.mulf %180, %178 : vector<8x128xf32>
    %182 = arith.mulf %173, %100 : vector<8x128xf32>
    %183 = arith.addf %181, %182 : vector<8x128xf32>
    %184 = arith.index_cast %c1_i32_52 : i32 to index
    %c0_80 = arith.constant 0 : index
    %c0_81 = arith.constant 0 : index
    %185 = vector.load %arg5[%184, %c0_80, %c0_81] : memref<2x8x256xf32, #tpu.memory_space<vmem>>, vector<1x8x128xf32>
    %186 = vector.shape_cast %185 : vector<1x8x128xf32> to vector<8x128xf32>
    %187 = vector.shape_cast %146 : vector<8x128xf32> to vector<1x8x128xf32>
    tpu.vector_store %arg5[%184, %c0_80, %c0_81], %187 {strides = array<i32>} : memref<2x8x256xf32, #tpu.memory_space<vmem>>, vector<1x8x128xf32>,
    %188 = arith.index_cast %109 : i32 to index
    %c0_82 = arith.constant 0 : index
    %c128_83 = arith.constant 128 : index
    %189 = vector.load %arg5[%188, %c0_82, %c128_83] : memref<2x8x256xf32, #tpu.memory_space<vmem>>, vector<1x8x128xf32>
    %190 = vector.shape_cast %189 : vector<1x8x128xf32> to vector<8x128xf32>
    %191 = vector.shape_cast %183 : vector<8x128xf32> to vector<1x8x128xf32>
    tpu.vector_store %arg5[%188, %c0_82, %c128_83], %191 {strides = array<i32>} : memref<2x8x256xf32, #tpu.memory_space<vmem>>, vector<1x8x128xf32>,
    %c2_i32 = arith.constant 2 : i32
    return
  }
}

module attributes {stable_mosaic.version = 11 : i64} {
  func.func @_fc_head_kernel(%arg0: memref<2x128xf32, #tpu.memory_space<vmem>>, %arg1: memref<128x64xf32, #tpu.memory_space<vmem>>, %arg2: memref<1x64xf32, #tpu.memory_space<vmem>>, %arg3: memref<64x5xf32, #tpu.memory_space<vmem>>, %arg4: memref<1x5xf32, #tpu.memory_space<vmem>>, %arg5: memref<2x5xf32, #tpu.memory_space<vmem>>) attributes {dimension_semantics = [], scalar_prefetch = 0 : i64, scratch_operands = 0 : i64, tpu.core_type = #tpu.core_type<tc>} {
    %c0 = arith.constant 0 : index
    %c0_0 = arith.constant 0 : index
    %0 = vector.load %arg0[%c0, %c0_0] : memref<2x128xf32, #tpu.memory_space<vmem>>, vector<2x128xf32>
    %c0_1 = arith.constant 0 : index
    %c0_2 = arith.constant 0 : index
    %1 = vector.load %arg1[%c0_1, %c0_2] : memref<128x64xf32, #tpu.memory_space<vmem>>, vector<128x64xf32>
    %cst = arith.constant dense<0.000000e+00> : vector<2x64xf32>
    %2 = tpu.matmul %0, %1, %cst {dimension_numbers = #tpu.dot_dimension_numbers<[1], [0], [0], [1], [0, 0, 1, 1], [], []>} : vector<2x128xf32>, vector<128x64xf32>, vector<2x64xf32> -> vector<2x64xf32>
    %c0_3 = arith.constant 0 : index
    %c0_4 = arith.constant 0 : index
    %3 = vector.load %arg2[%c0_3, %c0_4] : memref<1x64xf32, #tpu.memory_space<vmem>>, vector<1x64xf32>
    %4 = vector.broadcast %3 : vector<1x64xf32> to vector<2x64xf32>
    %5 = arith.addf %2, %4 : vector<2x64xf32>
    %cst_5 = arith.constant 0.000000e+00 : f32
    %6 = vector.broadcast %cst_5 : f32 to vector<2x64xf32>
    %7 = arith.maximumf %5, %6 : vector<2x64xf32>
    %c0_6 = arith.constant 0 : index
    %c0_7 = arith.constant 0 : index
    %8 = vector.load %arg3[%c0_6, %c0_7] : memref<64x5xf32, #tpu.memory_space<vmem>>, vector<64x5xf32>
    %cst_8 = arith.constant dense<0.000000e+00> : vector<2x5xf32>
    %9 = tpu.matmul %7, %8, %cst_8 {dimension_numbers = #tpu.dot_dimension_numbers<[1], [0], [0], [1], [0, 0, 1, 1], [], []>} : vector<2x64xf32>, vector<64x5xf32>, vector<2x5xf32> -> vector<2x5xf32>
    %c0_9 = arith.constant 0 : index
    %c0_10 = arith.constant 0 : index
    %10 = vector.load %arg4[%c0_9, %c0_10] : memref<1x5xf32, #tpu.memory_space<vmem>>, vector<1x5xf32>
    %11 = vector.broadcast %10 : vector<1x5xf32> to vector<2x5xf32>
    %12 = arith.addf %9, %11 : vector<2x5xf32>
    %c0_11 = arith.constant 0 : index
    %c0_12 = arith.constant 0 : index
    %13 = vector.load %arg5[%c0_11, %c0_12] : memref<2x5xf32, #tpu.memory_space<vmem>>, vector<2x5xf32>
    tpu.vector_store %arg5[%c0_11, %c0_12], %12 {strides = array<i32>} : memref<2x5xf32, #tpu.memory_space<vmem>>, vector<2x5xf32>,
    return
  }
}

</mosaic_0001>

<llo_original>
// kernel: textrnn_forward.3
$region0: #{textrnn_forward.3}
  #allocation0 [shape = 'u32[]', space=smem, size = 0x4, offset = 0x4, fixed_abs, tag = 'smem constant byte address 0x4 - core index']
  #allocation1 [shape = 'u32[144,128]{1,0:T(1,128)}', space=vmem, size = 0x12000, scoped, tag = 'internal scratch']
  #allocation2 [shape = 'f32[2,2,8,384]{3,2,1,0:T(8,128)}', space=vmem, size = 0xc000, scoped, tag = 'scratch operand']
  %s0 = inlined_call_operand.vmem [shape: f32[2,8,16], index: 0, kind: input, shape index: {}]
  %s1 = inlined_call_operand.hbm [shape: bf16[2,16,384], index: 1, kind: input, shape index: {}]
  %s2 = inlined_call_operand.hbm [shape: bf16[2,128,384], index: 2, kind: input, shape index: {}]
  %s3 = inlined_call_operand.vmem [shape: f32[2,1,384], index: 3, kind: input, shape index: {}]
  %s4 = inlined_call_operand.vmem [shape: f32[2,1,384], index: 4, kind: input, shape index: {}]
  %s5 = inlined_call_operand.vmem [shape: f32[2,8,256], index: 5, kind: output, shape index: {}]
  %s6 = sld [smem:[#allocation0]]
  $region38: #{textrnn_forward.3} parent=0
    _
  %s8 = ssub.s32 1, %s6
  %s9 = scalar_select 0, %s8, %s6
  $region1: #{textrnn_forward.3} parent=0
    #allocation3 [shape = 'u8[24576]{0}', space=vmem, size = 0x6000, scoped, tag = 'input window, operand 1, single buffered']
    #allocation4 [shape = 's32[1]{0}', space=sflag, size = 0x4, scoped, tag = 'scoped memory for textrnn_forward.3']
    #allocation5 [shape = 'u8[196608]{0}', space=vmem, size = 0x30000, scoped, tag = 'input window, operand 2, single buffered']
    #allocation6 [shape = 's32[1]{0}', space=sflag, size = 0x4, scoped, tag = 'scoped memory for textrnn_forward.3']
    %10 = vsyncpa [#allocation4], 0
    %11 = vsyncpa [#allocation6], 0
    // Predicated region
    $region2: #{textrnn_forward.3} parent=1 // pred_check
      _
    $region3: #{textrnn_forward.3} parent=1 // pred_check_branch
      %13 = sbr.rel (0) target = $region5
    $region4: #{textrnn_forward.3} parent=1 // pred_region
      _
    $region5: #{textrnn_forward.3} parent=1 // pred_fallthru
      _
    // Predicated region
    $region6: #{textrnn_forward.3} parent=1 // pred_check
      _
    $region7: #{textrnn_forward.3} parent=1 // pred_check_branch
      %15 = sbr.rel (0) target = $region9
    $region8: #{textrnn_forward.3} parent=1 // pred_region
      %s17 = ssub.s32 768, 768
      %18 = vsyncadd [#allocation4], %s17
      %s19 = sshll.u32 [#allocation3], 4
      %s20 = int_to_ptr.vmem [resolvable:$true] %s19
      %25 = dma.hbm_to_vmem [thread:$0]  %s1, 768, %s20, [#allocation4], 192, 192, 12
    $region9: #{textrnn_forward.3} parent=1 // pred_fallthru
      _
    // Predicated region
    $region10: #{textrnn_forward.3} parent=1 // pred_check
      _
    $region11: #{textrnn_forward.3} parent=1 // pred_check_branch
      %27 = sbr.rel (0) target = $region13
    $region12: #{textrnn_forward.3} parent=1 // pred_region
      %s29 = ssub.s32 6144, 6144
      %30 = vsyncadd [#allocation6], %s29
      %s31 = sshll.u32 [#allocation5], 4
      %s32 = int_to_ptr.vmem [resolvable:$true] %s31
      %37 = dma.hbm_to_vmem [thread:$0]  %s2, 6144, %s32, [#allocation6], 192, 192, 12
    $region13: #{textrnn_forward.3} parent=1 // pred_fallthru
      _
    // Predicated region
    $region14: #{textrnn_forward.3} parent=1 // pred_check
      _
    $region15: #{textrnn_forward.3} parent=1 // pred_check_branch
      %39 = sbr.rel (0) target = $region17
    $region16: #{textrnn_forward.3} parent=1 // pred_region
      _
    $region17: #{textrnn_forward.3} parent=1 // pred_fallthru
      _
    // Predicated region
    $region18: #{textrnn_forward.3} parent=1 // pred_check
      _
    $region19: #{textrnn_forward.3} parent=1 // pred_check_branch
      %41 = sbr.rel (0) target = $region21
    $region20: #{textrnn_forward.3} parent=1 // pred_region
      _
    $region21: #{textrnn_forward.3} parent=1 // pred_fallthru
      _
    // Predicated region
    $region22: #{textrnn_forward.3} parent=1 // pred_check
      _
    $region23: #{textrnn_forward.3} parent=1 // pred_check_branch
      %43 = sbr.rel (0) target = $region25
    $region24: #{textrnn_forward.3} parent=1 // pred_region
      %44 = dma.done [#allocation4], 768
    $region25: #{textrnn_forward.3} parent=1 // pred_fallthru
      _
    // Predicated region
    $region26: #{textrnn_forward.3} parent=1 // pred_check
      _
    $region27: #{textrnn_forward.3} parent=1 // pred_check_branch
      %46 = sbr.rel (0) target = $region29
    $region28: #{textrnn_forward.3} parent=1 // pred_region
      %47 = dma.done [#allocation6], 6144
    $region29: #{textrnn_forward.3} parent=1 // pred_fallthru
      _
    %v49 = vld [vmem:[%s0] sm:$0xff]
    %v50 = vld [vmem:[%s0 + $0x8] sm:$0xff]
    %v51 = vpack.c.bf16 %v50, %v49
    %v52 = vld [vmem:[#allocation3] sm:$0xff]
    %v53 = vld [vmem:[#allocation3 + $0x8] sm:$0xf]
    %v54 = vld [vmem:[#allocation3 + $0xc] sm:$0xff]
    %v55 = vld [vmem:[#allocation3 + $0x14] sm:$0xf]
    %v56 = vld [vmem:[%s3] sm:$0x7]
    %v58 = vlaneseq
    %v59 = vshrl.u32 %v58, 7
    %v60 = vsub.s32 0, %v59
    %v61 = vrot.slane %v56, %v60
    %v62 = vlaneseq
    %v63 = vshrl.u32 %v62, 7
    %v64 = vsub.s32 1, %v63
    %v65 = vrot.slane %v56, %v64
    %v66 = vlaneseq
    %v67 = vshrl.u32 %v66, 7
    %v68 = vsub.s32 2, %v67
    %v69 = vrot.slane %v56, %v68
    %v77 = vunpack.c.l.b16 %v52
    %v78 = vunpack.c.h.b16 %v52
    %v79 = vunpack.c.l.b16 %v53
    %v80 = vunpack.c.l.b16 %v54
    %v81 = vunpack.c.h.b16 %v54
    %v82 = vunpack.c.l.b16 %v55
    %v83 = vpack.c.b16 %v80, %v77
    %v84 = vpack.c.b16 %v81, %v78
    %v85 = vpack.c.b16 %v82, %v79
    %vm89 = vcmask 130048
    %v91 = vsel %vm89, %v51, 0
    %93 = vmatprep.subr.bf16.mxu0 %v84
    %94 = vmatpush1.bf16.msra.mxu0 %v83
    %95 = vmatprep.subr.bf16.mxu0 0
    %96 = vmatpush1.bf16.msra.mxu0 0
    %97 = vmatprep.subr.bf16.mxu0 0
    %98 = vmatpush1.bf16.msra.mxu0 0
    %99 = vmatprep.subr.bf16.mxu0 0
    %100 = vmatpush1.bf16.msra.mxu0 0
    %101 = vmatprep.subr.bf16.mxu0 0
    %102 = vmatpush1.bf16.msra.mxu0 0
    %103 = vmatprep.subr.bf16.mxu0 0
    %104 = vmatpush1.bf16.msra.mxu0 0
    %105 = vmatprep.subr.bf16.mxu0 0
    %106 = vmatpush1.bf16.msra.mxu0 0
    %107 = vmatprep.subr.bf16.mxu0 0
    %108 = vmatpush1.bf16.msra.mxu0 0
    %109 = vmatprep.subr.bf16.mxu0 0
    %110 = vmatpush1.bf16.msra.mxu0 0
    %111 = vmatprep.subr.bf16.mxu0 0
    %112 = vmatpush1.bf16.msra.mxu0 0
    %113 = vmatprep.subr.bf16.mxu0 0
    %114 = vmatpush1.bf16.msra.mxu0 0
    %115 = vmatprep.subr.bf16.mxu0 0
    %116 = vmatpush1.bf16.msra.mxu0 0
    %117 = vmatprep.subr.bf16.mxu0 0
    %118 = vmatpush1.bf16.msra.mxu0 0
    %119 = vmatprep.subr.bf16.mxu0 0
    %120 = vmatpush1.bf16.msra.mxu0 0
    %121 = vmatprep.subr.bf16.mxu0 0
    %122 = vmatpush1.bf16.msra.mxu0 0
    %123 = vmatprep.subr.bf16.mxu0 0
    %124 = vmatpush1.bf16.msra.mxu0 0
    %125 = vmatprep.mubr.bf16.mxu0 0
    %126 = vmatmul.mubr.bf16.gmra.mrb[0].mxu0 %v91
    %v127 = vpop.f32.mrb[0].mxu0
    %v128 = vadd.f32 %v61, %v127
    %v129 = vpop.f32.mrb[0].mxu0
    %v130 = vadd.f32 %v65, %v129
    %v131 = vpop.f32.mrb[0].mxu0
    %v132 = vadd.f32 %v61, %v131
    %v133 = vpop.f32.mrb[0].mxu0
    %v134 = vadd.f32 %v65, %v133
    %135 = vdwg.mxu0
    %136 = vmatprep.subr.bf16.mxu0 0
    %137 = vmatpush1.bf16.msra.mxu0 %v85
    %138 = vmatprep.subr.bf16.mxu0 0
    %139 = vmatpush1.bf16.msra.mxu0 0
    %140 = vmatprep.subr.bf16.mxu0 0
    %141 = vmatpush1.bf16.msra.mxu0 0
    %142 = vmatprep.subr.bf16.mxu0 0
    %143 = vmatpush1.bf16.msra.mxu0 0
    %144 = vmatprep.subr.bf16.mxu0 0
    %145 = vmatpush1.bf16.msra.mxu0 0
    %146 = vmatprep.subr.bf16.mxu0 0
    %147 = vmatpush1.bf16.msra.mxu0 0
    %148 = vmatprep.subr.bf16.mxu0 0
    %149 = vmatpush1.bf16.msra.mxu0 0
    %150 = vmatprep.subr.bf16.mxu0 0
    %151 = vmatpush1.bf16.msra.mxu0 0
    %152 = vmatprep.subr.bf16.mxu0 0
    %153 = vmatpush1.bf16.msra.mxu0 0
    %154 = vmatprep.subr.bf16.mxu0 0
    %155 = vmatpush1.bf16.msra.mxu0 0
    %156 = vmatprep.subr.bf16.mxu0 0
    %157 = vmatpush1.bf16.msra.mxu0 0
    %158 = vmatprep.subr.bf16.mxu0 0
    %159 = vmatpush1.bf16.msra.mxu0 0
    %160 = vmatprep.subr.bf16.mxu0 0
    %161 = vmatpush1.bf16.msra.mxu0 0
    %162 = vmatprep.subr.bf16.mxu0 0
    %163 = vmatpush1.bf16.msra.mxu0 0
    %164 = vmatprep.subr.bf16.mxu0 0
    %165 = vmatpush1.bf16.msra.mxu0 0
    %166 = vmatprep.subr.bf16.mxu0 0
    %167 = vmatpush1.bf16.msra.mxu0 0
    %168 = vmatprep.mubr.bf16.mxu0 0
    %169 = vmatmul.mubr.bf16.gmra.mrb[0].mxu0 %v91
    %v170 = vpop.f32.mrb[0].mxu0
    %v171 = vadd.f32 %v69, %v170
    %v172 = vpop.f32.mrb[0].mxu0
    %v173 = vpop.f32.mrb[0].mxu0
    %v174 = vadd.f32 %v69, %v173
    %v175 = vpop.f32.mrb[0].mxu0
    %176 = vdwg.mxu0
    %177 = vst [vmem:[#allocation2] sm:$0xff] %v128
    %178 = vst [vmem:[#allocation2 + $0x8] sm:$0xff] %v130
    %179 = vst [vmem:[#allocation2 + $0x10] sm:$0xff] %v171
    %180 = vst [vmem:[#allocation2 + $0x18] sm:$0xff] %v132
    %181 = vst [vmem:[#allocation2 + $0x20] sm:$0xff] %v134
    %182 = vst [vmem:[#allocation2 + $0x28] sm:$0xff] %v174
    %s183 = scalar_lea.vmem [#allocation3], 24
    %v184 = vld [vmem:[%s183] sm:$0xff]
    %v185 = vld [vmem:[%s183 + $0x8] sm:$0xf]
    %v186 = vld [vmem:[%s183 + $0xc] sm:$0xff]
    %v187 = vld [vmem:[%s183 + $0x14] sm:$0xf]
    %s188 = scalar_lea.vmem %s3, 3
    %v189 = vld [vmem:[%s188] sm:$0x7]
    %v191 = vlaneseq
    %v192 = vshrl.u32 %v191, 7
    %v193 = vsub.s32 0, %v192
    %v194 = vrot.slane %v189, %v193
    %v195 = vlaneseq
    %v196 = vshrl.u32 %v195, 7
    %v197 = vsub.s32 1, %v196
    %v198 = vrot.slane %v189, %v197
    %v199 = vlaneseq
    %v200 = vshrl.u32 %v199, 7
    %v201 = vsub.s32 2, %v200
    %v202 = vrot.slane %v189, %v201
    %v210 = vunpack.c.l.b16 %v184
    %v211 = vunpack.c.h.b16 %v184
    %v212 = vunpack.c.l.b16 %v185
    %v213 = vunpack.c.l.b16 %v186
    %v214 = vunpack.c.h.b16 %v186
    %v215 = vunpack.c.l.b16 %v187
    %v216 = vpack.c.b16 %v213, %v210
    %v217 = vpack.c.b16 %v214, %v211
    %v218 = vpack.c.b16 %v215, %v212
    %222 = vmatprep.subr.bf16.mxu0 %v217
    %223 = vmatpush1.bf16.msra.mxu0 %v216
    %224 = vmatprep.subr.bf16.mxu0 0
    %225 = vmatpush1.bf16.msra.mxu0 0
    %226 = vmatprep.subr.bf16.mxu0 0
    %227 = vmatpush1.bf16.msra.mxu0 0
    %228 = vmatprep.subr.bf16.mxu0 0
    %229 = vmatpush1.bf16.msra.mxu0 0
    %230 = vmatprep.subr.bf16.mxu0 0
    %231 = vmatpush1.bf16.msra.mxu0 0
    %232 = vmatprep.subr.bf16.mxu0 0
    %233 = vmatpush1.bf16.msra.mxu0 0
    %234 = vmatprep.subr.bf16.mxu0 0
    %235 = vmatpush1.bf16.msra.mxu0 0
    %236 = vmatprep.subr.bf16.mxu0 0
    %237 = vmatpush1.bf16.msra.mxu0 0
    %238 = vmatprep.subr.bf16.mxu0 0
    %239 = vmatpush1.bf16.msra.mxu0 0
    %240 = vmatprep.subr.bf16.mxu0 0
    %241 = vmatpush1.bf16.msra.mxu0 0
    %242 = vmatprep.subr.bf16.mxu0 0
    %243 = vmatpush1.bf16.msra.mxu0 0
    %244 = vmatprep.subr.bf16.mxu0 0
    %245 = vmatpush1.bf16.msra.mxu0 0
    %246 = vmatprep.subr.bf16.mxu0 0
    %247 = vmatpush1.bf16.msra.mxu0 0
    %248 = vmatprep.subr.bf16.mxu0 0
    %249 = vmatpush1.bf16.msra.mxu0 0
    %250 = vmatprep.subr.bf16.mxu0 0
    %251 = vmatpush1.bf16.msra.mxu0 0
    %252 = vmatprep.subr.bf16.mxu0 0
    %253 = vmatpush1.bf16.msra.mxu0 0
    %254 = vmatprep.mubr.bf16.mxu0 0
    %255 = vmatmul.mubr.bf16.gmra.mrb[0].mxu0 %v91
    %v256 = vpop.f32.mrb[0].mxu0
    %v257 = vadd.f32 %v194, %v256
    %v258 = vpop.f32.mrb[0].mxu0
    %v259 = vadd.f32 %v198, %v258
    %v260 = vpop.f32.mrb[0].mxu0
    %v261 = vadd.f32 %v194, %v260
    %v262 = vpop.f32.mrb[0].mxu0
    %v263 = vadd.f32 %v198, %v262
    %264 = vdwg.mxu0
    %265 = vmatprep.subr.bf16.mxu0 0
    %266 = vmatpush1.bf16.msra.mxu0 %v218
    %267 = vmatprep.subr.bf16.mxu0 0
    %268 = vmatpush1.bf16.msra.mxu0 0
    %269 = vmatprep.subr.bf16.mxu0 0
    %270 = vmatpush1.bf16.msra.mxu0 0
    %271 = vmatprep.subr.bf16.mxu0 0
    %272 = vmatpush1.bf16.msra.mxu0 0
    %273 = vmatprep.subr.bf16.mxu0 0
    %274 = vmatpush1.bf16.msra.mxu0 0
    %275 = vmatprep.subr.bf16.mxu0 0
    %276 = vmatpush1.bf16.msra.mxu0 0
    %277 = vmatprep.subr.bf16.mxu0 0
    %278 = vmatpush1.bf16.msra.mxu0 0
    %279 = vmatprep.subr.bf16.mxu0 0
    %280 = vmatpush1.bf16.msra.mxu0 0
    %281 = vmatprep.subr.bf16.mxu0 0
    %282 = vmatpush1.bf16.msra.mxu0 0
    %283 = vmatprep.subr.bf16.mxu0 0
    %284 = vmatpush1.bf16.msra.mxu0 0
    %285 = vmatprep.subr.bf16.mxu0 0
    %286 = vmatpush1.bf16.msra.mxu0 0
    %287 = vmatprep.subr.bf16.mxu0 0
    %288 = vmatpush1.bf16.msra.mxu0 0
    %289 = vmatprep.subr.bf16.mxu0 0
    %290 = vmatpush1.bf16.msra.mxu0 0
    %291 = vmatprep.subr.bf16.mxu0 0
    %292 = vmatpush1.bf16.msra.mxu0 0
    %293 = vmatprep.subr.bf16.mxu0 0
    %294 = vmatpush1.bf16.msra.mxu0 0
    %295 = vmatprep.subr.bf16.mxu0 0
    %296 = vmatpush1.bf16.msra.mxu0 0
    %297 = vmatprep.mubr.bf16.mxu0 0
    %298 = vmatmul.mubr.bf16.gmra.mrb[0].mxu0 %v91
    %v299 = vpop.f32.mrb[0].mxu0
    %v300 = vadd.f32 %v202, %v299
    %v301 = vpop.f32.mrb[0].mxu0
    %v302 = vpop.f32.mrb[0].mxu0
    %v303 = vadd.f32 %v202, %v302
    %v304 = vpop.f32.mrb[0].mxu0
    %305 = vdwg.mxu0
    %s306 = scalar_lea.vmem [#allocation2], 48
    %307 = vst [vmem:[%s306] sm:$0xff] %v257
    %308 = vst [vmem:[%s306 + $0x8] sm:$0xff] %v259
    %309 = vst [vmem:[%s306 + $0x10] sm:$0xff] %v300
    %310 = vst [vmem:[%s306 + $0x18] sm:$0xff] %v261
    %311 = vst [vmem:[%s306 + $0x20] sm:$0xff] %v263
    %312 = vst [vmem:[%s306 + $0x28] sm:$0xff] %v303
    %v313 = vld [vmem:[#allocation2] sm:$0xff]
    %v314 = vld [vmem:[#allocation2 + $0x8] sm:$0xff]
    %v315 = vld [vmem:[#allocation2 + $0x10] sm:$0xff]
    %v316 = vld [vmem:[#allocation5] sm:$0xff]
    %v317 = vld [vmem:[#allocation5 + $0x8] sm:$0xf]
    %v318 = vld [vmem:[#allocation5 + $0xc] sm:$0xff]
    %v319 = vld [vmem:[#allocation5 + $0x14] sm:$0xf]
    %v320 = vld [vmem:[#allocation5 + $0x18] sm:$0xff]
    %v321 = vld [vmem:[#allocation5 + $0x20] sm:$0xf]
    %v322 = vld [vmem:[#allocation5 + $0x24] sm:$0xff]
    %v323 = vld [vmem:[#allocation5 + $0x2c] sm:$0xf]
    %v324 = vld [vmem:[#allocation5 + $0x30] sm:$0xff]
    %v325 = vld [vmem:[#allocation5 + $0x38] sm:$0xf]
    %v326 = vld [vmem:[#allocation5 + $0x3c] sm:$0xff]
    %v327 = vld [vmem:[#allocation5 + $0x44] sm:$0xf]
    %v328 = vld [vmem:[#allocation5 + $0x48] sm:$0xff]
    %v329 = vld [vmem:[#allocation5 + $0x50] sm:$0xf]
    %v330 = vld [vmem:[#allocation5 + $0x54] sm:$0xff]
    %v331 = vld [vmem:[#allocation5 + $0x5c] sm:$0xf]
    %v332 = vld [vmem:[#allocation5 + $0x60] sm:$0xff]
    %v333 = vld [vmem:[#allocation5 + $0x68] sm:$0xf]
    %v334 = vld [vmem:[#allocation5 + $0x6c] sm:$0xff]
    %v335 = vld [vmem:[#allocation5 + $0x74] sm:$0xf]
    %v336 = vld [vmem:[#allocation5 + $0x78] sm:$0xff]
    %v337 = vld [vmem:[#allocation5 + $0x80] sm:$0xf]
    %v338 = vld [vmem:[#allocation5 + $0x84] sm:$0xff]
    %v339 = vld [vmem:[#allocation5 + $0x8c] sm:$0xf]
    %v340 = vld [vmem:[#allocation5 + $0x90] sm:$0xff]
    %v341 = vld [vmem:[#allocation5 + $0x98] sm:$0xf]
    %v342 = vld [vmem:[#allocation5 + $0x9c] sm:$0xff]
    %v343 = vld [vmem:[#allocation5 + $0xa4] sm:$0xf]
    %v344 = vld [vmem:[#allocation5 + $0xa8] sm:$0xff]
    %v345 = vld [vmem:[#allocation5 + $0xb0] sm:$0xf]
    %v346 = vld [vmem:[#allocation5 + $0xb4] sm:$0xff]
    %v347 = vld [vmem:[#allocation5 + $0xbc] sm:$0xf]
    %v348 = vld [vmem:[%s4] sm:$0x7]
    %v350 = vlaneseq
    %v351 = vshrl.u32 %v350, 7
    %v352 = vsub.s32 0, %v351
    %v353 = vrot.slane %v348, %v352
    %v354 = vlaneseq
    %v355 = vshrl.u32 %v354, 7
    %v356 = vsub.s32 1, %v355
    %v357 = vrot.slane %v348, %v356
    %v358 = vlaneseq
    %v359 = vshrl.u32 %v358, 7
    %v360 = vsub.s32 2, %v359
    %v361 = vrot.slane %v348, %v360
    %v397 = vunpack.c.l.b16 %v316
    %v398 = vunpack.c.h.b16 %v316
    %v399 = vunpack.c.l.b16 %v317
    %v400 = vunpack.c.l.b16 %v318
    %v401 = vunpack.c.h.b16 %v318
    %v402 = vunpack.c.l.b16 %v319
    %v403 = vunpack.c.l.b16 %v320
    %v404 = vunpack.c.h.b16 %v320
    %v405 = vunpack.c.l.b16 %v321
    %v406 = vunpack.c.l.b16 %v322
    %v407 = vunpack.c.h.b16 %v322
    %v408 = vunpack.c.l.b16 %v323
    %v409 = vunpack.c.l.b16 %v324
    %v410 = vunpack.c.h.b16 %v324
    %v411 = vunpack.c.l.b16 %v325
    %v412 = vunpack.c.l.b16 %v326
    %v413 = vunpack.c.h.b16 %v326
    %v414 = vunpack.c.l.b16 %v327
    %v415 = vunpack.c.l.b16 %v328
    %v416 = vunpack.c.h.b16 %v328
    %v417 = vunpack.c.l.b16 %v329
    %v418 = vunpack.c.l.b16 %v330
    %v419 = vunpack.c.h.b16 %v330
    %v420 = vunpack.c.l.b16 %v331
    %v421 = vunpack.c.l.b16 %v332
    %v422 = vunpack.c.h.b16 %v332
    %v423 = vunpack.c.l.b16 %v333
    %v424 = vunpack.c.l.b16 %v334
    %v425 = vunpack.c.h.b16 %v334
    %v426 = vunpack.c.l.b16 %v335
    %v427 = vunpack.c.l.b16 %v336
    %v428 = vunpack.c.h.b16 %v336
    %v429 = vunpack.c.l.b16 %v337
    %v430 = vunpack.c.l.b16 %v338
    %v431 = vunpack.c.h.b16 %v338
    %v432 = vunpack.c.l.b16 %v339
    %v433 = vunpack.c.l.b16 %v340
    %v434 = vunpack.c.h.b16 %v340
    %v435 = vunpack.c.l.b16 %v341
    %v436 = vunpack.c.l.b16 %v342
    %v437 = vunpack.c.h.b16 %v342
    %v438 = vunpack.c.l.b16 %v343
    %v439 = vunpack.c.l.b16 %v344
    %v440 = vunpack.c.h.b16 %v344
    %v441 = vunpack.c.l.b16 %v345
    %v442 = vunpack.c.l.b16 %v346
    %v443 = vunpack.c.h.b16 %v346
    %v444 = vunpack.c.l.b16 %v347
    %v445 = vpack.c.b16 %v400, %v397
    %v446 = vpack.c.b16 %v401, %v398
    %v447 = vpack.c.b16 %v402, %v399
    %v448 = vpack.c.b16 %v406, %v403
    %v449 = vpack.c.b16 %v407, %v404
    %v450 = vpack.c.b16 %v408, %v405
    %v451 = vpack.c.b16 %v412, %v409
    %v452 = vpack.c.b16 %v413, %v410
    %v453 = vpack.c.b16 %v414, %v411
    %v454 = vpack.c.b16 %v418, %v415
    %v455 = vpack.c.b16 %v419, %v416
    %v456 = vpack.c.b16 %v420, %v417
    %v457 = vpack.c.b16 %v424, %v421
    %v458 = vpack.c.b16 %v425, %v422
    %v459 = vpack.c.b16 %v426, %v423
    %v460 = vpack.c.b16 %v430, %v427
    %v461 = vpack.c.b16 %v431, %v428
    %v462 = vpack.c.b16 %v432, %v429
    %v463 = vpack.c.b16 %v436, %v433
    %v464 = vpack.c.b16 %v437, %v434
    %v465 = vpack.c.b16 %v438, %v435
    %v466 = vpack.c.b16 %v442, %v439
    %v467 = vpack.c.b16 %v443, %v440
    %v468 = vpack.c.b16 %v444, %v441
    %493 = vmatprep.subr.bf16.mxu0 %v446
    %494 = vmatpush1.bf16.msra.mxu0 %v445
    %495 = vmatprep.subr.bf16.mxu0 %v449
    %496 = vmatpush1.bf16.msra.mxu0 %v448
    %497 = vmatprep.subr.bf16.mxu0 %v452
    %498 = vmatpush1.bf16.msra.mxu0 %v451
    %499 = vmatprep.subr.bf16.mxu0 %v455
    %500 = vmatpush1.bf16.msra.mxu0 %v454
    %501 = vmatprep.subr.bf16.mxu0 %v458
    %502 = vmatpush1.bf16.msra.mxu0 %v457
    %503 = vmatprep.subr.bf16.mxu0 %v461
    %504 = vmatpush1.bf16.msra.mxu0 %v460
    %505 = vmatprep.subr.bf16.mxu0 %v464
    %506 = vmatpush1.bf16.msra.mxu0 %v463
    %507 = vmatprep.subr.bf16.mxu0 %v467
    %508 = vmatpush1.bf16.msra.mxu0 %v466
    %509 = vmatprep.subr.bf16.mxu0 0
    %510 = vmatpush1.bf16.msra.mxu0 0
    %511 = vmatprep.subr.bf16.mxu0 0
    %512 = vmatpush1.bf16.msra.mxu0 0
    %513 = vmatprep.subr.bf16.mxu0 0
    %514 = vmatpush1.bf16.msra.mxu0 0
    %515 = vmatprep.subr.bf16.mxu0 0
    %516 = vmatpush1.bf16.msra.mxu0 0
    %517 = vmatprep.subr.bf16.mxu0 0
    %518 = vmatpush1.bf16.msra.mxu0 0
    %519 = vmatprep.subr.bf16.mxu0 0
    %520 = vmatpush1.bf16.msra.mxu0 0
    %521 = vmatprep.subr.bf16.mxu0 0
    %522 = vmatpush1.bf16.msra.mxu0 0
    %523 = vmatprep.subr.bf16.mxu0 0
    %524 = vmatpush1.bf16.msra.mxu0 0
    %525 = vmatprep.mubr.bf16.mxu0 0
    %526 = vmatmul.mubr.bf16.gmra.mrb[0].mxu0 0
    %v527 = vpop.f32.mrb[0].mxu0
    %v528 = vadd.f32 %v353, %v527
    %v529 = vpop.f32.mrb[0].mxu0
    %v530 = vadd.f32 %v357, %v529
    %v531 = vpop.f32.mrb[0].mxu0
    %v532 = vpop.f32.mrb[0].mxu0
    %533 = vdwg.mxu0
    %534 = vmatprep.subr.bf16.mxu0 0
    %535 = vmatpush1.bf16.msra.mxu0 %v447
    %536 = vmatprep.subr.bf16.mxu0 0
    %537 = vmatpush1.bf16.msra.mxu0 %v450
    %538 = vmatprep.subr.bf16.mxu0 0
    %539 = vmatpush1.bf16.msra.mxu0 %v453
    %540 = vmatprep.subr.bf16.mxu0 0
    %541 = vmatpush1.bf16.msra.mxu0 %v456
    %542 = vmatprep.subr.bf16.mxu0 0
    %543 = vmatpush1.bf16.msra.mxu0 %v459
    %544 = vmatprep.subr.bf16.mxu0 0
    %545 = vmatpush1.bf16.msra.mxu0 %v462
    %546 = vmatprep.subr.bf16.mxu0 0
    %547 = vmatpush1.bf16.msra.mxu0 %v465
    %548 = vmatprep.subr.bf16.mxu0 0
    %549 = vmatpush1.bf16.msra.mxu0 %v468
    %550 = vmatprep.subr.bf16.mxu0 0
    %551 = vmatpush1.bf16.msra.mxu0 0
    %552 = vmatprep.subr.bf16.mxu0 0
    %553 = vmatpush1.bf16.msra.mxu0 0
    %554 = vmatprep.subr.bf16.mxu0 0
    %555 = vmatpush1.bf16.msra.mxu0 0
    %556 = vmatprep.subr.bf16.mxu0 0
    %557 = vmatpush1.bf16.msra.mxu0 0
    %558 = vmatprep.subr.bf16.mxu0 0
    %559 = vmatpush1.bf16.msra.mxu0 0
    %560 = vmatprep.subr.bf16.mxu0 0
    %561 = vmatpush1.bf16.msra.mxu0 0
    %562 = vmatprep.subr.bf16.mxu0 0
    %563 = vmatpush1.bf16.msra.mxu0 0
    %564 = vmatprep.subr.bf16.mxu0 0
    %565 = vmatpush1.bf16.msra.mxu0 0
    %566 = vmatprep.mubr.bf16.mxu0 0
    %567 = vmatmul.mubr.bf16.gmra.mrb[0].mxu0 0
    %v568 = vpop.f32.mrb[0].mxu0
    %v569 = vadd.f32 %v361, %v568
    %v570 = vpop.f32.mrb[0].mxu0
    %v571 = vpop.f32.mrb[0].mxu0
    %v572 = vpop.f32.mrb[0].mxu0
    %573 = vdwg.mxu0
    %v574 = vadd.f32 %v313, %v528
    %v575 = vxor.u32 %v574, 2147483648
    %v576 = vmul.f32 %v575, 1.442695
    %v577 = vpow.pop %v576
    %v578 = vadd.f32 %v577, 1.0
    %v579 = vrcp.pop %v578
    %v580 = vmul.f32 1.0, %v579
    %v581 = vadd.f32 %v314, %v530
    %v582 = vxor.u32 %v581, 2147483648
    %v583 = vmul.f32 %v582, 1.442695
    %v584 = vpow.pop %v583
    %v585 = vadd.f32 %v584, 1.0
    %v586 = vrcp.pop %v585
    %v587 = vmul.f32 1.0, %v586
    %v588 = vmul.f32 %v580, %v569
    %v589 = vadd.f32 %v315, %v588
    %v590 = vtanh.pop %v589
    %v591 = vsub.f32 1.0, %v587
    %v592 = vmul.f32 %v591, %v590
    %v593 = vmul.f32 %v587, 0.0
    %v594 = vadd.f32 %v592, %v593
    %s595 = scalar_lea.vmem [#allocation2], 72
    %v596 = vld [vmem:[%s595] sm:$0xff]
    %v597 = vld [vmem:[%s595 + $0x8] sm:$0xff]
    %v598 = vld [vmem:[%s595 + $0x10] sm:$0xff]
    %s599 = scalar_lea.vmem [#allocation5], 192
    %v600 = vld [vmem:[%s599] sm:$0xff]
    %v601 = vld [vmem:[%s599 + $0x8] sm:$0xf]
    %v602 = vld [vmem:[%s599 + $0xc] sm:$0xff]
    %v603 = vld [vmem:[%s599 + $0x14] sm:$0xf]
    %v604 = vld [vmem:[%s599 + $0x18] sm:$0xff]
    %v605 = vld [vmem:[%s599 + $0x20] sm:$0xf]
    %v606 = vld [vmem:[%s599 + $0x24] sm:$0xff]
    %v607 = vld [vmem:[%s599 + $0x2c] sm:$0xf]
    %v608 = vld [vmem:[%s599 + $0x30] sm:$0xff]
    %v609 = vld [vmem:[%s599 + $0x38] sm:$0xf]
    %v610 = vld [vmem:[%s599 + $0x3c] sm:$0xff]
    %v611 = vld [vmem:[%s599 + $0x44] sm:$0xf]
    %v612 = vld [vmem:[%s599 + $0x48] sm:$0xff]
    %v613 = vld [vmem:[%s599 + $0x50] sm:$0xf]
    %v614 = vld [vmem:[%s599 + $0x54] sm:$0xff]
    %v615 = vld [vmem:[%s599 + $0x5c] sm:$0xf]
    %v616 = vld [vmem:[%s599 + $0x60] sm:$0xff]
    %v617 = vld [vmem:[%s599 + $0x68] sm:$0xf]
    %v618 = vld [vmem:[%s599 + $0x6c] sm:$0xff]
    %v619 = vld [vmem:[%s599 + $0x74] sm:$0xf]
    %v620 = vld [vmem:[%s599 + $0x78] sm:$0xff]
    %v621 = vld [vmem:[%s599 + $0x80] sm:$0xf]
    %v622 = vld [vmem:[%s599 + $0x84] sm:$0xff]
    %v623 = vld [vmem:[%s599 + $0x8c] sm:$0xf]
    %v624 = vld [vmem:[%s599 + $0x90] sm:$0xff]
    %v625 = vld [vmem:[%s599 + $0x98] sm:$0xf]
    %v626 = vld [vmem:[%s599 + $0x9c] sm:$0xff]
    %v627 = vld [vmem:[%s599 + $0xa4] sm:$0xf]
    %v628 = vld [vmem:[%s599 + $0xa8] sm:$0xff]
    %v629 = vld [vmem:[%s599 + $0xb0] sm:$0xf]
    %v630 = vld [vmem:[%s599 + $0xb4] sm:$0xff]
    %v631 = vld [vmem:[%s599 + $0xbc] sm:$0xf]
    %s632 = scalar_lea.vmem %s4, 3
    %v633 = vld [vmem:[%s632] sm:$0x7]
    %v635 = vlaneseq
    %v636 = vshrl.u32 %v635, 7
    %v637 = vsub.s32 0, %v636
    %v638 = vrot.slane %v633, %v637
    %v639 = vlaneseq
    %v640 = vshrl.u32 %v639, 7
    %v641 = vsub.s32 1, %v640
    %v642 = vrot.slane %v633, %v641
    %v643 = vlaneseq
    %v644 = vshrl.u32 %v643, 7
    %v645 = vsub.s32 2, %v644
    %v646 = vrot.slane %v633, %v645
    %v682 = vunpack.c.l.b16 %v600
    %v683 = vunpack.c.h.b16 %v600
    %v684 = vunpack.c.l.b16 %v601
    %v685 = vunpack.c.l.b16 %v602
    %v686 = vunpack.c.h.b16 %v602
    %v687 = vunpack.c.l.b16 %v603
    %v688 = vunpack.c.l.b16 %v604
    %v689 = vunpack.c.h.b16 %v604
    %v690 = vunpack.c.l.b16 %v605
    %v691 = vunpack.c.l.b16 %v606
    %v692 = vunpack.c.h.b16 %v606
    %v693 = vunpack.c.l.b16 %v607
    %v694 = vunpack.c.l.b16 %v608
    %v695 = vunpack.c.h.b16 %v608
    %v696 = vunpack.c.l.b16 %v609
    %v697 = vunpack.c.l.b16 %v610
    %v698 = vunpack.c.h.b16 %v610
    %v699 = vunpack.c.l.b16 %v611
    %v700 = vunpack.c.l.b16 %v612
    %v701 = vunpack.c.h.b16 %v612
    %v702 = vunpack.c.l.b16 %v613
    %v703 = vunpack.c.l.b16 %v614
    %v704 = vunpack.c.h.b16 %v614
    %v705 = vunpack.c.l.b16 %v615
    %v706 = vunpack.c.l.b16 %v616
    %v707 = vunpack.c.h.b16 %v616
    %v708 = vunpack.c.l.b16 %v617
    %v709 = vunpack.c.l.b16 %v618
    %v710 = vunpack.c.h.b16 %v618
    %v711 = vunpack.c.l.b16 %v619
    %v712 = vunpack.c.l.b16 %v620
    %v713 = vunpack.c.h.b16 %v620
    %v714 = vunpack.c.l.b16 %v621
    %v715 = vunpack.c.l.b16 %v622
    %v716 = vunpack.c.h.b16 %v622
    %v717 = vunpack.c.l.b16 %v623
    %v718 = vunpack.c.l.b16 %v624
    %v719 = vunpack.c.h.b16 %v624
    %v720 = vunpack.c.l.b16 %v625
    %v721 = vunpack.c.l.b16 %v626
    %v722 = vunpack.c.h.b16 %v626
    %v723 = vunpack.c.l.b16 %v627
    %v724 = vunpack.c.l.b16 %v628
    %v725 = vunpack.c.h.b16 %v628
    %v726 = vunpack.c.l.b16 %v629
    %v727 = vunpack.c.l.b16 %v630
    %v728 = vunpack.c.h.b16 %v630
    %v729 = vunpack.c.l.b16 %v631
    %v730 = vpack.c.b16 %v685, %v682
    %v731 = vpack.c.b16 %v686, %v683
    %v732 = vpack.c.b16 %v687, %v684
    %v733 = vpack.c.b16 %v691, %v688
    %v734 = vpack.c.b16 %v692, %v689
    %v735 = vpack.c.b16 %v693, %v690
    %v736 = vpack.c.b16 %v697, %v694
    %v737 = vpack.c.b16 %v698, %v695
    %v738 = vpack.c.b16 %v699, %v696
    %v739 = vpack.c.b16 %v703, %v700
    %v740 = vpack.c.b16 %v704, %v701
    %v741 = vpack.c.b16 %v705, %v702
    %v742 = vpack.c.b16 %v709, %v706
    %v743 = vpack.c.b16 %v710, %v707
    %v744 = vpack.c.b16 %v711, %v708
    %v745 = vpack.c.b16 %v715, %v712
    %v746 = vpack.c.b16 %v716, %v713
    %v747 = vpack.c.b16 %v717, %v714
    %v748 = vpack.c.b16 %v721, %v718
    %v749 = vpack.c.b16 %v722, %v719
    %v750 = vpack.c.b16 %v723, %v720
    %v751 = vpack.c.b16 %v727, %v724
    %v752 = vpack.c.b16 %v728, %v725
    %v753 = vpack.c.b16 %v729, %v726
    %778 = vmatprep.subr.bf16.mxu0 %v731
    %779 = vmatpush1.bf16.msra.mxu0 %v730
    %780 = vmatprep.subr.bf16.mxu0 %v734
    %781 = vmatpush1.bf16.msra.mxu0 %v733
    %782 = vmatprep.subr.bf16.mxu0 %v737
    %783 = vmatpush1.bf16.msra.mxu0 %v736
    %784 = vmatprep.subr.bf16.mxu0 %v740
    %785 = vmatpush1.bf16.msra.mxu0 %v739
    %786 = vmatprep.subr.bf16.mxu0 %v743
    %787 = vmatpush1.bf16.msra.mxu0 %v742
    %788 = vmatprep.subr.bf16.mxu0 %v746
    %789 = vmatpush1.bf16.msra.mxu0 %v745
    %790 = vmatprep.subr.bf16.mxu0 %v749
    %791 = vmatpush1.bf16.msra.mxu0 %v748
    %792 = vmatprep.subr.bf16.mxu0 %v752
    %793 = vmatpush1.bf16.msra.mxu0 %v751
    %794 = vmatprep.subr.bf16.mxu0 0
    %795 = vmatpush1.bf16.msra.mxu0 0
    %796 = vmatprep.subr.bf16.mxu0 0
    %797 = vmatpush1.bf16.msra.mxu0 0
    %798 = vmatprep.subr.bf16.mxu0 0
    %799 = vmatpush1.bf16.msra.mxu0 0
    %800 = vmatprep.subr.bf16.mxu0 0
    %801 = vmatpush1.bf16.msra.mxu0 0
    %802 = vmatprep.subr.bf16.mxu0 0
    %803 = vmatpush1.bf16.msra.mxu0 0
    %804 = vmatprep.subr.bf16.mxu0 0
    %805 = vmatpush1.bf16.msra.mxu0 0
    %806 = vmatprep.subr.bf16.mxu0 0
    %807 = vmatpush1.bf16.msra.mxu0 0
    %808 = vmatprep.subr.bf16.mxu0 0
    %809 = vmatpush1.bf16.msra.mxu0 0
    %810 = vmatprep.mubr.bf16.mxu0 0
    %811 = vmatmul.mubr.bf16.gmra.mrb[0].mxu0 0
    %v812 = vpop.f32.mrb[0].mxu0
    %v813 = vadd.f32 %v638, %v812
    %v814 = vpop.f32.mrb[0].mxu0
    %v815 = vadd.f32 %v642, %v814
    %v816 = vpop.f32.mrb[0].mxu0
    %v817 = vpop.f32.mrb[0].mxu0
    %818 = vdwg.mxu0
    %819 = vmatprep.subr.bf16.mxu0 0
    %820 = vmatpush1.bf16.msra.mxu0 %v732
    %821 = vmatprep.subr.bf16.mxu0 0
    %822 = vmatpush1.bf16.msra.mxu0 %v735
    %823 = vmatprep.subr.bf16.mxu0 0
    %824 = vmatpush1.bf16.msra.mxu0 %v738
    %825 = vmatprep.subr.bf16.mxu0 0
    %826 = vmatpush1.bf16.msra.mxu0 %v741
    %827 = vmatprep.subr.bf16.mxu0 0
    %828 = vmatpush1.bf16.msra.mxu0 %v744
    %829 = vmatprep.subr.bf16.mxu0 0
    %830 = vmatpush1.bf16.msra.mxu0 %v747
    %831 = vmatprep.subr.bf16.mxu0 0
    %832 = vmatpush1.bf16.msra.mxu0 %v750
    %833 = vmatprep.subr.bf16.mxu0 0
    %834 = vmatpush1.bf16.msra.mxu0 %v753
    %835 = vmatprep.subr.bf16.mxu0 0
    %836 = vmatpush1.bf16.msra.mxu0 0
    %837 = vmatprep.subr.bf16.mxu0 0
    %838 = vmatpush1.bf16.msra.mxu0 0
    %839 = vmatprep.subr.bf16.mxu0 0
    %840 = vmatpush1.bf16.msra.mxu0 0
    %841 = vmatprep.subr.bf16.mxu0 0
    %842 = vmatpush1.bf16.msra.mxu0 0
    %843 = vmatprep.subr.bf16.mxu0 0
    %844 = vmatpush1.bf16.msra.mxu0 0
    %845 = vmatprep.subr.bf16.mxu0 0
    %846 = vmatpush1.bf16.msra.mxu0 0
    %847 = vmatprep.subr.bf16.mxu0 0
    %848 = vmatpush1.bf16.msra.mxu0 0
    %849 = vmatprep.subr.bf16.mxu0 0
    %850 = vmatpush1.bf16.msra.mxu0 0
    %851 = vmatprep.mubr.bf16.mxu0 0
    %852 = vmatmul.mubr.bf16.gmra.mrb[0].mxu0 0
    %v853 = vpop.f32.mrb[0].mxu0
    %v854 = vadd.f32 %v646, %v853
    %v855 = vpop.f32.mrb[0].mxu0
    %v856 = vpop.f32.mrb[0].mxu0
    %v857 = vpop.f32.mrb[0].mxu0
    %858 = vdwg.mxu0
    %v859 = vadd.f32 %v596, %v813
    %v860 = vxor.u32 %v859, 2147483648
    %v861 = vmul.f32 %v860, 1.442695
    %v862 = vpow.pop %v861
    %v863 = vadd.f32 %v862, 1.0
    %v864 = vrcp.pop %v863
    %v865 = vmul.f32 1.0, %v864
    %v866 = vadd.f32 %v597, %v815
    %v867 = vxor.u32 %v866, 2147483648
    %v868 = vmul.f32 %v867, 1.442695
    %v869 = vpow.pop %v868
    %v870 = vadd.f32 %v869, 1.0
    %v871 = vrcp.pop %v870
    %v872 = vmul.f32 1.0, %v871
    %v873 = vmul.f32 %v865, %v854
    %v874 = vadd.f32 %v598, %v873
    %v875 = vtanh.pop %v874
    %v876 = vsub.f32 1.0, %v872
    %v877 = vmul.f32 %v876, %v875
    %v878 = vmul.f32 %v872, 0.0
    %v879 = vadd.f32 %v877, %v878
    %880 = vst [vmem:[%s5] sm:$0xff] %v594
    %s881 = scalar_lea.vmem %s5, 16
    %882 = vst [vmem:[%s881 + $0x8] sm:$0xff] %v879
    %s883 = scalar_lea.vmem [#allocation2], 24
    %v884 = vld [vmem:[%s883] sm:$0xff]
    %v885 = vld [vmem:[%s883 + $0x8] sm:$0xff]
    %v886 = vld [vmem:[%s883 + $0x10] sm:$0xff]
    %v887 = vpack.c.bf16 %v594, %v594
    %v888 = vld [vmem:[#allocation5] sm:$0xff]
    %v889 = vld [vmem:[#allocation5 + $0x8] sm:$0xf]
    %v890 = vld [vmem:[#allocation5 + $0xc] sm:$0xff]
    %v891 = vld [vmem:[#allocation5 + $0x14] sm:$0xf]
    %v892 = vld [vmem:[#allocation5 + $0x18] sm:$0xff]
    %v893 = vld [vmem:[#allocation5 + $0x20] sm:$0xf]
    %v894 = vld [vmem:[#allocation5 + $0x24] sm:$0xff]
    %v895 = vld [vmem:[#allocation5 + $0x2c] sm:$0xf]
    %v896 = vld [vmem:[#allocation5 + $0x30] sm:$0xff]
    %v897 = vld [vmem:[#allocation5 + $0x38] sm:$0xf]
    %v898 = vld [vmem:[#allocation5 + $0x3c] sm:$0xff]
    %v899 = vld [vmem:[#allocation5 + $0x44] sm:$0xf]
    %v900 = vld [vmem:[#allocation5 + $0x48] sm:$0xff]
    %v901 = vld [vmem:[#allocation5 + $0x50] sm:$0xf]
    %v902 = vld [vmem:[#allocation5 + $0x54] sm:$0xff]
    %v903 = vld [vmem:[#allocation5 + $0x5c] sm:$0xf]
    %v904 = vld [vmem:[#allocation5 + $0x60] sm:$0xff]
    %v905 = vld [vmem:[#allocation5 + $0x68] sm:$0xf]
    %v906 = vld [vmem:[#allocation5 + $0x6c] sm:$0xff]
    %v907 = vld [vmem:[#allocation5 + $0x74] sm:$0xf]
    %v908 = vld [vmem:[#allocation5 + $0x78] sm:$0xff]
    %v909 = vld [vmem:[#allocation5 + $0x80] sm:$0xf]
    %v910 = vld [vmem:[#allocation5 + $0x84] sm:$0xff]
    %v911 = vld [vmem:[#allocation5 + $0x8c] sm:$0xf]
    %v912 = vld [vmem:[#allocation5 + $0x90] sm:$0xff]
    %v913 = vld [vmem:[#allocation5 + $0x98] sm:$0xf]
    %v914 = vld [vmem:[#allocation5 + $0x9c] sm:$0xff]
    %v915 = vld [vmem:[#allocation5 + $0xa4] sm:$0xf]
    %v916 = vld [vmem:[#allocation5 + $0xa8] sm:$0xff]
    %v917 = vld [vmem:[#allocation5 + $0xb0] sm:$0xf]
    %v918 = vld [vmem:[#allocation5 + $0xb4] sm:$0xff]
    %v919 = vld [vmem:[#allocation5 + $0xbc] sm:$0xf]
    %v920 = vld [vmem:[%s4] sm:$0x7]
    %v922 = vlaneseq
    %v923 = vshrl.u32 %v922, 7
    %v924 = vsub.s32 0, %v923
    %v925 = vrot.slane %v920, %v924
    %v926 = vlaneseq
    %v927 = vshrl.u32 %v926, 7
    %v928 = vsub.s32 1, %v927
    %v929 = vrot.slane %v920, %v928
    %v930 = vlaneseq
    %v931 = vshrl.u32 %v930, 7
    %v932 = vsub.s32 2, %v931
    %v933 = vrot.slane %v920, %v932
    %v969 = vunpack.c.l.b16 %v888
    %v970 = vunpack.c.h.b16 %v888
    %v971 = vunpack.c.l.b16 %v889
    %v972 = vunpack.c.l.b16 %v890
    %v973 = vunpack.c.h.b16 %v890
    %v974 = vunpack.c.l.b16 %v891
    %v975 = vunpack.c.l.b16 %v892
    %v976 = vunpack.c.h.b16 %v892
    %v977 = vunpack.c.l.b16 %v893
    %v978 = vunpack.c.l.b16 %v894
    %v979 = vunpack.c.h.b16 %v894
    %v980 = vunpack.c.l.b16 %v895
    %v981 = vunpack.c.l.b16 %v896
    %v982 = vunpack.c.h.b16 %v896
    %v983 = vunpack.c.l.b16 %v897
    %v984 = vunpack.c.l.b16 %v898
    %v985 = vunpack.c.h.b16 %v898
    %v986 = vunpack.c.l.b16 %v899
    %v987 = vunpack.c.l.b16 %v900
    %v988 = vunpack.c.h.b16 %v900
    %v989 = vunpack.c.l.b16 %v901
    %v990 = vunpack.c.l.b16 %v902
    %v991 = vunpack.c.h.b16 %v902
    %v992 = vunpack.c.l.b16 %v903
    %v993 = vunpack.c.l.b16 %v904
    %v994 = vunpack.c.h.b16 %v904
    %v995 = vunpack.c.l.b16 %v905
    %v996 = vunpack.c.l.b16 %v906
    %v997 = vunpack.c.h.b16 %v906
    %v998 = vunpack.c.l.b16 %v907
    %v999 = vunpack.c.l.b16 %v908
    %v1000 = vunpack.c.h.b16 %v908
    %v1001 = vunpack.c.l.b16 %v909
    %v1002 = vunpack.c.l.b16 %v910
    %v1003 = vunpack.c.h.b16 %v910
    %v1004 = vunpack.c.l.b16 %v911
    %v1005 = vunpack.c.l.b16 %v912
    %v1006 = vunpack.c.h.b16 %v912
    %v1007 = vunpack.c.l.b16 %v913
    %v1008 = vunpack.c.l.b16 %v914
    %v1009 = vunpack.c.h.b16 %v914
    %v1010 = vunpack.c.l.b16 %v915
    %v1011 = vunpack.c.l.b16 %v916
    %v1012 = vunpack.c.h.b16 %v916
    %v1013 = vunpack.c.l.b16 %v917
    %v1014 = vunpack.c.l.b16 %v918
    %v1015 = vunpack.c.h.b16 %v918
    %v1016 = vunpack.c.l.b16 %v919
    %v1017 = vpack.c.b16 %v972, %v969
    %v1018 = vpack.c.b16 %v973, %v970
    %v1019 = vpack.c.b16 %v974, %v971
    %v1020 = vpack.c.b16 %v978, %v975
    %v1021 = vpack.c.b16 %v979, %v976
    %v1022 = vpack.c.b16 %v980, %v977
    %v1023 = vpack.c.b16 %v984, %v981
    %v1024 = vpack.c.b16 %v985, %v982
    %v1025 = vpack.c.b16 %v986, %v983
    %v1026 = vpack.c.b16 %v990, %v987
    %v1027 = vpack.c.b16 %v991, %v988
    %v1028 = vpack.c.b16 %v992, %v989
    %v1029 = vpack.c.b16 %v996, %v993
    %v1030 = vpack.c.b16 %v997, %v994
    %v1031 = vpack.c.b16 %v998, %v995
    %v1032 = vpack.c.b16 %v1002, %v999
    %v1033 = vpack.c.b16 %v1003, %v1000
    %v1034 = vpack.c.b16 %v1004, %v1001
    %v1035 = vpack.c.b16 %v1008, %v1005
    %v1036 = vpack.c.b16 %v1009, %v1006
    %v1037 = vpack.c.b16 %v1010, %v1007
    %v1038 = vpack.c.b16 %v1014, %v1011
    %v1039 = vpack.c.b16 %v1015, %v1012
    %v1040 = vpack.c.b16 %v1016, %v1013
    %1065 = vmatprep.subr.bf16.mxu0 %v1018
    %1066 = vmatpush1.bf16.msra.mxu0 %v1017
    %1067 = vmatprep.subr.bf16.mxu0 %v1021
    %1068 = vmatpush1.bf16.msra.mxu0 %v1020
    %1069 = vmatprep.subr.bf16.mxu0 %v1024
    %1070 = vmatpush1.bf16.msra.mxu0 %v1023
    %1071 = vmatprep.subr.bf16.mxu0 %v1027
    %1072 = vmatpush1.bf16.msra.mxu0 %v1026
    %1073 = vmatprep.subr.bf16.mxu0 %v1030
    %1074 = vmatpush1.bf16.msra.mxu0 %v1029
    %1075 = vmatprep.subr.bf16.mxu0 %v1033
    %1076 = vmatpush1.bf16.msra.mxu0 %v1032
    %1077 = vmatprep.subr.bf16.mxu0 %v1036
    %1078 = vmatpush1.bf16.msra.mxu0 %v1035
    %1079 = vmatprep.subr.bf16.mxu0 %v1039
    %1080 = vmatpush1.bf16.msra.mxu0 %v1038
    %1081 = vmatprep.subr.bf16.mxu0 0
    %1082 = vmatpush1.bf16.msra.mxu0 0
    %1083 = vmatprep.subr.bf16.mxu0 0
    %1084 = vmatpush1.bf16.msra.mxu0 0
    %1085 = vmatprep.subr.bf16.mxu0 0
    %1086 = vmatpush1.bf16.msra.mxu0 0
    %1087 = vmatprep.subr.bf16.mxu0 0
    %1088 = vmatpush1.bf16.msra.mxu0 0
    %1089 = vmatprep.subr.bf16.mxu0 0
    %1090 = vmatpush1.bf16.msra.mxu0 0
    %1091 = vmatprep.subr.bf16.mxu0 0
    %1092 = vmatpush1.bf16.msra.mxu0 0
    %1093 = vmatprep.subr.bf16.mxu0 0
    %1094 = vmatpush1.bf16.msra.mxu0 0
    %1095 = vmatprep.subr.bf16.mxu0 0
    %1096 = vmatpush1.bf16.msra.mxu0 0
    %1097 = vmatprep.mubr.bf16.mxu0 0
    %1098 = vmatmul.mubr.bf16.gmra.mrb[0].mxu0 %v887
    %v1099 = vpop.f32.mrb[0].mxu0
    %v1100 = vadd.f32 %v925, %v1099
    %v1101 = vpop.f32.mrb[0].mxu0
    %v1102 = vadd.f32 %v929, %v1101
    %v1103 = vpop.f32.mrb[0].mxu0
    %v1104 = vpop.f32.mrb[0].mxu0
    %1105 = vdwg.mxu0
    %1106 = vmatprep.subr.bf16.mxu0 0
    %1107 = vmatpush1.bf16.msra.mxu0 %v1019
    %1108 = vmatprep.subr.bf16.mxu0 0
    %1109 = vmatpush1.bf16.msra.mxu0 %v1022
    %1110 = vmatprep.subr.bf16.mxu0 0
    %1111 = vmatpush1.bf16.msra.mxu0 %v1025
    %1112 = vmatprep.subr.bf16.mxu0 0
    %1113 = vmatpush1.bf16.msra.mxu0 %v1028
    %1114 = vmatprep.subr.bf16.mxu0 0
    %1115 = vmatpush1.bf16.msra.mxu0 %v1031
    %1116 = vmatprep.subr.bf16.mxu0 0
    %1117 = vmatpush1.bf16.msra.mxu0 %v1034
    %1118 = vmatprep.subr.bf16.mxu0 0
    %1119 = vmatpush1.bf16.msra.mxu0 %v1037
    %1120 = vmatprep.subr.bf16.mxu0 0
    %1121 = vmatpush1.bf16.msra.mxu0 %v1040
    %1122 = vmatprep.subr.bf16.mxu0 0
    %1123 = vmatpush1.bf16.msra.mxu0 0
    %1124 = vmatprep.subr.bf16.mxu0 0
    %1125 = vmatpush1.bf16.msra.mxu0 0
    %1126 = vmatprep.subr.bf16.mxu0 0
    %1127 = vmatpush1.bf16.msra.mxu0 0
    %1128 = vmatprep.subr.bf16.mxu0 0
    %1129 = vmatpush1.bf16.msra.mxu0 0
    %1130 = vmatprep.subr.bf16.mxu0 0
    %1131 = vmatpush1.bf16.msra.mxu0 0
    %1132 = vmatprep.subr.bf16.mxu0 0
    %1133 = vmatpush1.bf16.msra.mxu0 0
    %1134 = vmatprep.subr.bf16.mxu0 0
    %1135 = vmatpush1.bf16.msra.mxu0 0
    %1136 = vmatprep.subr.bf16.mxu0 0
    %1137 = vmatpush1.bf16.msra.mxu0 0
    %1138 = vmatprep.mubr.bf16.mxu0 0
    %1139 = vmatmul.mubr.bf16.gmra.mrb[0].mxu0 %v887
    %v1140 = vpop.f32.mrb[0].mxu0
    %v1141 = vadd.f32 %v933, %v1140
    %v1142 = vpop.f32.mrb[0].mxu0
    %v1143 = vpop.f32.mrb[0].mxu0
    %v1144 = vpop.f32.mrb[0].mxu0
    %1145 = vdwg.mxu0
    %v1146 = vadd.f32 %v884, %v1100
    %v1147 = vxor.u32 %v1146, 2147483648
    %v1148 = vmul.f32 %v1147, 1.442695
    %v1149 = vpow.pop %v1148
    %v1150 = vadd.f32 %v1149, 1.0
    %v1151 = vrcp.pop %v1150
    %v1152 = vmul.f32 1.0, %v1151
    %v1153 = vadd.f32 %v885, %v1102
    %v1154 = vxor.u32 %v1153, 2147483648
    %v1155 = vmul.f32 %v1154, 1.442695
    %v1156 = vpow.pop %v1155
    %v1157 = vadd.f32 %v1156, 1.0
    %v1158 = vrcp.pop %v1157
    %v1159 = vmul.f32 1.0, %v1158
    %v1160 = vmul.f32 %v1152, %v1141
    %v1161 = vadd.f32 %v886, %v1160
    %v1162 = vtanh.pop %v1161
    %v1163 = vsub.f32 1.0, %v1159
    %v1164 = vmul.f32 %v1163, %v1162
    %v1165 = vmul.f32 %v1159, %v594
    %v1166 = vadd.f32 %v1164, %v1165
    %v1167 = vld [vmem:[%s306] sm:$0xff]
    %v1168 = vld [vmem:[%s306 + $0x8] sm:$0xff]
    %v1169 = vld [vmem:[%s306 + $0x10] sm:$0xff]
    %v1170 = vpack.c.bf16 %v879, %v879
    %v1171 = vld [vmem:[%s599] sm:$0xff]
    %v1172 = vld [vmem:[%s599 + $0x8] sm:$0xf]
    %v1173 = vld [vmem:[%s599 + $0xc] sm:$0xff]
    %v1174 = vld [vmem:[%s599 + $0x14] sm:$0xf]
    %v1175 = vld [vmem:[%s599 + $0x18] sm:$0xff]
    %v1176 = vld [vmem:[%s599 + $0x20] sm:$0xf]
    %v1177 = vld [vmem:[%s599 + $0x24] sm:$0xff]
    %v1178 = vld [vmem:[%s599 + $0x2c] sm:$0xf]
    %v1179 = vld [vmem:[%s599 + $0x30] sm:$0xff]
    %v1180 = vld [vmem:[%s599 + $0x38] sm:$0xf]
    %v1181 = vld [vmem:[%s599 + $0x3c] sm:$0xff]
    %v1182 = vld [vmem:[%s599 + $0x44] sm:$0xf]
    %v1183 = vld [vmem:[%s599 + $0x48] sm:$0xff]
    %v1184 = vld [vmem:[%s599 + $0x50] sm:$0xf]
    %v1185 = vld [vmem:[%s599 + $0x54] sm:$0xff]
    %v1186 = vld [vmem:[%s599 + $0x5c] sm:$0xf]
    %v1187 = vld [vmem:[%s599 + $0x60] sm:$0xff]
    %v1188 = vld [vmem:[%s599 + $0x68] sm:$0xf]
    %v1189 = vld [vmem:[%s599 + $0x6c] sm:$0xff]
    %v1190 = vld [vmem:[%s599 + $0x74] sm:$0xf]
    %v1191 = vld [vmem:[%s599 + $0x78] sm:$0xff]
    %v1192 = vld [vmem:[%s599 + $0x80] sm:$0xf]
    %v1193 = vld [vmem:[%s599 + $0x84] sm:$0xff]
    %v1194 = vld [vmem:[%s599 + $0x8c] sm:$0xf]
    %v1195 = vld [vmem:[%s599 + $0x90] sm:$0xff]
    %v1196 = vld [vmem:[%s599 + $0x98] sm:$0xf]
    %v1197 = vld [vmem:[%s599 + $0x9c] sm:$0xff]
    %v1198 = vld [vmem:[%s599 + $0xa4] sm:$0xf]
    %v1199 = vld [vmem:[%s599 + $0xa8] sm:$0xff]
    %v1200 = vld [vmem:[%s599 + $0xb0] sm:$0xf]
    %v1201 = vld [vmem:[%s599 + $0xb4] sm:$0xff]
    %v1202 = vld [vmem:[%s599 + $0xbc] sm:$0xf]
    %v1203 = vld [vmem:[%s632] sm:$0x7]
    %v1205 = vlaneseq
    %v1206 = vshrl.u32 %v1205, 7
    %v1207 = vsub.s32 0, %v1206
    %v1208 = vrot.slane %v1203, %v1207
    %v1209 = vlaneseq
    %v1210 = vshrl.u32 %v1209, 7
    %v1211 = vsub.s32 1, %v1210
    %v1212 = vrot.slane %v1203, %v1211
    %v1213 = vlaneseq
    %v1214 = vshrl.u32 %v1213, 7
    %v1215 = vsub.s32 2, %v1214
    %v1216 = vrot.slane %v1203, %v1215
    %v1252 = vunpack.c.l.b16 %v1171
    %v1253 = vunpack.c.h.b16 %v1171
    %v1254 = vunpack.c.l.b16 %v1172
    %v1255 = vunpack.c.l.b16 %v1173
    %v1256 = vunpack.c.h.b16 %v1173
    %v1257 = vunpack.c.l.b16 %v1174
    %v1258 = vunpack.c.l.b16 %v1175
    %v1259 = vunpack.c.h.b16 %v1175
    %v1260 = vunpack.c.l.b16 %v1176
    %v1261 = vunpack.c.l.b16 %v1177
    %v1262 = vunpack.c.h.b16 %v1177
    %v1263 = vunpack.c.l.b16 %v1178
    %v1264 = vunpack.c.l.b16 %v1179
    %v1265 = vunpack.c.h.b16 %v1179
    %v1266 = vunpack.c.l.b16 %v1180
    %v1267 = vunpack.c.l.b16 %v1181
    %v1268 = vunpack.c.h.b16 %v1181
    %v1269 = vunpack.c.l.b16 %v1182
    %v1270 = vunpack.c.l.b16 %v1183
    %v1271 = vunpack.c.h.b16 %v1183
    %v1272 = vunpack.c.l.b16 %v1184
    %v1273 = vunpack.c.l.b16 %v1185
    %v1274 = vunpack.c.h.b16 %v1185
    %v1275 = vunpack.c.l.b16 %v1186
    %v1276 = vunpack.c.l.b16 %v1187
    %v1277 = vunpack.c.h.b16 %v1187
    %v1278 = vunpack.c.l.b16 %v1188
    %v1279 = vunpack.c.l.b16 %v1189
    %v1280 = vunpack.c.h.b16 %v1189
    %v1281 = vunpack.c.l.b16 %v1190
    %v1282 = vunpack.c.l.b16 %v1191
    %v1283 = vunpack.c.h.b16 %v1191
    %v1284 = vunpack.c.l.b16 %v1192
    %v1285 = vunpack.c.l.b16 %v1193
    %v1286 = vunpack.c.h.b16 %v1193
    %v1287 = vunpack.c.l.b16 %v1194
    %v1288 = vunpack.c.l.b16 %v1195
    %v1289 = vunpack.c.h.b16 %v1195
    %v1290 = vunpack.c.l.b16 %v1196
    %v1291 = vunpack.c.l.b16 %v1197
    %v1292 = vunpack.c.h.b16 %v1197
    %v1293 = vunpack.c.l.b16 %v1198
    %v1294 = vunpack.c.l.b16 %v1199
    %v1295 = vunpack.c.h.b16 %v1199
    %v1296 = vunpack.c.l.b16 %v1200
    %v1297 = vunpack.c.l.b16 %v1201
    %v1298 = vunpack.c.h.b16 %v1201
    %v1299 = vunpack.c.l.b16 %v1202
    %v1300 = vpack.c.b16 %v1255, %v1252
    %v1301 = vpack.c.b16 %v1256, %v1253
    %v1302 = vpack.c.b16 %v1257, %v1254
    %v1303 = vpack.c.b16 %v1261, %v1258
    %v1304 = vpack.c.b16 %v1262, %v1259
    %v1305 = vpack.c.b16 %v1263, %v1260
    %v1306 = vpack.c.b16 %v1267, %v1264
    %v1307 = vpack.c.b16 %v1268, %v1265
    %v1308 = vpack.c.b16 %v1269, %v1266
    %v1309 = vpack.c.b16 %v1273, %v1270
    %v1310 = vpack.c.b16 %v1274, %v1271
    %v1311 = vpack.c.b16 %v1275, %v1272
    %v1312 = vpack.c.b16 %v1279, %v1276
    %v1313 = vpack.c.b16 %v1280, %v1277
    %v1314 = vpack.c.b16 %v1281, %v1278
    %v1315 = vpack.c.b16 %v1285, %v1282
    %v1316 = vpack.c.b16 %v1286, %v1283
    %v1317 = vpack.c.b16 %v1287, %v1284
    %v1318 = vpack.c.b16 %v1291, %v1288
    %v1319 = vpack.c.b16 %v1292, %v1289
    %v1320 = vpack.c.b16 %v1293, %v1290
    %v1321 = vpack.c.b16 %v1297, %v1294
    %v1322 = vpack.c.b16 %v1298, %v1295
    %v1323 = vpack.c.b16 %v1299, %v1296
    %1348 = vmatprep.subr.bf16.mxu0 %v1301
    %1349 = vmatpush1.bf16.msra.mxu0 %v1300
    %1350 = vmatprep.subr.bf16.mxu0 %v1304
    %1351 = vmatpush1.bf16.msra.mxu0 %v1303
    %1352 = vmatprep.subr.bf16.mxu0 %v1307
    %1353 = vmatpush1.bf16.msra.mxu0 %v1306
    %1354 = vmatprep.subr.bf16.mxu0 %v1310
    %1355 = vmatpush1.bf16.msra.mxu0 %v1309
    %1356 = vmatprep.subr.bf16.mxu0 %v1313
    %1357 = vmatpush1.bf16.msra.mxu0 %v1312
    %1358 = vmatprep.subr.bf16.mxu0 %v1316
    %1359 = vmatpush1.bf16.msra.mxu0 %v1315
    %1360 = vmatprep.subr.bf16.mxu0 %v1319
    %1361 = vmatpush1.bf16.msra.mxu0 %v1318
    %1362 = vmatprep.subr.bf16.mxu0 %v1322
    %1363 = vmatpush1.bf16.msra.mxu0 %v1321
    %1364 = vmatprep.subr.bf16.mxu0 0
    %1365 = vmatpush1.bf16.msra.mxu0 0
    %1366 = vmatprep.subr.bf16.mxu0 0
    %1367 = vmatpush1.bf16.msra.mxu0 0
    %1368 = vmatprep.subr.bf16.mxu0 0
    %1369 = vmatpush1.bf16.msra.mxu0 0
    %1370 = vmatprep.subr.bf16.mxu0 0
    %1371 = vmatpush1.bf16.msra.mxu0 0
    %1372 = vmatprep.subr.bf16.mxu0 0
    %1373 = vmatpush1.bf16.msra.mxu0 0
    %1374 = vmatprep.subr.bf16.mxu0 0
    %1375 = vmatpush1.bf16.msra.mxu0 0
    %1376 = vmatprep.subr.bf16.mxu0 0
    %1377 = vmatpush1.bf16.msra.mxu0 0
    %1378 = vmatprep.subr.bf16.mxu0 0
    %1379 = vmatpush1.bf16.msra.mxu0 0
    %1380 = vmatprep.mubr.bf16.mxu0 0
    %1381 = vmatmul.mubr.bf16.gmra.mrb[0].mxu0 %v1170
    %v1382 = vpop.f32.mrb[0].mxu0
    %v1383 = vadd.f32 %v1208, %v1382
    %v1384 = vpop.f32.mrb[0].mxu0
    %v1385 = vadd.f32 %v1212, %v1384
    %v1386 = vpop.f32.mrb[0].mxu0
    %v1387 = vpop.f32.mrb[0].mxu0
    %1388 = vdwg.mxu0
    %1389 = vmatprep.subr.bf16.mxu0 0
    %1390 = vmatpush1.bf16.msra.mxu0 %v1302
    %1391 = vmatprep.subr.bf16.mxu0 0
    %1392 = vmatpush1.bf16.msra.mxu0 %v1305
    %1393 = vmatprep.subr.bf16.mxu0 0
    %1394 = vmatpush1.bf16.msra.mxu0 %v1308
    %1395 = vmatprep.subr.bf16.mxu0 0
    %1396 = vmatpush1.bf16.msra.mxu0 %v1311
    %1397 = vmatprep.subr.bf16.mxu0 0
    %1398 = vmatpush1.bf16.msra.mxu0 %v1314
    %1399 = vmatprep.subr.bf16.mxu0 0
    %1400 = vmatpush1.bf16.msra.mxu0 %v1317
    %1401 = vmatprep.subr.bf16.mxu0 0
    %1402 = vmatpush1.bf16.msra.mxu0 %v1320
    %1403 = vmatprep.subr.bf16.mxu0 0
    %1404 = vmatpush1.bf16.msra.mxu0 %v1323
    %1405 = vmatprep.subr.bf16.mxu0 0
    %1406 = vmatpush1.bf16.msra.mxu0 0
    %1407 = vmatprep.subr.bf16.mxu0 0
    %1408 = vmatpush1.bf16.msra.mxu0 0
    %1409 = vmatprep.subr.bf16.mxu0 0
    %1410 = vmatpush1.bf16.msra.mxu0 0
    %1411 = vmatprep.subr.bf16.mxu0 0
    %1412 = vmatpush1.bf16.msra.mxu0 0
    %1413 = vmatprep.subr.bf16.mxu0 0
    %1414 = vmatpush1.bf16.msra.mxu0 0
    %1415 = vmatprep.subr.bf16.mxu0 0
    %1416 = vmatpush1.bf16.msra.mxu0 0
    %1417 = vmatprep.subr.bf16.mxu0 0
    %1418 = vmatpush1.bf16.msra.mxu0 0
    %1419 = vmatprep.subr.bf16.mxu0 0
    %1420 = vmatpush1.bf16.msra.mxu0 0
    %1421 = vmatprep.mubr.bf16.mxu0 0
    %1422 = vmatmul.mubr.bf16.gmra.mrb[0].mxu0 %v1170
    %v1423 = vpop.f32.mrb[0].mxu0
    %v1424 = vadd.f32 %v1216, %v1423
    %v1425 = vpop.f32.mrb[0].mxu0
    %v1426 = vpop.f32.mrb[0].mxu0
    %v1427 = vpop.f32.mrb[0].mxu0
    %1428 = vdwg.mxu0
    %v1429 = vadd.f32 %v1167, %v1383
    %v1430 = vxor.u32 %v1429, 2147483648
    %v1431 = vmul.f32 %v1430, 1.442695
    %v1432 = vpow.pop %v1431
    %v1433 = vadd.f32 %v1432, 1.0
    %v1434 = vrcp.pop %v1433
    %v1435 = vmul.f32 1.0, %v1434
    %v1436 = vadd.f32 %v1168, %v1385
    %v1437 = vxor.u32 %v1436, 2147483648
    %v1438 = vmul.f32 %v1437, 1.442695
    %v1439 = vpow.pop %v1438
    %v1440 = vadd.f32 %v1439, 1.0
    %v1441 = vrcp.pop %v1440
    %v1442 = vmul.f32 1.0, %v1441
    %v1443 = vmul.f32 %v1435, %v1424
    %v1444 = vadd.f32 %v1169, %v1443
    %v1445 = vtanh.pop %v1444
    %v1446 = vsub.f32 1.0, %v1442
    %v1447 = vmul.f32 %v1446, %v1445
    %v1448 = vmul.f32 %v1442, %v879
    %v1449 = vadd.f32 %v1447, %v1448
    %1450 = vst [vmem:[%s881] sm:$0xff] %v1166
    %1451 = vst [vmem:[%s5 + $0x8] sm:$0xff] %v1449
    // Predicated region
    $region30: #{textrnn_forward.3} parent=1 // pred_check
      _
    $region31: #{textrnn_forward.3} parent=1 // pred_check_branch
      %1453 = sbr.rel (0) target = $region33
    $region32: #{textrnn_forward.3} parent=1 // pred_region
      _
    $region33: #{textrnn_forward.3} parent=1 // pred_fallthru
      _
    // Predicated region
    $region34: #{textrnn_forward.3} parent=1 // pred_check
      _
    $region35: #{textrnn_forward.3} parent=1 // pred_check_branch
      %1455 = sbr.rel (0) target = $region37
    $region36: #{textrnn_forward.3} parent=1 // pred_region
      _
    $region37: #{textrnn_forward.3} parent=1 // pred_fallthru
      _
    %1456 = vsyncpa [#allocation4], 1
    %1457 = vsyncpa [#allocation6], 1

// kernel: textrnn_forward.4
$region0: #{textrnn_forward.4}
  #allocation0 [shape = 'u32[]', space=smem, size = 0x4, offset = 0x4, fixed_abs, tag = 'smem constant byte address 0x4 - core index']
  #allocation1 [shape = 'u32[144,128]{1,0:T(1,128)}', space=vmem, size = 0x12000, scoped, tag = 'internal scratch']
  #allocation2 [shape = 'f32[2,2,8,384]{3,2,1,0:T(8,128)}', space=vmem, size = 0xc000, scoped, tag = 'scratch operand']
  %s0 = inlined_call_operand.vmem [shape: f32[2,8,256], index: 0, kind: input, shape index: {}]
  %s1 = inlined_call_operand.vmem [shape: bf16[2,256,384], index: 1, kind: input, shape index: {}]
  %s2 = inlined_call_operand.hbm [shape: bf16[2,128,384], index: 2, kind: input, shape index: {}]
  %s3 = inlined_call_operand.hbm [shape: f32[2,1,384], index: 3, kind: input, shape index: {}]
  %s4 = inlined_call_operand.hbm [shape: f32[2,1,384], index: 4, kind: input, shape index: {}]
  %s5 = inlined_call_operand.vmem [shape: f32[2,8,256], index: 5, kind: output, shape index: {}]
  %s6 = sld [smem:[#allocation0]]
  $region42: #{textrnn_forward.4} parent=0
    _
  %s8 = ssub.s32 1, %s6
  %s9 = scalar_select 0, %s8, %s6
  $region1: #{textrnn_forward.4} parent=0
    #allocation3 [shape = 'u8[196608]{0}', space=vmem, size = 0x30000, scoped, tag = 'input window, operand 2, single buffered']
    #allocation4 [shape = 's32[1]{0}', space=sflag, size = 0x4, scoped, tag = 'scoped memory for textrnn_forward.4']
    #allocation5 [shape = 'u8[3072]{0}', space=vmem, size = 0xc00, scoped, tag = 'input window, operand 3, single buffered']
    #allocation6 [shape = 's32[1]{0}', space=sflag, size = 0x4, scoped, tag = 'scoped memory for textrnn_forward.4']
    #allocation7 [shape = 'u8[3072]{0}', space=vmem, size = 0xc00, scoped, tag = 'input window, operand 4, single buffered']
    %10 = vsyncpa [#allocation4], 0
    %11 = vsyncpa [#allocation6], 0
    // Predicated region
    $region2: #{textrnn_forward.4} parent=1 // pred_check
      _
    $region3: #{textrnn_forward.4} parent=1 // pred_check_branch
      %13 = sbr.rel (0) target = $region5
    $region4: #{textrnn_forward.4} parent=1 // pred_region
      _
    $region5: #{textrnn_forward.4} parent=1 // pred_fallthru
      _
    // Predicated region
    $region6: #{textrnn_forward.4} parent=1 // pred_check
      _
    $region7: #{textrnn_forward.4} parent=1 // pred_check_branch
      %15 = sbr.rel (0) target = $region9
    $region8: #{textrnn_forward.4} parent=1 // pred_region
      _
    $region9: #{textrnn_forward.4} parent=1 // pred_fallthru
      _
    // Predicated region
    $region10: #{textrnn_forward.4} parent=1 // pred_check
      _
    $region11: #{textrnn_forward.4} parent=1 // pred_check_branch
      %17 = sbr.rel (0) target = $region13
    $region12: #{textrnn_forward.4} parent=1 // pred_region
      %s19 = ssub.s32 6144, 6144
      %20 = vsyncadd [#allocation4], %s19
      %s21 = sshll.u32 [#allocation3], 4
      %s22 = int_to_ptr.vmem [resolvable:$true] %s21
      %27 = dma.hbm_to_vmem [thread:$0]  %s2, 6144, %s22, [#allocation4], 192, 192, 12
    $region13: #{textrnn_forward.4} parent=1 // pred_fallthru
      _
    // Predicated region
    $region14: #{textrnn_forward.4} parent=1 // pred_check
      _
    $region15: #{textrnn_forward.4} parent=1 // pred_check_branch
      %29 = sbr.rel (0) target = $region17
    $region16: #{textrnn_forward.4} parent=1 // pred_region
      %s31 = ssub.s32 96, 96
      %32 = vsyncadd [#allocation6], %s31
      %s33 = sshll.u32 [#allocation5], 4
      %s34 = int_to_ptr.vmem [resolvable:$true] %s33
      %39 = dma.hbm_to_vmem [thread:$0]  %s3, 96, %s34, [#allocation6], 48, 48, 3
    $region17: #{textrnn_forward.4} parent=1 // pred_fallthru
      _
    // Predicated region
    $region18: #{textrnn_forward.4} parent=1 // pred_check
      _
    $region19: #{textrnn_forward.4} parent=1 // pred_check_branch
      %41 = sbr.rel (0) target = $region21
    $region20: #{textrnn_forward.4} parent=1 // pred_region
      %s43 = ssub.s32 96, 96
      %44 = vsyncadd [#allocation6], %s43
      %s45 = sshll.u32 [#allocation7], 4
      %s46 = int_to_ptr.vmem [resolvable:$true] %s45
      %51 = dma.hbm_to_vmem [thread:$0]  %s4, 96, %s46, [#allocation6], 48, 48, 3
    $region21: #{textrnn_forward.4} parent=1 // pred_fallthru
      _
    // Predicated region
    $region22: #{textrnn_forward.4} parent=1 // pred_check
      _
    $region23: #{textrnn_forward.4} parent=1 // pred_check_branch
      %53 = sbr.rel (0) target = $region25
    $region24: #{textrnn_forward.4} parent=1 // pred_region
      %54 = dma.done [#allocation4], 6144
    $region25: #{textrnn_forward.4} parent=1 // pred_fallthru
      _
    // Predicated region
    $region26: #{textrnn_forward.4} parent=1 // pred_check
      _
    $region27: #{textrnn_forward.4} parent=1 // pred_check_branch
      %56 = sbr.rel (0) target = $region29
    $region28: #{textrnn_forward.4} parent=1 // pred_region
      %57 = dma.done [#allocation6], 96
    $region29: #{textrnn_forward.4} parent=1 // pred_fallthru
      _
    // Predicated region
    $region30: #{textrnn_forward.4} parent=1 // pred_check
      _
    $region31: #{textrnn_forward.4} parent=1 // pred_check_branch
      %59 = sbr.rel (0) target = $region33
    $region32: #{textrnn_forward.4} parent=1 // pred_region
      %60 = dma.done [#allocation6], 96
    $region33: #{textrnn_forward.4} parent=1 // pred_fallthru
      _
    %v62 = vld [vmem:[%s0] sm:$0xff]
    %v63 = vld [vmem:[%s0 + $0x8] sm:$0xff]
    %v64 = vld [vmem:[%s0 + $0x10] sm:$0xff]
    %v65 = vld [vmem:[%s0 + $0x18] sm:$0xff]
    %v66 = vpack.c.bf16 %v64, %v62
    %v67 = vpack.c.bf16 %v65, %v63
    %v68 = vld [vmem:[%s1] sm:$0xff]
    %v69 = vld [vmem:[%s1 + $0x8] sm:$0xf]
    %v70 = vld [vmem:[%s1 + $0xc] sm:$0xff]
    %v71 = vld [vmem:[%s1 + $0x14] sm:$0xf]
    %v72 = vld [vmem:[%s1 + $0x18] sm:$0xff]
    %v73 = vld [vmem:[%s1 + $0x20] sm:$0xf]
    %v74 = vld [vmem:[%s1 + $0x24] sm:$0xff]
    %v75 = vld [vmem:[%s1 + $0x2c] sm:$0xf]
    %v76 = vld [vmem:[%s1 + $0x30] sm:$0xff]
    %v77 = vld [vmem:[%s1 + $0x38] sm:$0xf]
    %v78 = vld [vmem:[%s1 + $0x3c] sm:$0xff]
    %v79 = vld [vmem:[%s1 + $0x44] sm:$0xf]
    %v80 = vld [vmem:[%s1 + $0x48] sm:$0xff]
    %v81 = vld [vmem:[%s1 + $0x50] sm:$0xf]
    %v82 = vld [vmem:[%s1 + $0x54] sm:$0xff]
    %v83 = vld [vmem:[%s1 + $0x5c] sm:$0xf]
    %v84 = vld [vmem:[%s1 + $0x60] sm:$0xff]
    %v85 = vld [vmem:[%s1 + $0x68] sm:$0xf]
    %v86 = vld [vmem:[%s1 + $0x6c] sm:$0xff]
    %v87 = vld [vmem:[%s1 + $0x74] sm:$0xf]
    %v88 = vld [vmem:[%s1 + $0x78] sm:$0xff]
    %v89 = vld [vmem:[%s1 + $0x80] sm:$0xf]
    %v90 = vld [vmem:[%s1 + $0x84] sm:$0xff]
    %v91 = vld [vmem:[%s1 + $0x8c] sm:$0xf]
    %v92 = vld [vmem:[%s1 + $0x90] sm:$0xff]
    %v93 = vld [vmem:[%s1 + $0x98] sm:$0xf]
    %v94 = vld [vmem:[%s1 + $0x9c] sm:$0xff]
    %v95 = vld [vmem:[%s1 + $0xa4] sm:$0xf]
    %v96 = vld [vmem:[%s1 + $0xa8] sm:$0xff]
    %v97 = vld [vmem:[%s1 + $0xb0] sm:$0xf]
    %v98 = vld [vmem:[%s1 + $0xb4] sm:$0xff]
    %v99 = vld [vmem:[%s1 + $0xbc] sm:$0xf]
    %v100 = vld [vmem:[%s1 + $0xc0] sm:$0xff]
    %v101 = vld [vmem:[%s1 + $0xc8] sm:$0xf]
    %v102 = vld [vmem:[%s1 + $0xcc] sm:$0xff]
    %v103 = vld [vmem:[%s1 + $0xd4] sm:$0xf]
    %v104 = vld [vmem:[%s1 + $0xd8] sm:$0xff]
    %v105 = vld [vmem:[%s1 + $0xe0] sm:$0xf]
    %v106 = vld [vmem:[%s1 + $0xe4] sm:$0xff]
    %v107 = vld [vmem:[%s1 + $0xec] sm:$0xf]
    %v108 = vld [vmem:[%s1 + $0xf0] sm:$0xff]
    %v109 = vld [vmem:[%s1 + $0xf8] sm:$0xf]
    %v110 = vld [vmem:[%s1 + $0xfc] sm:$0xff]
    %v111 = vld [vmem:[%s1 + $0x104] sm:$0xf]
    %v112 = vld [vmem:[%s1 + $0x108] sm:$0xff]
    %v113 = vld [vmem:[%s1 + $0x110] sm:$0xf]
    %v114 = vld [vmem:[%s1 + $0x114] sm:$0xff]
    %v115 = vld [vmem:[%s1 + $0x11c] sm:$0xf]
    %v116 = vld [vmem:[%s1 + $0x120] sm:$0xff]
    %v117 = vld [vmem:[%s1 + $0x128] sm:$0xf]
    %v118 = vld [vmem:[%s1 + $0x12c] sm:$0xff]
    %v119 = vld [vmem:[%s1 + $0x134] sm:$0xf]
    %v120 = vld [vmem:[%s1 + $0x138] sm:$0xff]
    %v121 = vld [vmem:[%s1 + $0x140] sm:$0xf]
    %v122 = vld [vmem:[%s1 + $0x144] sm:$0xff]
    %v123 = vld [vmem:[%s1 + $0x14c] sm:$0xf]
    %v124 = vld [vmem:[%s1 + $0x150] sm:$0xff]
    %v125 = vld [vmem:[%s1 + $0x158] sm:$0xf]
    %v126 = vld [vmem:[%s1 + $0x15c] sm:$0xff]
    %v127 = vld [vmem:[%s1 + $0x164] sm:$0xf]
    %v128 = vld [vmem:[%s1 + $0x168] sm:$0xff]
    %v129 = vld [vmem:[%s1 + $0x170] sm:$0xf]
    %v130 = vld [vmem:[%s1 + $0x174] sm:$0xff]
    %v131 = vld [vmem:[%s1 + $0x17c] sm:$0xf]
    %v132 = vld [vmem:[#allocation5] sm:$0x7]
    %v134 = vlaneseq
    %v135 = vshrl.u32 %v134, 7
    %v136 = vsub.s32 0, %v135
    %v137 = vrot.slane %v132, %v136
    %v138 = vlaneseq
    %v139 = vshrl.u32 %v138, 7
    %v140 = vsub.s32 1, %v139
    %v141 = vrot.slane %v132, %v140
    %v142 = vlaneseq
    %v143 = vshrl.u32 %v142, 7
    %v144 = vsub.s32 2, %v143
    %v145 = vrot.slane %v132, %v144
    %v213 = vunpack.c.l.b16 %v68
    %v214 = vunpack.c.h.b16 %v68
    %v215 = vunpack.c.l.b16 %v69
    %v216 = vunpack.c.l.b16 %v70
    %v217 = vunpack.c.h.b16 %v70
    %v218 = vunpack.c.l.b16 %v71
    %v219 = vunpack.c.l.b16 %v72
    %v220 = vunpack.c.h.b16 %v72
    %v221 = vunpack.c.l.b16 %v73
    %v222 = vunpack.c.l.b16 %v74
    %v223 = vunpack.c.h.b16 %v74
    %v224 = vunpack.c.l.b16 %v75
    %v225 = vunpack.c.l.b16 %v76
    %v226 = vunpack.c.h.b16 %v76
    %v227 = vunpack.c.l.b16 %v77
    %v228 = vunpack.c.l.b16 %v78
    %v229 = vunpack.c.h.b16 %v78
    %v230 = vunpack.c.l.b16 %v79
    %v231 = vunpack.c.l.b16 %v80
    %v232 = vunpack.c.h.b16 %v80
    %v233 = vunpack.c.l.b16 %v81
    %v234 = vunpack.c.l.b16 %v82
    %v235 = vunpack.c.h.b16 %v82
    %v236 = vunpack.c.l.b16 %v83
    %v237 = vunpack.c.l.b16 %v84
    %v238 = vunpack.c.h.b16 %v84
    %v239 = vunpack.c.l.b16 %v85
    %v240 = vunpack.c.l.b16 %v86
    %v241 = vunpack.c.h.b16 %v86
    %v242 = vunpack.c.l.b16 %v87
    %v243 = vunpack.c.l.b16 %v88
    %v244 = vunpack.c.h.b16 %v88
    %v245 = vunpack.c.l.b16 %v89
    %v246 = vunpack.c.l.b16 %v90
    %v247 = vunpack.c.h.b16 %v90
    %v248 = vunpack.c.l.b16 %v91
    %v249 = vunpack.c.l.b16 %v92
    %v250 = vunpack.c.h.b16 %v92
    %v251 = vunpack.c.l.b16 %v93
    %v252 = vunpack.c.l.b16 %v94
    %v253 = vunpack.c.h.b16 %v94
    %v254 = vunpack.c.l.b16 %v95
    %v255 = vunpack.c.l.b16 %v96
    %v256 = vunpack.c.h.b16 %v96
    %v257 = vunpack.c.l.b16 %v97
    %v258 = vunpack.c.l.b16 %v98
    %v259 = vunpack.c.h.b16 %v98
    %v260 = vunpack.c.l.b16 %v99
    %v261 = vunpack.c.l.b16 %v100
    %v262 = vunpack.c.h.b16 %v100
    %v263 = vunpack.c.l.b16 %v101
    %v264 = vunpack.c.l.b16 %v102
    %v265 = vunpack.c.h.b16 %v102
    %v266 = vunpack.c.l.b16 %v103
    %v267 = vunpack.c.l.b16 %v104
    %v268 = vunpack.c.h.b16 %v104
    %v269 = vunpack.c.l.b16 %v105
    %v270 = vunpack.c.l.b16 %v106
    %v271 = vunpack.c.h.b16 %v106
    %v272 = vunpack.c.l.b16 %v107
    %v273 = vunpack.c.l.b16 %v108
    %v274 = vunpack.c.h.b16 %v108
    %v275 = vunpack.c.l.b16 %v109
    %v276 = vunpack.c.l.b16 %v110
    %v277 = vunpack.c.h.b16 %v110
    %v278 = vunpack.c.l.b16 %v111
    %v279 = vunpack.c.l.b16 %v112
    %v280 = vunpack.c.h.b16 %v112
    %v281 = vunpack.c.l.b16 %v113
    %v282 = vunpack.c.l.b16 %v114
    %v283 = vunpack.c.h.b16 %v114
    %v284 = vunpack.c.l.b16 %v115
    %v285 = vunpack.c.l.b16 %v116
    %v286 = vunpack.c.h.b16 %v116
    %v287 = vunpack.c.l.b16 %v117
    %v288 = vunpack.c.l.b16 %v118
    %v289 = vunpack.c.h.b16 %v118
    %v290 = vunpack.c.l.b16 %v119
    %v291 = vunpack.c.l.b16 %v120
    %v292 = vunpack.c.h.b16 %v120
    %v293 = vunpack.c.l.b16 %v121
    %v294 = vunpack.c.l.b16 %v122
    %v295 = vunpack.c.h.b16 %v122
    %v296 = vunpack.c.l.b16 %v123
    %v297 = vunpack.c.l.b16 %v124
    %v298 = vunpack.c.h.b16 %v124
    %v299 = vunpack.c.l.b16 %v125
    %v300 = vunpack.c.l.b16 %v126
    %v301 = vunpack.c.h.b16 %v126
    %v302 = vunpack.c.l.b16 %v127
    %v303 = vunpack.c.l.b16 %v128
    %v304 = vunpack.c.h.b16 %v128
    %v305 = vunpack.c.l.b16 %v129
    %v306 = vunpack.c.l.b16 %v130
    %v307 = vunpack.c.h.b16 %v130
    %v308 = vunpack.c.l.b16 %v131
    %v309 = vpack.c.b16 %v216, %v213
    %v310 = vpack.c.b16 %v217, %v214
    %v311 = vpack.c.b16 %v218, %v215
    %v312 = vpack.c.b16 %v222, %v219
    %v313 = vpack.c.b16 %v223, %v220
    %v314 = vpack.c.b16 %v224, %v221
    %v315 = vpack.c.b16 %v228, %v225
    %v316 = vpack.c.b16 %v229, %v226
    %v317 = vpack.c.b16 %v230, %v227
    %v318 = vpack.c.b16 %v234, %v231
    %v319 = vpack.c.b16 %v235, %v232
    %v320 = vpack.c.b16 %v236, %v233
    %v321 = vpack.c.b16 %v240, %v237
    %v322 = vpack.c.b16 %v241, %v238
    %v323 = vpack.c.b16 %v242, %v239
    %v324 = vpack.c.b16 %v246, %v243
    %v325 = vpack.c.b16 %v247, %v244
    %v326 = vpack.c.b16 %v248, %v245
    %v327 = vpack.c.b16 %v252, %v249
    %v328 = vpack.c.b16 %v253, %v250
    %v329 = vpack.c.b16 %v254, %v251
    %v330 = vpack.c.b16 %v258, %v255
    %v331 = vpack.c.b16 %v259, %v256
    %v332 = vpack.c.b16 %v260, %v257
    %v333 = vpack.c.b16 %v264, %v261
    %v334 = vpack.c.b16 %v265, %v262
    %v335 = vpack.c.b16 %v266, %v263
    %v336 = vpack.c.b16 %v270, %v267
    %v337 = vpack.c.b16 %v271, %v268
    %v338 = vpack.c.b16 %v272, %v269
    %v339 = vpack.c.b16 %v276, %v273
    %v340 = vpack.c.b16 %v277, %v274
    %v341 = vpack.c.b16 %v278, %v275
    %v342 = vpack.c.b16 %v282, %v279
    %v343 = vpack.c.b16 %v283, %v280
    %v344 = vpack.c.b16 %v284, %v281
    %v345 = vpack.c.b16 %v288, %v285
    %v346 = vpack.c.b16 %v289, %v286
    %v347 = vpack.c.b16 %v290, %v287
    %v348 = vpack.c.b16 %v294, %v291
    %v349 = vpack.c.b16 %v295, %v292
    %v350 = vpack.c.b16 %v296, %v293
    %v351 = vpack.c.b16 %v300, %v297
    %v352 = vpack.c.b16 %v301, %v298
    %v353 = vpack.c.b16 %v302, %v299
    %v354 = vpack.c.b16 %v306, %v303
    %v355 = vpack.c.b16 %v307, %v304
    %v356 = vpack.c.b16 %v308, %v305
    %405 = vmatprep.subr.bf16.mxu0 %v310
    %406 = vmatpush1.bf16.msra.mxu0 %v309
    %407 = vmatprep.subr.bf16.mxu0 %v313
    %408 = vmatpush1.bf16.msra.mxu0 %v312
    %409 = vmatprep.subr.bf16.mxu0 %v316
    %410 = vmatpush1.bf16.msra.mxu0 %v315
    %411 = vmatprep.subr.bf16.mxu0 %v319
    %412 = vmatpush1.bf16.msra.mxu0 %v318
    %413 = vmatprep.subr.bf16.mxu0 %v322
    %414 = vmatpush1.bf16.msra.mxu0 %v321
    %415 = vmatprep.subr.bf16.mxu0 %v325
    %416 = vmatpush1.bf16.msra.mxu0 %v324
    %417 = vmatprep.subr.bf16.mxu0 %v328
    %418 = vmatpush1.bf16.msra.mxu0 %v327
    %419 = vmatprep.subr.bf16.mxu0 %v331
    %420 = vmatpush1.bf16.msra.mxu0 %v330
    %421 = vmatprep.subr.bf16.mxu0 %v334
    %422 = vmatpush1.bf16.msra.mxu0 %v333
    %423 = vmatprep.subr.bf16.mxu0 %v337
    %424 = vmatpush1.bf16.msra.mxu0 %v336
    %425 = vmatprep.subr.bf16.mxu0 %v340
    %426 = vmatpush1.bf16.msra.mxu0 %v339
    %427 = vmatprep.subr.bf16.mxu0 %v343
    %428 = vmatpush1.bf16.msra.mxu0 %v342
    %429 = vmatprep.subr.bf16.mxu0 %v346
    %430 = vmatpush1.bf16.msra.mxu0 %v345
    %431 = vmatprep.subr.bf16.mxu0 %v349
    %432 = vmatpush1.bf16.msra.mxu0 %v348
    %433 = vmatprep.subr.bf16.mxu0 %v352
    %434 = vmatpush1.bf16.msra.mxu0 %v351
    %435 = vmatprep.subr.bf16.mxu0 %v355
    %436 = vmatpush1.bf16.msra.mxu0 %v354
    %437 = vmatprep.mubr.bf16.mxu0 %v67
    %438 = vmatmul.mubr.bf16.gmra.mrb[0].mxu0 %v66
    %v439 = vpop.f32.mrb[0].mxu0
    %v440 = vadd.f32 %v137, %v439
    %v441 = vpop.f32.mrb[0].mxu0
    %v442 = vadd.f32 %v141, %v441
    %v443 = vpop.f32.mrb[0].mxu0
    %v444 = vadd.f32 %v137, %v443
    %v445 = vpop.f32.mrb[0].mxu0
    %v446 = vadd.f32 %v141, %v445
    %447 = vdwg.mxu0
    %448 = vmatprep.subr.bf16.mxu0 0
    %449 = vmatpush1.bf16.msra.mxu0 %v311
    %450 = vmatprep.subr.bf16.mxu0 0
    %451 = vmatpush1.bf16.msra.mxu0 %v314
    %452 = vmatprep.subr.bf16.mxu0 0
    %453 = vmatpush1.bf16.msra.mxu0 %v317
    %454 = vmatprep.subr.bf16.mxu0 0
    %455 = vmatpush1.bf16.msra.mxu0 %v320
    %456 = vmatprep.subr.bf16.mxu0 0
    %457 = vmatpush1.bf16.msra.mxu0 %v323
    %458 = vmatprep.subr.bf16.mxu0 0
    %459 = vmatpush1.bf16.msra.mxu0 %v326
    %460 = vmatprep.subr.bf16.mxu0 0
    %461 = vmatpush1.bf16.msra.mxu0 %v329
    %462 = vmatprep.subr.bf16.mxu0 0
    %463 = vmatpush1.bf16.msra.mxu0 %v332
    %464 = vmatprep.subr.bf16.mxu0 0
    %465 = vmatpush1.bf16.msra.mxu0 %v335
    %466 = vmatprep.subr.bf16.mxu0 0
    %467 = vmatpush1.bf16.msra.mxu0 %v338
    %468 = vmatprep.subr.bf16.mxu0 0
    %469 = vmatpush1.bf16.msra.mxu0 %v341
    %470 = vmatprep.subr.bf16.mxu0 0
    %471 = vmatpush1.bf16.msra.mxu0 %v344
    %472 = vmatprep.subr.bf16.mxu0 0
    %473 = vmatpush1.bf16.msra.mxu0 %v347
    %474 = vmatprep.subr.bf16.mxu0 0
    %475 = vmatpush1.bf16.msra.mxu0 %v350
    %476 = vmatprep.subr.bf16.mxu0 0
    %477 = vmatpush1.bf16.msra.mxu0 %v353
    %478 = vmatprep.subr.bf16.mxu0 0
    %479 = vmatpush1.bf16.msra.mxu0 %v356
    %480 = vmatprep.mubr.bf16.mxu0 %v67
    %481 = vmatmul.mubr.bf16.gmra.mrb[0].mxu0 %v66
    %v482 = vpop.f32.mrb[0].mxu0
    %v483 = vadd.f32 %v145, %v482
    %v484 = vpop.f32.mrb[0].mxu0
    %v485 = vpop.f32.mrb[0].mxu0
    %v486 = vadd.f32 %v145, %v485
    %v487 = vpop.f32.mrb[0].mxu0
    %488 = vdwg.mxu0
    %489 = vst [vmem:[#allocation2] sm:$0xff] %v440
    %490 = vst [vmem:[#allocation2 + $0x8] sm:$0xff] %v442
    %491 = vst [vmem:[#allocation2 + $0x10] sm:$0xff] %v483
    %492 = vst [vmem:[#allocation2 + $0x18] sm:$0xff] %v444
    %493 = vst [vmem:[#allocation2 + $0x20] sm:$0xff] %v446
    %494 = vst [vmem:[#allocation2 + $0x28] sm:$0xff] %v486
    %s495 = scalar_lea.vmem %s1, 384
    %v496 = vld [vmem:[%s495] sm:$0xff]
    %v497 = vld [vmem:[%s495 + $0x8] sm:$0xf]
    %v498 = vld [vmem:[%s495 + $0xc] sm:$0xff]
    %v499 = vld [vmem:[%s495 + $0x14] sm:$0xf]
    %v500 = vld [vmem:[%s495 + $0x18] sm:$0xff]
    %v501 = vld [vmem:[%s495 + $0x20] sm:$0xf]
    %v502 = vld [vmem:[%s495 + $0x24] sm:$0xff]
    %v503 = vld [vmem:[%s495 + $0x2c] sm:$0xf]
    %v504 = vld [vmem:[%s495 + $0x30] sm:$0xff]
    %v505 = vld [vmem:[%s495 + $0x38] sm:$0xf]
    %v506 = vld [vmem:[%s495 + $0x3c] sm:$0xff]
    %v507 = vld [vmem:[%s495 + $0x44] sm:$0xf]
    %v508 = vld [vmem:[%s495 + $0x48] sm:$0xff]
    %v509 = vld [vmem:[%s495 + $0x50] sm:$0xf]
    %v510 = vld [vmem:[%s495 + $0x54] sm:$0xff]
    %v511 = vld [vmem:[%s495 + $0x5c] sm:$0xf]
    %v512 = vld [vmem:[%s495 + $0x60] sm:$0xff]
    %v513 = vld [vmem:[%s495 + $0x68] sm:$0xf]
    %v514 = vld [vmem:[%s495 + $0x6c] sm:$0xff]
    %v515 = vld [vmem:[%s495 + $0x74] sm:$0xf]
    %v516 = vld [vmem:[%s495 + $0x78] sm:$0xff]
    %v517 = vld [vmem:[%s495 + $0x80] sm:$0xf]
    %v518 = vld [vmem:[%s495 + $0x84] sm:$0xff]
    %v519 = vld [vmem:[%s495 + $0x8c] sm:$0xf]
    %v520 = vld [vmem:[%s495 + $0x90] sm:$0xff]
    %v521 = vld [vmem:[%s495 + $0x98] sm:$0xf]
    %v522 = vld [vmem:[%s495 + $0x9c] sm:$0xff]
    %v523 = vld [vmem:[%s495 + $0xa4] sm:$0xf]
    %v524 = vld [vmem:[%s495 + $0xa8] sm:$0xff]
    %v525 = vld [vmem:[%s495 + $0xb0] sm:$0xf]
    %v526 = vld [vmem:[%s495 + $0xb4] sm:$0xff]
    %v527 = vld [vmem:[%s495 + $0xbc] sm:$0xf]
    %v528 = vld [vmem:[%s495 + $0xc0] sm:$0xff]
    %v529 = vld [vmem:[%s495 + $0xc8] sm:$0xf]
    %v530 = vld [vmem:[%s495 + $0xcc] sm:$0xff]
    %v531 = vld [vmem:[%s495 + $0xd4] sm:$0xf]
    %v532 = vld [vmem:[%s495 + $0xd8] sm:$0xff]
    %v533 = vld [vmem:[%s495 + $0xe0] sm:$0xf]
    %v534 = vld [vmem:[%s495 + $0xe4] sm:$0xff]
    %v535 = vld [vmem:[%s495 + $0xec] sm:$0xf]
    %v536 = vld [vmem:[%s495 + $0xf0] sm:$0xff]
    %v537 = vld [vmem:[%s495 + $0xf8] sm:$0xf]
    %v538 = vld [vmem:[%s495 + $0xfc] sm:$0xff]
    %v539 = vld [vmem:[%s495 + $0x104] sm:$0xf]
    %v540 = vld [vmem:[%s495 + $0x108] sm:$0xff]
    %v541 = vld [vmem:[%s495 + $0x110] sm:$0xf]
    %v542 = vld [vmem:[%s495 + $0x114] sm:$0xff]
    %v543 = vld [vmem:[%s495 + $0x11c] sm:$0xf]
    %v544 = vld [vmem:[%s495 + $0x120] sm:$0xff]
    %v545 = vld [vmem:[%s495 + $0x128] sm:$0xf]
    %v546 = vld [vmem:[%s495 + $0x12c] sm:$0xff]
    %v547 = vld [vmem:[%s495 + $0x134] sm:$0xf]
    %v548 = vld [vmem:[%s495 + $0x138] sm:$0xff]
    %v549 = vld [vmem:[%s495 + $0x140] sm:$0xf]
    %v550 = vld [vmem:[%s495 + $0x144] sm:$0xff]
    %v551 = vld [vmem:[%s495 + $0x14c] sm:$0xf]
    %v552 = vld [vmem:[%s495 + $0x150] sm:$0xff]
    %v553 = vld [vmem:[%s495 + $0x158] sm:$0xf]
    %v554 = vld [vmem:[%s495 + $0x15c] sm:$0xff]
    %v555 = vld [vmem:[%s495 + $0x164] sm:$0xf]
    %v556 = vld [vmem:[%s495 + $0x168] sm:$0xff]
    %v557 = vld [vmem:[%s495 + $0x170] sm:$0xf]
    %v558 = vld [vmem:[%s495 + $0x174] sm:$0xff]
    %v559 = vld [vmem:[%s495 + $0x17c] sm:$0xf]
    %s560 = scalar_lea.vmem [#allocation5], 3
    %v561 = vld [vmem:[%s560] sm:$0x7]
    %v563 = vlaneseq
    %v564 = vshrl.u32 %v563, 7
    %v565 = vsub.s32 0, %v564
    %v566 = vrot.slane %v561, %v565
    %v567 = vlaneseq
    %v568 = vshrl.u32 %v567, 7
    %v569 = vsub.s32 1, %v568
    %v570 = vrot.slane %v561, %v569
    %v571 = vlaneseq
    %v572 = vshrl.u32 %v571, 7
    %v573 = vsub.s32 2, %v572
    %v574 = vrot.slane %v561, %v573
    %v642 = vunpack.c.l.b16 %v496
    %v643 = vunpack.c.h.b16 %v496
    %v644 = vunpack.c.l.b16 %v497
    %v645 = vunpack.c.l.b16 %v498
    %v646 = vunpack.c.h.b16 %v498
    %v647 = vunpack.c.l.b16 %v499
    %v648 = vunpack.c.l.b16 %v500
    %v649 = vunpack.c.h.b16 %v500
    %v650 = vunpack.c.l.b16 %v501
    %v651 = vunpack.c.l.b16 %v502
    %v652 = vunpack.c.h.b16 %v502
    %v653 = vunpack.c.l.b16 %v503
    %v654 = vunpack.c.l.b16 %v504
    %v655 = vunpack.c.h.b16 %v504
    %v656 = vunpack.c.l.b16 %v505
    %v657 = vunpack.c.l.b16 %v506
    %v658 = vunpack.c.h.b16 %v506
    %v659 = vunpack.c.l.b16 %v507
    %v660 = vunpack.c.l.b16 %v508
    %v661 = vunpack.c.h.b16 %v508
    %v662 = vunpack.c.l.b16 %v509
    %v663 = vunpack.c.l.b16 %v510
    %v664 = vunpack.c.h.b16 %v510
    %v665 = vunpack.c.l.b16 %v511
    %v666 = vunpack.c.l.b16 %v512
    %v667 = vunpack.c.h.b16 %v512
    %v668 = vunpack.c.l.b16 %v513
    %v669 = vunpack.c.l.b16 %v514
    %v670 = vunpack.c.h.b16 %v514
    %v671 = vunpack.c.l.b16 %v515
    %v672 = vunpack.c.l.b16 %v516
    %v673 = vunpack.c.h.b16 %v516
    %v674 = vunpack.c.l.b16 %v517
    %v675 = vunpack.c.l.b16 %v518
    %v676 = vunpack.c.h.b16 %v518
    %v677 = vunpack.c.l.b16 %v519
    %v678 = vunpack.c.l.b16 %v520
    %v679 = vunpack.c.h.b16 %v520
    %v680 = vunpack.c.l.b16 %v521
    %v681 = vunpack.c.l.b16 %v522
    %v682 = vunpack.c.h.b16 %v522
    %v683 = vunpack.c.l.b16 %v523
    %v684 = vunpack.c.l.b16 %v524
    %v685 = vunpack.c.h.b16 %v524
    %v686 = vunpack.c.l.b16 %v525
    %v687 = vunpack.c.l.b16 %v526
    %v688 = vunpack.c.h.b16 %v526
    %v689 = vunpack.c.l.b16 %v527
    %v690 = vunpack.c.l.b16 %v528
    %v691 = vunpack.c.h.b16 %v528
    %v692 = vunpack.c.l.b16 %v529
    %v693 = vunpack.c.l.b16 %v530
    %v694 = vunpack.c.h.b16 %v530
    %v695 = vunpack.c.l.b16 %v531
    %v696 = vunpack.c.l.b16 %v532
    %v697 = vunpack.c.h.b16 %v532
    %v698 = vunpack.c.l.b16 %v533
    %v699 = vunpack.c.l.b16 %v534
    %v700 = vunpack.c.h.b16 %v534
    %v701 = vunpack.c.l.b16 %v535
    %v702 = vunpack.c.l.b16 %v536
    %v703 = vunpack.c.h.b16 %v536
    %v704 = vunpack.c.l.b16 %v537
    %v705 = vunpack.c.l.b16 %v538
    %v706 = vunpack.c.h.b16 %v538
    %v707 = vunpack.c.l.b16 %v539
    %v708 = vunpack.c.l.b16 %v540
    %v709 = vunpack.c.h.b16 %v540
    %v710 = vunpack.c.l.b16 %v541
    %v711 = vunpack.c.l.b16 %v542
    %v712 = vunpack.c.h.b16 %v542
    %v713 = vunpack.c.l.b16 %v543
    %v714 = vunpack.c.l.b16 %v544
    %v715 = vunpack.c.h.b16 %v544
    %v716 = vunpack.c.l.b16 %v545
    %v717 = vunpack.c.l.b16 %v546
    %v718 = vunpack.c.h.b16 %v546
    %v719 = vunpack.c.l.b16 %v547
    %v720 = vunpack.c.l.b16 %v548
    %v721 = vunpack.c.h.b16 %v548
    %v722 = vunpack.c.l.b16 %v549
    %v723 = vunpack.c.l.b16 %v550
    %v724 = vunpack.c.h.b16 %v550
    %v725 = vunpack.c.l.b16 %v551
    %v726 = vunpack.c.l.b16 %v552
    %v727 = vunpack.c.h.b16 %v552
    %v728 = vunpack.c.l.b16 %v553
    %v729 = vunpack.c.l.b16 %v554
    %v730 = vunpack.c.h.b16 %v554
    %v731 = vunpack.c.l.b16 %v555
    %v732 = vunpack.c.l.b16 %v556
    %v733 = vunpack.c.h.b16 %v556
    %v734 = vunpack.c.l.b16 %v557
    %v735 = vunpack.c.l.b16 %v558
    %v736 = vunpack.c.h.b16 %v558
    %v737 = vunpack.c.l.b16 %v559
    %v738 = vpack.c.b16 %v645, %v642
    %v739 = vpack.c.b16 %v646, %v643
    %v740 = vpack.c.b16 %v647, %v644
    %v741 = vpack.c.b16 %v651, %v648
    %v742 = vpack.c.b16 %v652, %v649
    %v743 = vpack.c.b16 %v653, %v650
    %v744 = vpack.c.b16 %v657, %v654
    %v745 = vpack.c.b16 %v658, %v655
    %v746 = vpack.c.b16 %v659, %v656
    %v747 = vpack.c.b16 %v663, %v660
    %v748 = vpack.c.b16 %v664, %v661
    %v749 = vpack.c.b16 %v665, %v662
    %v750 = vpack.c.b16 %v669, %v666
    %v751 = vpack.c.b16 %v670, %v667
    %v752 = vpack.c.b16 %v671, %v668
    %v753 = vpack.c.b16 %v675, %v672
    %v754 = vpack.c.b16 %v676, %v673
    %v755 = vpack.c.b16 %v677, %v674
    %v756 = vpack.c.b16 %v681, %v678
    %v757 = vpack.c.b16 %v682, %v679
    %v758 = vpack.c.b16 %v683, %v680
    %v759 = vpack.c.b16 %v687, %v684
    %v760 = vpack.c.b16 %v688, %v685
    %v761 = vpack.c.b16 %v689, %v686
    %v762 = vpack.c.b16 %v693, %v690
    %v763 = vpack.c.b16 %v694, %v691
    %v764 = vpack.c.b16 %v695, %v692
    %v765 = vpack.c.b16 %v699, %v696
    %v766 = vpack.c.b16 %v700, %v697
    %v767 = vpack.c.b16 %v701, %v698
    %v768 = vpack.c.b16 %v705, %v702
    %v769 = vpack.c.b16 %v706, %v703
    %v770 = vpack.c.b16 %v707, %v704
    %v771 = vpack.c.b16 %v711, %v708
    %v772 = vpack.c.b16 %v712, %v709
    %v773 = vpack.c.b16 %v713, %v710
    %v774 = vpack.c.b16 %v717, %v714
    %v775 = vpack.c.b16 %v718, %v715
    %v776 = vpack.c.b16 %v719, %v716
    %v777 = vpack.c.b16 %v723, %v720
    %v778 = vpack.c.b16 %v724, %v721
    %v779 = vpack.c.b16 %v725, %v722
    %v780 = vpack.c.b16 %v729, %v726
    %v781 = vpack.c.b16 %v730, %v727
    %v782 = vpack.c.b16 %v731, %v728
    %v783 = vpack.c.b16 %v735, %v732
    %v784 = vpack.c.b16 %v736, %v733
    %v785 = vpack.c.b16 %v737, %v734
    %834 = vmatprep.subr.bf16.mxu0 %v739
    %835 = vmatpush1.bf16.msra.mxu0 %v738
    %836 = vmatprep.subr.bf16.mxu0 %v742
    %837 = vmatpush1.bf16.msra.mxu0 %v741
    %838 = vmatprep.subr.bf16.mxu0 %v745
    %839 = vmatpush1.bf16.msra.mxu0 %v744
    %840 = vmatprep.subr.bf16.mxu0 %v748
    %841 = vmatpush1.bf16.msra.mxu0 %v747
    %842 = vmatprep.subr.bf16.mxu0 %v751
    %843 = vmatpush1.bf16.msra.mxu0 %v750
    %844 = vmatprep.subr.bf16.mxu0 %v754
    %845 = vmatpush1.bf16.msra.mxu0 %v753
    %846 = vmatprep.subr.bf16.mxu0 %v757
    %847 = vmatpush1.bf16.msra.mxu0 %v756
    %848 = vmatprep.subr.bf16.mxu0 %v760
    %849 = vmatpush1.bf16.msra.mxu0 %v759
    %850 = vmatprep.subr.bf16.mxu0 %v763
    %851 = vmatpush1.bf16.msra.mxu0 %v762
    %852 = vmatprep.subr.bf16.mxu0 %v766
    %853 = vmatpush1.bf16.msra.mxu0 %v765
    %854 = vmatprep.subr.bf16.mxu0 %v769
    %855 = vmatpush1.bf16.msra.mxu0 %v768
    %856 = vmatprep.subr.bf16.mxu0 %v772
    %857 = vmatpush1.bf16.msra.mxu0 %v771
    %858 = vmatprep.subr.bf16.mxu0 %v775
    %859 = vmatpush1.bf16.msra.mxu0 %v774
    %860 = vmatprep.subr.bf16.mxu0 %v778
    %861 = vmatpush1.bf16.msra.mxu0 %v777
    %862 = vmatprep.subr.bf16.mxu0 %v781
    %863 = vmatpush1.bf16.msra.mxu0 %v780
    %864 = vmatprep.subr.bf16.mxu0 %v784
    %865 = vmatpush1.bf16.msra.mxu0 %v783
    %866 = vmatprep.mubr.bf16.mxu0 %v67
    %867 = vmatmul.mubr.bf16.gmra.mrb[0].mxu0 %v66
    %v868 = vpop.f32.mrb[0].mxu0
    %v869 = vadd.f32 %v566, %v868
    %v870 = vpop.f32.mrb[0].mxu0
    %v871 = vadd.f32 %v570, %v870
    %v872 = vpop.f32.mrb[0].mxu0
    %v873 = vadd.f32 %v566, %v872
    %v874 = vpop.f32.mrb[0].mxu0
    %v875 = vadd.f32 %v570, %v874
    %876 = vdwg.mxu0
    %877 = vmatprep.subr.bf16.mxu0 0
    %878 = vmatpush1.bf16.msra.mxu0 %v740
    %879 = vmatprep.subr.bf16.mxu0 0
    %880 = vmatpush1.bf16.msra.mxu0 %v743
    %881 = vmatprep.subr.bf16.mxu0 0
    %882 = vmatpush1.bf16.msra.mxu0 %v746
    %883 = vmatprep.subr.bf16.mxu0 0
    %884 = vmatpush1.bf16.msra.mxu0 %v749
    %885 = vmatprep.subr.bf16.mxu0 0
    %886 = vmatpush1.bf16.msra.mxu0 %v752
    %887 = vmatprep.subr.bf16.mxu0 0
    %888 = vmatpush1.bf16.msra.mxu0 %v755
    %889 = vmatprep.subr.bf16.mxu0 0
    %890 = vmatpush1.bf16.msra.mxu0 %v758
    %891 = vmatprep.subr.bf16.mxu0 0
    %892 = vmatpush1.bf16.msra.mxu0 %v761
    %893 = vmatprep.subr.bf16.mxu0 0
    %894 = vmatpush1.bf16.msra.mxu0 %v764
    %895 = vmatprep.subr.bf16.mxu0 0
    %896 = vmatpush1.bf16.msra.mxu0 %v767
    %897 = vmatprep.subr.bf16.mxu0 0
    %898 = vmatpush1.bf16.msra.mxu0 %v770
    %899 = vmatprep.subr.bf16.mxu0 0
    %900 = vmatpush1.bf16.msra.mxu0 %v773
    %901 = vmatprep.subr.bf16.mxu0 0
    %902 = vmatpush1.bf16.msra.mxu0 %v776
    %903 = vmatprep.subr.bf16.mxu0 0
    %904 = vmatpush1.bf16.msra.mxu0 %v779
    %905 = vmatprep.subr.bf16.mxu0 0
    %906 = vmatpush1.bf16.msra.mxu0 %v782
    %907 = vmatprep.subr.bf16.mxu0 0
    %908 = vmatpush1.bf16.msra.mxu0 %v785
    %909 = vmatprep.mubr.bf16.mxu0 %v67
    %910 = vmatmul.mubr.bf16.gmra.mrb[0].mxu0 %v66
    %v911 = vpop.f32.mrb[0].mxu0
    %v912 = vadd.f32 %v574, %v911
    %v913 = vpop.f32.mrb[0].mxu0
    %v914 = vpop.f32.mrb[0].mxu0
    %v915 = vadd.f32 %v574, %v914
    %v916 = vpop.f32.mrb[0].mxu0
    %917 = vdwg.mxu0
    %s918 = scalar_lea.vmem [#allocation2], 48
    %919 = vst [vmem:[%s918] sm:$0xff] %v869
    %920 = vst [vmem:[%s918 + $0x8] sm:$0xff] %v871
    %921 = vst [vmem:[%s918 + $0x10] sm:$0xff] %v912
    %922 = vst [vmem:[%s918 + $0x18] sm:$0xff] %v873
    %923 = vst [vmem:[%s918 + $0x20] sm:$0xff] %v875
    %924 = vst [vmem:[%s918 + $0x28] sm:$0xff] %v915
    %v925 = vld [vmem:[#allocation2] sm:$0xff]
    %v926 = vld [vmem:[#allocation2 + $0x8] sm:$0xff]
    %v927 = vld [vmem:[#allocation2 + $0x10] sm:$0xff]
    %v928 = vld [vmem:[#allocation3] sm:$0xff]
    %v929 = vld [vmem:[#allocation3 + $0x8] sm:$0xf]
    %v930 = vld [vmem:[#allocation3 + $0xc] sm:$0xff]
    %v931 = vld [vmem:[#allocation3 + $0x14] sm:$0xf]
    %v932 = vld [vmem:[#allocation3 + $0x18] sm:$0xff]
    %v933 = vld [vmem:[#allocation3 + $0x20] sm:$0xf]
    %v934 = vld [vmem:[#allocation3 + $0x24] sm:$0xff]
    %v935 = vld [vmem:[#allocation3 + $0x2c] sm:$0xf]
    %v936 = vld [vmem:[#allocation3 + $0x30] sm:$0xff]
    %v937 = vld [vmem:[#allocation3 + $0x38] sm:$0xf]
    %v938 = vld [vmem:[#allocation3 + $0x3c] sm:$0xff]
    %v939 = vld [vmem:[#allocation3 + $0x44] sm:$0xf]
    %v940 = vld [vmem:[#allocation3 + $0x48] sm:$0xff]
    %v941 = vld [vmem:[#allocation3 + $0x50] sm:$0xf]
    %v942 = vld [vmem:[#allocation3 + $0x54] sm:$0xff]
    %v943 = vld [vmem:[#allocation3 + $0x5c] sm:$0xf]
    %v944 = vld [vmem:[#allocation3 + $0x60] sm:$0xff]
    %v945 = vld [vmem:[#allocation3 + $0x68] sm:$0xf]
    %v946 = vld [vmem:[#allocation3 + $0x6c] sm:$0xff]
    %v947 = vld [vmem:[#allocation3 + $0x74] sm:$0xf]
    %v948 = vld [vmem:[#allocation3 + $0x78] sm:$0xff]
    %v949 = vld [vmem:[#allocation3 + $0x80] sm:$0xf]
    %v950 = vld [vmem:[#allocation3 + $0x84] sm:$0xff]
    %v951 = vld [vmem:[#allocation3 + $0x8c] sm:$0xf]
    %v952 = vld [vmem:[#allocation3 + $0x90] sm:$0xff]
    %v953 = vld [vmem:[#allocation3 + $0x98] sm:$0xf]
    %v954 = vld [vmem:[#allocation3 + $0x9c] sm:$0xff]
    %v955 = vld [vmem:[#allocation3 + $0xa4] sm:$0xf]
    %v956 = vld [vmem:[#allocation3 + $0xa8] sm:$0xff]
    %v957 = vld [vmem:[#allocation3 + $0xb0] sm:$0xf]
    %v958 = vld [vmem:[#allocation3 + $0xb4] sm:$0xff]
    %v959 = vld [vmem:[#allocation3 + $0xbc] sm:$0xf]
    %v960 = vld [vmem:[#allocation7] sm:$0x7]
    %v962 = vlaneseq
    %v963 = vshrl.u32 %v962, 7
    %v964 = vsub.s32 0, %v963
    %v965 = vrot.slane %v960, %v964
    %v966 = vlaneseq
    %v967 = vshrl.u32 %v966, 7
    %v968 = vsub.s32 1, %v967
    %v969 = vrot.slane %v960, %v968
    %v970 = vlaneseq
    %v971 = vshrl.u32 %v970, 7
    %v972 = vsub.s32 2, %v971
    %v973 = vrot.slane %v960, %v972
    %v1009 = vunpack.c.l.b16 %v928
    %v1010 = vunpack.c.h.b16 %v928
    %v1011 = vunpack.c.l.b16 %v929
    %v1012 = vunpack.c.l.b16 %v930
    %v1013 = vunpack.c.h.b16 %v930
    %v1014 = vunpack.c.l.b16 %v931
    %v1015 = vunpack.c.l.b16 %v932
    %v1016 = vunpack.c.h.b16 %v932
    %v1017 = vunpack.c.l.b16 %v933
    %v1018 = vunpack.c.l.b16 %v934
    %v1019 = vunpack.c.h.b16 %v934
    %v1020 = vunpack.c.l.b16 %v935
    %v1021 = vunpack.c.l.b16 %v936
    %v1022 = vunpack.c.h.b16 %v936
    %v1023 = vunpack.c.l.b16 %v937
    %v1024 = vunpack.c.l.b16 %v938
    %v1025 = vunpack.c.h.b16 %v938
    %v1026 = vunpack.c.l.b16 %v939
    %v1027 = vunpack.c.l.b16 %v940
    %v1028 = vunpack.c.h.b16 %v940
    %v1029 = vunpack.c.l.b16 %v941
    %v1030 = vunpack.c.l.b16 %v942
    %v1031 = vunpack.c.h.b16 %v942
    %v1032 = vunpack.c.l.b16 %v943
    %v1033 = vunpack.c.l.b16 %v944
    %v1034 = vunpack.c.h.b16 %v944
    %v1035 = vunpack.c.l.b16 %v945
    %v1036 = vunpack.c.l.b16 %v946
    %v1037 = vunpack.c.h.b16 %v946
    %v1038 = vunpack.c.l.b16 %v947
    %v1039 = vunpack.c.l.b16 %v948
    %v1040 = vunpack.c.h.b16 %v948
    %v1041 = vunpack.c.l.b16 %v949
    %v1042 = vunpack.c.l.b16 %v950
    %v1043 = vunpack.c.h.b16 %v950
    %v1044 = vunpack.c.l.b16 %v951
    %v1045 = vunpack.c.l.b16 %v952
    %v1046 = vunpack.c.h.b16 %v952
    %v1047 = vunpack.c.l.b16 %v953
    %v1048 = vunpack.c.l.b16 %v954
    %v1049 = vunpack.c.h.b16 %v954
    %v1050 = vunpack.c.l.b16 %v955
    %v1051 = vunpack.c.l.b16 %v956
    %v1052 = vunpack.c.h.b16 %v956
    %v1053 = vunpack.c.l.b16 %v957
    %v1054 = vunpack.c.l.b16 %v958
    %v1055 = vunpack.c.h.b16 %v958
    %v1056 = vunpack.c.l.b16 %v959
    %v1057 = vpack.c.b16 %v1012, %v1009
    %v1058 = vpack.c.b16 %v1013, %v1010
    %v1059 = vpack.c.b16 %v1014, %v1011
    %v1060 = vpack.c.b16 %v1018, %v1015
    %v1061 = vpack.c.b16 %v1019, %v1016
    %v1062 = vpack.c.b16 %v1020, %v1017
    %v1063 = vpack.c.b16 %v1024, %v1021
    %v1064 = vpack.c.b16 %v1025, %v1022
    %v1065 = vpack.c.b16 %v1026, %v1023
    %v1066 = vpack.c.b16 %v1030, %v1027
    %v1067 = vpack.c.b16 %v1031, %v1028
    %v1068 = vpack.c.b16 %v1032, %v1029
    %v1069 = vpack.c.b16 %v1036, %v1033
    %v1070 = vpack.c.b16 %v1037, %v1034
    %v1071 = vpack.c.b16 %v1038, %v1035
    %v1072 = vpack.c.b16 %v1042, %v1039
    %v1073 = vpack.c.b16 %v1043, %v1040
    %v1074 = vpack.c.b16 %v1044, %v1041
    %v1075 = vpack.c.b16 %v1048, %v1045
    %v1076 = vpack.c.b16 %v1049, %v1046
    %v1077 = vpack.c.b16 %v1050, %v1047
    %v1078 = vpack.c.b16 %v1054, %v1051
    %v1079 = vpack.c.b16 %v1055, %v1052
    %v1080 = vpack.c.b16 %v1056, %v1053
    %1105 = vmatprep.subr.bf16.mxu0 %v1058
    %1106 = vmatpush1.bf16.msra.mxu0 %v1057
    %1107 = vmatprep.subr.bf16.mxu0 %v1061
    %1108 = vmatpush1.bf16.msra.mxu0 %v1060
    %1109 = vmatprep.subr.bf16.mxu0 %v1064
    %1110 = vmatpush1.bf16.msra.mxu0 %v1063
    %1111 = vmatprep.subr.bf16.mxu0 %v1067
    %1112 = vmatpush1.bf16.msra.mxu0 %v1066
    %1113 = vmatprep.subr.bf16.mxu0 %v1070
    %1114 = vmatpush1.bf16.msra.mxu0 %v1069
    %1115 = vmatprep.subr.bf16.mxu0 %v1073
    %1116 = vmatpush1.bf16.msra.mxu0 %v1072
    %1117 = vmatprep.subr.bf16.mxu0 %v1076
    %1118 = vmatpush1.bf16.msra.mxu0 %v1075
    %1119 = vmatprep.subr.bf16.mxu0 %v1079
    %1120 = vmatpush1.bf16.msra.mxu0 %v1078
    %1121 = vmatprep.subr.bf16.mxu0 0
    %1122 = vmatpush1.bf16.msra.mxu0 0
    %1123 = vmatprep.subr.bf16.mxu0 0
    %1124 = vmatpush1.bf16.msra.mxu0 0
    %1125 = vmatprep.subr.bf16.mxu0 0
    %1126 = vmatpush1.bf16.msra.mxu0 0
    %1127 = vmatprep.subr.bf16.mxu0 0
    %1128 = vmatpush1.bf16.msra.mxu0 0
    %1129 = vmatprep.subr.bf16.mxu0 0
    %1130 = vmatpush1.bf16.msra.mxu0 0
    %1131 = vmatprep.subr.bf16.mxu0 0
    %1132 = vmatpush1.bf16.msra.mxu0 0
    %1133 = vmatprep.subr.bf16.mxu0 0
    %1134 = vmatpush1.bf16.msra.mxu0 0
    %1135 = vmatprep.subr.bf16.mxu0 0
    %1136 = vmatpush1.bf16.msra.mxu0 0
    %1137 = vmatprep.mubr.bf16.mxu0 0
    %1138 = vmatmul.mubr.bf16.gmra.mrb[0].mxu0 0
    %v1139 = vpop.f32.mrb[0].mxu0
    %v1140 = vadd.f32 %v965, %v1139
    %v1141 = vpop.f32.mrb[0].mxu0
    %v1142 = vadd.f32 %v969, %v1141
    %v1143 = vpop.f32.mrb[0].mxu0
    %v1144 = vpop.f32.mrb[0].mxu0
    %1145 = vdwg.mxu0
    %1146 = vmatprep.subr.bf16.mxu0 0
    %1147 = vmatpush1.bf16.msra.mxu0 %v1059
    %1148 = vmatprep.subr.bf16.mxu0 0
    %1149 = vmatpush1.bf16.msra.mxu0 %v1062
    %1150 = vmatprep.subr.bf16.mxu0 0
    %1151 = vmatpush1.bf16.msra.mxu0 %v1065
    %1152 = vmatprep.subr.bf16.mxu0 0
    %1153 = vmatpush1.bf16.msra.mxu0 %v1068
    %1154 = vmatprep.subr.bf16.mxu0 0
    %1155 = vmatpush1.bf16.msra.mxu0 %v1071
    %1156 = vmatprep.subr.bf16.mxu0 0
    %1157 = vmatpush1.bf16.msra.mxu0 %v1074
    %1158 = vmatprep.subr.bf16.mxu0 0
    %1159 = vmatpush1.bf16.msra.mxu0 %v1077
    %1160 = vmatprep.subr.bf16.mxu0 0
    %1161 = vmatpush1.bf16.msra.mxu0 %v1080
    %1162 = vmatprep.subr.bf16.mxu0 0
    %1163 = vmatpush1.bf16.msra.mxu0 0
    %1164 = vmatprep.subr.bf16.mxu0 0
    %1165 = vmatpush1.bf16.msra.mxu0 0
    %1166 = vmatprep.subr.bf16.mxu0 0
    %1167 = vmatpush1.bf16.msra.mxu0 0
    %1168 = vmatprep.subr.bf16.mxu0 0
    %1169 = vmatpush1.bf16.msra.mxu0 0
    %1170 = vmatprep.subr.bf16.mxu0 0
    %1171 = vmatpush1.bf16.msra.mxu0 0
    %1172 = vmatprep.subr.bf16.mxu0 0
    %1173 = vmatpush1.bf16.msra.mxu0 0
    %1174 = vmatprep.subr.bf16.mxu0 0
    %1175 = vmatpush1.bf16.msra.mxu0 0
    %1176 = vmatprep.subr.bf16.mxu0 0
    %1177 = vmatpush1.bf16.msra.mxu0 0
    %1178 = vmatprep.mubr.bf16.mxu0 0
    %1179 = vmatmul.mubr.bf16.gmra.mrb[0].mxu0 0
    %v1180 = vpop.f32.mrb[0].mxu0
    %v1181 = vadd.f32 %v973, %v1180
    %v1182 = vpop.f32.mrb[0].mxu0
    %v1183 = vpop.f32.mrb[0].mxu0
    %v1184 = vpop.f32.mrb[0].mxu0
    %1185 = vdwg.mxu0
    %v1186 = vadd.f32 %v925, %v1140
    %v1187 = vxor.u32 %v1186, 2147483648
    %v1188 = vmul.f32 %v1187, 1.442695
    %v1189 = vpow.pop %v1188
    %v1190 = vadd.f32 %v1189, 1.0
    %v1191 = vrcp.pop %v1190
    %v1192 = vmul.f32 1.0, %v1191
    %v1193 = vadd.f32 %v926, %v1142
    %v1194 = vxor.u32 %v1193, 2147483648
    %v1195 = vmul.f32 %v1194, 1.442695
    %v1196 = vpow.pop %v1195
    %v1197 = vadd.f32 %v1196, 1.0
    %v1198 = vrcp.pop %v1197
    %v1199 = vmul.f32 1.0, %v1198
    %v1200 = vmul.f32 %v1192, %v1181
    %v1201 = vadd.f32 %v927, %v1200
    %v1202 = vtanh.pop %v1201
    %v1203 = vsub.f32 1.0, %v1199
    %v1204 = vmul.f32 %v1203, %v1202
    %v1205 = vmul.f32 %v1199, 0.0
    %v1206 = vadd.f32 %v1204, %v1205
    %s1207 = scalar_lea.vmem [#allocation2], 72
    %v1208 = vld [vmem:[%s1207] sm:$0xff]
    %v1209 = vld [vmem:[%s1207 + $0x8] sm:$0xff]
    %v1210 = vld [vmem:[%s1207 + $0x10] sm:$0xff]
    %s1211 = scalar_lea.vmem [#allocation3], 192
    %v1212 = vld [vmem:[%s1211] sm:$0xff]
    %v1213 = vld [vmem:[%s1211 + $0x8] sm:$0xf]
    %v1214 = vld [vmem:[%s1211 + $0xc] sm:$0xff]
    %v1215 = vld [vmem:[%s1211 + $0x14] sm:$0xf]
    %v1216 = vld [vmem:[%s1211 + $0x18] sm:$0xff]
    %v1217 = vld [vmem:[%s1211 + $0x20] sm:$0xf]
    %v1218 = vld [vmem:[%s1211 + $0x24] sm:$0xff]
    %v1219 = vld [vmem:[%s1211 + $0x2c] sm:$0xf]
    %v1220 = vld [vmem:[%s1211 + $0x30] sm:$0xff]
    %v1221 = vld [vmem:[%s1211 + $0x38] sm:$0xf]
    %v1222 = vld [vmem:[%s1211 + $0x3c] sm:$0xff]
    %v1223 = vld [vmem:[%s1211 + $0x44] sm:$0xf]
    %v1224 = vld [vmem:[%s1211 + $0x48] sm:$0xff]
    %v1225 = vld [vmem:[%s1211 + $0x50] sm:$0xf]
    %v1226 = vld [vmem:[%s1211 + $0x54] sm:$0xff]
    %v1227 = vld [vmem:[%s1211 + $0x5c] sm:$0xf]
    %v1228 = vld [vmem:[%s1211 + $0x60] sm:$0xff]
    %v1229 = vld [vmem:[%s1211 + $0x68] sm:$0xf]
    %v1230 = vld [vmem:[%s1211 + $0x6c] sm:$0xff]
    %v1231 = vld [vmem:[%s1211 + $0x74] sm:$0xf]
    %v1232 = vld [vmem:[%s1211 + $0x78] sm:$0xff]
    %v1233 = vld [vmem:[%s1211 + $0x80] sm:$0xf]
    %v1234 = vld [vmem:[%s1211 + $0x84] sm:$0xff]
    %v1235 = vld [vmem:[%s1211 + $0x8c] sm:$0xf]
    %v1236 = vld [vmem:[%s1211 + $0x90] sm:$0xff]
    %v1237 = vld [vmem:[%s1211 + $0x98] sm:$0xf]
    %v1238 = vld [vmem:[%s1211 + $0x9c] sm:$0xff]
    %v1239 = vld [vmem:[%s1211 + $0xa4] sm:$0xf]
    %v1240 = vld [vmem:[%s1211 + $0xa8] sm:$0xff]
    %v1241 = vld [vmem:[%s1211 + $0xb0] sm:$0xf]
    %v1242 = vld [vmem:[%s1211 + $0xb4] sm:$0xff]
    %v1243 = vld [vmem:[%s1211 + $0xbc] sm:$0xf]
    %s1244 = scalar_lea.vmem [#allocation7], 3
    %v1245 = vld [vmem:[%s1244] sm:$0x7]
    %v1247 = vlaneseq
    %v1248 = vshrl.u32 %v1247, 7
    %v1249 = vsub.s32 0, %v1248
    %v1250 = vrot.slane %v1245, %v1249
    %v1251 = vlaneseq
    %v1252 = vshrl.u32 %v1251, 7
    %v1253 = vsub.s32 1, %v1252
    %v1254 = vrot.slane %v1245, %v1253
    %v1255 = vlaneseq
    %v1256 = vshrl.u32 %v1255, 7
    %v1257 = vsub.s32 2, %v1256
    %v1258 = vrot.slane %v1245, %v1257
    %v1294 = vunpack.c.l.b16 %v1212
    %v1295 = vunpack.c.h.b16 %v1212
    %v1296 = vunpack.c.l.b16 %v1213
    %v1297 = vunpack.c.l.b16 %v1214
    %v1298 = vunpack.c.h.b16 %v1214
    %v1299 = vunpack.c.l.b16 %v1215
    %v1300 = vunpack.c.l.b16 %v1216
    %v1301 = vunpack.c.h.b16 %v1216
    %v1302 = vunpack.c.l.b16 %v1217
    %v1303 = vunpack.c.l.b16 %v1218
    %v1304 = vunpack.c.h.b16 %v1218
    %v1305 = vunpack.c.l.b16 %v1219
    %v1306 = vunpack.c.l.b16 %v1220
    %v1307 = vunpack.c.h.b16 %v1220
    %v1308 = vunpack.c.l.b16 %v1221
    %v1309 = vunpack.c.l.b16 %v1222
    %v1310 = vunpack.c.h.b16 %v1222
    %v1311 = vunpack.c.l.b16 %v1223
    %v1312 = vunpack.c.l.b16 %v1224
    %v1313 = vunpack.c.h.b16 %v1224
    %v1314 = vunpack.c.l.b16 %v1225
    %v1315 = vunpack.c.l.b16 %v1226
    %v1316 = vunpack.c.h.b16 %v1226
    %v1317 = vunpack.c.l.b16 %v1227
    %v1318 = vunpack.c.l.b16 %v1228
    %v1319 = vunpack.c.h.b16 %v1228
    %v1320 = vunpack.c.l.b16 %v1229
    %v1321 = vunpack.c.l.b16 %v1230
    %v1322 = vunpack.c.h.b16 %v1230
    %v1323 = vunpack.c.l.b16 %v1231
    %v1324 = vunpack.c.l.b16 %v1232
    %v1325 = vunpack.c.h.b16 %v1232
    %v1326 = vunpack.c.l.b16 %v1233
    %v1327 = vunpack.c.l.b16 %v1234
    %v1328 = vunpack.c.h.b16 %v1234
    %v1329 = vunpack.c.l.b16 %v1235
    %v1330 = vunpack.c.l.b16 %v1236
    %v1331 = vunpack.c.h.b16 %v1236
    %v1332 = vunpack.c.l.b16 %v1237
    %v1333 = vunpack.c.l.b16 %v1238
    %v1334 = vunpack.c.h.b16 %v1238
    %v1335 = vunpack.c.l.b16 %v1239
    %v1336 = vunpack.c.l.b16 %v1240
    %v1337 = vunpack.c.h.b16 %v1240
    %v1338 = vunpack.c.l.b16 %v1241
    %v1339 = vunpack.c.l.b16 %v1242
    %v1340 = vunpack.c.h.b16 %v1242
    %v1341 = vunpack.c.l.b16 %v1243
    %v1342 = vpack.c.b16 %v1297, %v1294
    %v1343 = vpack.c.b16 %v1298, %v1295
    %v1344 = vpack.c.b16 %v1299, %v1296
    %v1345 = vpack.c.b16 %v1303, %v1300
    %v1346 = vpack.c.b16 %v1304, %v1301
    %v1347 = vpack.c.b16 %v1305, %v1302
    %v1348 = vpack.c.b16 %v1309, %v1306
    %v1349 = vpack.c.b16 %v1310, %v1307
    %v1350 = vpack.c.b16 %v1311, %v1308
    %v1351 = vpack.c.b16 %v1315, %v1312
    %v1352 = vpack.c.b16 %v1316, %v1313
    %v1353 = vpack.c.b16 %v1317, %v1314
    %v1354 = vpack.c.b16 %v1321, %v1318
    %v1355 = vpack.c.b16 %v1322, %v1319
    %v1356 = vpack.c.b16 %v1323, %v1320
    %v1357 = vpack.c.b16 %v1327, %v1324
    %v1358 = vpack.c.b16 %v1328, %v1325
    %v1359 = vpack.c.b16 %v1329, %v1326
    %v1360 = vpack.c.b16 %v1333, %v1330
    %v1361 = vpack.c.b16 %v1334, %v1331
    %v1362 = vpack.c.b16 %v1335, %v1332
    %v1363 = vpack.c.b16 %v1339, %v1336
    %v1364 = vpack.c.b16 %v1340, %v1337
    %v1365 = vpack.c.b16 %v1341, %v1338
    %1390 = vmatprep.subr.bf16.mxu0 %v1343
    %1391 = vmatpush1.bf16.msra.mxu0 %v1342
    %1392 = vmatprep.subr.bf16.mxu0 %v1346
    %1393 = vmatpush1.bf16.msra.mxu0 %v1345
    %1394 = vmatprep.subr.bf16.mxu0 %v1349
    %1395 = vmatpush1.bf16.msra.mxu0 %v1348
    %1396 = vmatprep.subr.bf16.mxu0 %v1352
    %1397 = vmatpush1.bf16.msra.mxu0 %v1351
    %1398 = vmatprep.subr.bf16.mxu0 %v1355
    %1399 = vmatpush1.bf16.msra.mxu0 %v1354
    %1400 = vmatprep.subr.bf16.mxu0 %v1358
    %1401 = vmatpush1.bf16.msra.mxu0 %v1357
    %1402 = vmatprep.subr.bf16.mxu0 %v1361
    %1403 = vmatpush1.bf16.msra.mxu0 %v1360
    %1404 = vmatprep.subr.bf16.mxu0 %v1364
    %1405 = vmatpush1.bf16.msra.mxu0 %v1363
    %1406 = vmatprep.subr.bf16.mxu0 0
    %1407 = vmatpush1.bf16.msra.mxu0 0
    %1408 = vmatprep.subr.bf16.mxu0 0
    %1409 = vmatpush1.bf16.msra.mxu0 0
    %1410 = vmatprep.subr.bf16.mxu0 0
    %1411 = vmatpush1.bf16.msra.mxu0 0
    %1412 = vmatprep.subr.bf16.mxu0 0
    %1413 = vmatpush1.bf16.msra.mxu0 0
    %1414 = vmatprep.subr.bf16.mxu0 0
    %1415 = vmatpush1.bf16.msra.mxu0 0
    %1416 = vmatprep.subr.bf16.mxu0 0
    %1417 = vmatpush1.bf16.msra.mxu0 0
    %1418 = vmatprep.subr.bf16.mxu0 0
    %1419 = vmatpush1.bf16.msra.mxu0 0
    %1420 = vmatprep.subr.bf16.mxu0 0
    %1421 = vmatpush1.bf16.msra.mxu0 0
    %1422 = vmatprep.mubr.bf16.mxu0 0
    %1423 = vmatmul.mubr.bf16.gmra.mrb[0].mxu0 0
    %v1424 = vpop.f32.mrb[0].mxu0
    %v1425 = vadd.f32 %v1250, %v1424
    %v1426 = vpop.f32.mrb[0].mxu0
    %v1427 = vadd.f32 %v1254, %v1426
    %v1428 = vpop.f32.mrb[0].mxu0
    %v1429 = vpop.f32.mrb[0].mxu0
    %1430 = vdwg.mxu0
    %1431 = vmatprep.subr.bf16.mxu0 0
    %1432 = vmatpush1.bf16.msra.mxu0 %v1344
    %1433 = vmatprep.subr.bf16.mxu0 0
    %1434 = vmatpush1.bf16.msra.mxu0 %v1347
    %1435 = vmatprep.subr.bf16.mxu0 0
    %1436 = vmatpush1.bf16.msra.mxu0 %v1350
    %1437 = vmatprep.subr.bf16.mxu0 0
    %1438 = vmatpush1.bf16.msra.mxu0 %v1353
    %1439 = vmatprep.subr.bf16.mxu0 0
    %1440 = vmatpush1.bf16.msra.mxu0 %v1356
    %1441 = vmatprep.subr.bf16.mxu0 0
    %1442 = vmatpush1.bf16.msra.mxu0 %v1359
    %1443 = vmatprep.subr.bf16.mxu0 0
    %1444 = vmatpush1.bf16.msra.mxu0 %v1362
    %1445 = vmatprep.subr.bf16.mxu0 0
    %1446 = vmatpush1.bf16.msra.mxu0 %v1365
    %1447 = vmatprep.subr.bf16.mxu0 0
    %1448 = vmatpush1.bf16.msra.mxu0 0
    %1449 = vmatprep.subr.bf16.mxu0 0
    %1450 = vmatpush1.bf16.msra.mxu0 0
    %1451 = vmatprep.subr.bf16.mxu0 0
    %1452 = vmatpush1.bf16.msra.mxu0 0
    %1453 = vmatprep.subr.bf16.mxu0 0
    %1454 = vmatpush1.bf16.msra.mxu0 0
    %1455 = vmatprep.subr.bf16.mxu0 0
    %1456 = vmatpush1.bf16.msra.mxu0 0
    %1457 = vmatprep.subr.bf16.mxu0 0
    %1458 = vmatpush1.bf16.msra.mxu0 0
    %1459 = vmatprep.subr.bf16.mxu0 0
    %1460 = vmatpush1.bf16.msra.mxu0 0
    %1461 = vmatprep.subr.bf16.mxu0 0
    %1462 = vmatpush1.bf16.msra.mxu0 0
    %1463 = vmatprep.mubr.bf16.mxu0 0
    %1464 = vmatmul.mubr.bf16.gmra.mrb[0].mxu0 0
    %v1465 = vpop.f32.mrb[0].mxu0
    %v1466 = vadd.f32 %v1258, %v1465
    %v1467 = vpop.f32.mrb[0].mxu0
    %v1468 = vpop.f32.mrb[0].mxu0
    %v1469 = vpop.f32.mrb[0].mxu0
    %1470 = vdwg.mxu0
    %v1471 = vadd.f32 %v1208, %v1425
    %v1472 = vxor.u32 %v1471, 2147483648
    %v1473 = vmul.f32 %v1472, 1.442695
    %v1474 = vpow.pop %v1473
    %v1475 = vadd.f32 %v1474, 1.0
    %v1476 = vrcp.pop %v1475
    %v1477 = vmul.f32 1.0, %v1476
    %v1478 = vadd.f32 %v1209, %v1427
    %v1479 = vxor.u32 %v1478, 2147483648
    %v1480 = vmul.f32 %v1479, 1.442695
    %v1481 = vpow.pop %v1480
    %v1482 = vadd.f32 %v1481, 1.0
    %v1483 = vrcp.pop %v1482
    %v1484 = vmul.f32 1.0, %v1483
    %v1485 = vmul.f32 %v1477, %v1466
    %v1486 = vadd.f32 %v1210, %v1485
    %v1487 = vtanh.pop %v1486
    %v1488 = vsub.f32 1.0, %v1484
    %v1489 = vmul.f32 %v1488, %v1487
    %v1490 = vmul.f32 %v1484, 0.0
    %v1491 = vadd.f32 %v1489, %v1490
    %1492 = vst [vmem:[%s5] sm:$0xff] %v1206
    %s1493 = scalar_lea.vmem %s5, 16
    %1494 = vst [vmem:[%s1493 + $0x8] sm:$0xff] %v1491
    %s1495 = scalar_lea.vmem [#allocation2], 24
    %v1496 = vld [vmem:[%s1495] sm:$0xff]
    %v1497 = vld [vmem:[%s1495 + $0x8] sm:$0xff]
    %v1498 = vld [vmem:[%s1495 + $0x10] sm:$0xff]
    %v1499 = vpack.c.bf16 %v1206, %v1206
    %v1500 = vld [vmem:[#allocation3] sm:$0xff]
    %v1501 = vld [vmem:[#allocation3 + $0x8] sm:$0xf]
    %v1502 = vld [vmem:[#allocation3 + $0xc] sm:$0xff]
    %v1503 = vld [vmem:[#allocation3 + $0x14] sm:$0xf]
    %v1504 = vld [vmem:[#allocation3 + $0x18] sm:$0xff]
    %v1505 = vld [vmem:[#allocation3 + $0x20] sm:$0xf]
    %v1506 = vld [vmem:[#allocation3 + $0x24] sm:$0xff]
    %v1507 = vld [vmem:[#allocation3 + $0x2c] sm:$0xf]
    %v1508 = vld [vmem:[#allocation3 + $0x30] sm:$0xff]
    %v1509 = vld [vmem:[#allocation3 + $0x38] sm:$0xf]
    %v1510 = vld [vmem:[#allocation3 + $0x3c] sm:$0xff]
    %v1511 = vld [vmem:[#allocation3 + $0x44] sm:$0xf]
    %v1512 = vld [vmem:[#allocation3 + $0x48] sm:$0xff]
    %v1513 = vld [vmem:[#allocation3 + $0x50] sm:$0xf]
    %v1514 = vld [vmem:[#allocation3 + $0x54] sm:$0xff]
    %v1515 = vld [vmem:[#allocation3 + $0x5c] sm:$0xf]
    %v1516 = vld [vmem:[#allocation3 + $0x60] sm:$0xff]
    %v1517 = vld [vmem:[#allocation3 + $0x68] sm:$0xf]
    %v1518 = vld [vmem:[#allocation3 + $0x6c] sm:$0xff]
    %v1519 = vld [vmem:[#allocation3 + $0x74] sm:$0xf]
    %v1520 = vld [vmem:[#allocation3 + $0x78] sm:$0xff]
    %v1521 = vld [vmem:[#allocation3 + $0x80] sm:$0xf]
    %v1522 = vld [vmem:[#allocation3 + $0x84] sm:$0xff]
    %v1523 = vld [vmem:[#allocation3 + $0x8c] sm:$0xf]
    %v1524 = vld [vmem:[#allocation3 + $0x90] sm:$0xff]
    %v1525 = vld [vmem:[#allocation3 + $0x98] sm:$0xf]
    %v1526 = vld [vmem:[#allocation3 + $0x9c] sm:$0xff]
    %v1527 = vld [vmem:[#allocation3 + $0xa4] sm:$0xf]
    %v1528 = vld [vmem:[#allocation3 + $0xa8] sm:$0xff]
    %v1529 = vld [vmem:[#allocation3 + $0xb0] sm:$0xf]
    %v1530 = vld [vmem:[#allocation3 + $0xb4] sm:$0xff]
    %v1531 = vld [vmem:[#allocation3 + $0xbc] sm:$0xf]
    %v1532 = vld [vmem:[#allocation7] sm:$0x7]
    %v1534 = vlaneseq
    %v1535 = vshrl.u32 %v1534, 7
    %v1536 = vsub.s32 0, %v1535
    %v1537 = vrot.slane %v1532, %v1536
    %v1538 = vlaneseq
    %v1539 = vshrl.u32 %v1538, 7
    %v1540 = vsub.s32 1, %v1539
    %v1541 = vrot.slane %v1532, %v1540
    %v1542 = vlaneseq
    %v1543 = vshrl.u32 %v1542, 7
    %v1544 = vsub.s32 2, %v1543
    %v1545 = vrot.slane %v1532, %v1544
    %v1581 = vunpack.c.l.b16 %v1500
    %v1582 = vunpack.c.h.b16 %v1500
    %v1583 = vunpack.c.l.b16 %v1501
    %v1584 = vunpack.c.l.b16 %v1502
    %v1585 = vunpack.c.h.b16 %v1502
    %v1586 = vunpack.c.l.b16 %v1503
    %v1587 = vunpack.c.l.b16 %v1504
    %v1588 = vunpack.c.h.b16 %v1504
    %v1589 = vunpack.c.l.b16 %v1505
    %v1590 = vunpack.c.l.b16 %v1506
    %v1591 = vunpack.c.h.b16 %v1506
    %v1592 = vunpack.c.l.b16 %v1507
    %v1593 = vunpack.c.l.b16 %v1508
    %v1594 = vunpack.c.h.b16 %v1508
    %v1595 = vunpack.c.l.b16 %v1509
    %v1596 = vunpack.c.l.b16 %v1510
    %v1597 = vunpack.c.h.b16 %v1510
    %v1598 = vunpack.c.l.b16 %v1511
    %v1599 = vunpack.c.l.b16 %v1512
    %v1600 = vunpack.c.h.b16 %v1512
    %v1601 = vunpack.c.l.b16 %v1513
    %v1602 = vunpack.c.l.b16 %v1514
    %v1603 = vunpack.c.h.b16 %v1514
    %v1604 = vunpack.c.l.b16 %v1515
    %v1605 = vunpack.c.l.b16 %v1516
    %v1606 = vunpack.c.h.b16 %v1516
    %v1607 = vunpack.c.l.b16 %v1517
    %v1608 = vunpack.c.l.b16 %v1518
    %v1609 = vunpack.c.h.b16 %v1518
    %v1610 = vunpack.c.l.b16 %v1519
    %v1611 = vunpack.c.l.b16 %v1520
    %v1612 = vunpack.c.h.b16 %v1520
    %v1613 = vunpack.c.l.b16 %v1521
    %v1614 = vunpack.c.l.b16 %v1522
    %v1615 = vunpack.c.h.b16 %v1522
    %v1616 = vunpack.c.l.b16 %v1523
    %v1617 = vunpack.c.l.b16 %v1524
    %v1618 = vunpack.c.h.b16 %v1524
    %v1619 = vunpack.c.l.b16 %v1525
    %v1620 = vunpack.c.l.b16 %v1526
    %v1621 = vunpack.c.h.b16 %v1526
    %v1622 = vunpack.c.l.b16 %v1527
    %v1623 = vunpack.c.l.b16 %v1528
    %v1624 = vunpack.c.h.b16 %v1528
    %v1625 = vunpack.c.l.b16 %v1529
    %v1626 = vunpack.c.l.b16 %v1530
    %v1627 = vunpack.c.h.b16 %v1530
    %v1628 = vunpack.c.l.b16 %v1531
    %v1629 = vpack.c.b16 %v1584, %v1581
    %v1630 = vpack.c.b16 %v1585, %v1582
    %v1631 = vpack.c.b16 %v1586, %v1583
    %v1632 = vpack.c.b16 %v1590, %v1587
    %v1633 = vpack.c.b16 %v1591, %v1588
    %v1634 = vpack.c.b16 %v1592, %v1589
    %v1635 = vpack.c.b16 %v1596, %v1593
    %v1636 = vpack.c.b16 %v1597, %v1594
    %v1637 = vpack.c.b16 %v1598, %v1595
    %v1638 = vpack.c.b16 %v1602, %v1599
    %v1639 = vpack.c.b16 %v1603, %v1600
    %v1640 = vpack.c.b16 %v1604, %v1601
    %v1641 = vpack.c.b16 %v1608, %v1605
    %v1642 = vpack.c.b16 %v1609, %v1606
    %v1643 = vpack.c.b16 %v1610, %v1607
    %v1644 = vpack.c.b16 %v1614, %v1611
    %v1645 = vpack.c.b16 %v1615, %v1612
    %v1646 = vpack.c.b16 %v1616, %v1613
    %v1647 = vpack.c.b16 %v1620, %v1617
    %v1648 = vpack.c.b16 %v1621, %v1618
    %v1649 = vpack.c.b16 %v1622, %v1619
    %v1650 = vpack.c.b16 %v1626, %v1623
    %v1651 = vpack.c.b16 %v1627, %v1624
    %v1652 = vpack.c.b16 %v1628, %v1625
    %1677 = vmatprep.subr.bf16.mxu0 %v1630
    %1678 = vmatpush1.bf16.msra.mxu0 %v1629
    %1679 = vmatprep.subr.bf16.mxu0 %v1633
    %1680 = vmatpush1.bf16.msra.mxu0 %v1632
    %1681 = vmatprep.subr.bf16.mxu0 %v1636
    %1682 = vmatpush1.bf16.msra.mxu0 %v1635
    %1683 = vmatprep.subr.bf16.mxu0 %v1639
    %1684 = vmatpush1.bf16.msra.mxu0 %v1638
    %1685 = vmatprep.subr.bf16.mxu0 %v1642
    %1686 = vmatpush1.bf16.msra.mxu0 %v1641
    %1687 = vmatprep.subr.bf16.mxu0 %v1645
    %1688 = vmatpush1.bf16.msra.mxu0 %v1644
    %1689 = vmatprep.subr.bf16.mxu0 %v1648
    %1690 = vmatpush1.bf16.msra.mxu0 %v1647
    %1691 = vmatprep.subr.bf16.mxu0 %v1651
    %1692 = vmatpush1.bf16.msra.mxu0 %v1650
    %1693 = vmatprep.subr.bf16.mxu0 0
    %1694 = vmatpush1.bf16.msra.mxu0 0
    %1695 = vmatprep.subr.bf16.mxu0 0
    %1696 = vmatpush1.bf16.msra.mxu0 0
    %1697 = vmatprep.subr.bf16.mxu0 0
    %1698 = vmatpush1.bf16.msra.mxu0 0
    %1699 = vmatprep.subr.bf16.mxu0 0
    %1700 = vmatpush1.bf16.msra.mxu0 0
    %1701 = vmatprep.subr.bf16.mxu0 0
    %1702 = vmatpush1.bf16.msra.mxu0 0
    %1703 = vmatprep.subr.bf16.mxu0 0
    %1704 = vmatpush1.bf16.msra.mxu0 0
    %1705 = vmatprep.subr.bf16.mxu0 0
    %1706 = vmatpush1.bf16.msra.mxu0 0
    %1707 = vmatprep.subr.bf16.mxu0 0
    %1708 = vmatpush1.bf16.msra.mxu0 0
    %1709 = vmatprep.mubr.bf16.mxu0 0
    %1710 = vmatmul.mubr.bf16.gmra.mrb[0].mxu0 %v1499
    %v1711 = vpop.f32.mrb[0].mxu0
    %v1712 = vadd.f32 %v1537, %v1711
    %v1713 = vpop.f32.mrb[0].mxu0
    %v1714 = vadd.f32 %v1541, %v1713
    %v1715 = vpop.f32.mrb[0].mxu0
    %v1716 = vpop.f32.mrb[0].mxu0
    %1717 = vdwg.mxu0
    %1718 = vmatprep.subr.bf16.mxu0 0
    %1719 = vmatpush1.bf16.msra.mxu0 %v1631
    %1720 = vmatprep.subr.bf16.mxu0 0
    %1721 = vmatpush1.bf16.msra.mxu0 %v1634
    %1722 = vmatprep.subr.bf16.mxu0 0
    %1723 = vmatpush1.bf16.msra.mxu0 %v1637
    %1724 = vmatprep.subr.bf16.mxu0 0
    %1725 = vmatpush1.bf16.msra.mxu0 %v1640
    %1726 = vmatprep.subr.bf16.mxu0 0
    %1727 = vmatpush1.bf16.msra.mxu0 %v1643
    %1728 = vmatprep.subr.bf16.mxu0 0
    %1729 = vmatpush1.bf16.msra.mxu0 %v1646
    %1730 = vmatprep.subr.bf16.mxu0 0
    %1731 = vmatpush1.bf16.msra.mxu0 %v1649
    %1732 = vmatprep.subr.bf16.mxu0 0
    %1733 = vmatpush1.bf16.msra.mxu0 %v1652
    %1734 = vmatprep.subr.bf16.mxu0 0
    %1735 = vmatpush1.bf16.msra.mxu0 0
    %1736 = vmatprep.subr.bf16.mxu0 0
    %1737 = vmatpush1.bf16.msra.mxu0 0
    %1738 = vmatprep.subr.bf16.mxu0 0
    %1739 = vmatpush1.bf16.msra.mxu0 0
    %1740 = vmatprep.subr.bf16.mxu0 0
    %1741 = vmatpush1.bf16.msra.mxu0 0
    %1742 = vmatprep.subr.bf16.mxu0 0
    %1743 = vmatpush1.bf16.msra.mxu0 0
    %1744 = vmatprep.subr.bf16.mxu0 0
    %1745 = vmatpush1.bf16.msra.mxu0 0
    %1746 = vmatprep.subr.bf16.mxu0 0
    %1747 = vmatpush1.bf16.msra.mxu0 0
    %1748 = vmatprep.subr.bf16.mxu0 0
    %1749 = vmatpush1.bf16.msra.mxu0 0
    %1750 = vmatprep.mubr.bf16.mxu0 0
    %1751 = vmatmul.mubr.bf16.gmra.mrb[0].mxu0 %v1499
    %v1752 = vpop.f32.mrb[0].mxu0
    %v1753 = vadd.f32 %v1545, %v1752
    %v1754 = vpop.f32.mrb[0].mxu0
    %v1755 = vpop.f32.mrb[0].mxu0
    %v1756 = vpop.f32.mrb[0].mxu0
    %1757 = vdwg.mxu0
    %v1758 = vadd.f32 %v1496, %v1712
    %v1759 = vxor.u32 %v1758, 2147483648
    %v1760 = vmul.f32 %v1759, 1.442695
    %v1761 = vpow.pop %v1760
    %v1762 = vadd.f32 %v1761, 1.0
    %v1763 = vrcp.pop %v1762
    %v1764 = vmul.f32 1.0, %v1763
    %v1765 = vadd.f32 %v1497, %v1714
    %v1766 = vxor.u32 %v1765, 2147483648
    %v1767 = vmul.f32 %v1766, 1.442695
    %v1768 = vpow.pop %v1767
    %v1769 = vadd.f32 %v1768, 1.0
    %v1770 = vrcp.pop %v1769
    %v1771 = vmul.f32 1.0, %v1770
    %v1772 = vmul.f32 %v1764, %v1753
    %v1773 = vadd.f32 %v1498, %v1772
    %v1774 = vtanh.pop %v1773
    %v1775 = vsub.f32 1.0, %v1771
    %v1776 = vmul.f32 %v1775, %v1774
    %v1777 = vmul.f32 %v1771, %v1206
    %v1778 = vadd.f32 %v1776, %v1777
    %v1779 = vld [vmem:[%s918] sm:$0xff]
    %v1780 = vld [vmem:[%s918 + $0x8] sm:$0xff]
    %v1781 = vld [vmem:[%s918 + $0x10] sm:$0xff]
    %v1782 = vpack.c.bf16 %v1491, %v1491
    %v1783 = vld [vmem:[%s1211] sm:$0xff]
    %v1784 = vld [vmem:[%s1211 + $0x8] sm:$0xf]
    %v1785 = vld [vmem:[%s1211 + $0xc] sm:$0xff]
    %v1786 = vld [vmem:[%s1211 + $0x14] sm:$0xf]
    %v1787 = vld [vmem:[%s1211 + $0x18] sm:$0xff]
    %v1788 = vld [vmem:[%s1211 + $0x20] sm:$0xf]
    %v1789 = vld [vmem:[%s1211 + $0x24] sm:$0xff]
    %v1790 = vld [vmem:[%s1211 + $0x2c] sm:$0xf]
    %v1791 = vld [vmem:[%s1211 + $0x30] sm:$0xff]
    %v1792 = vld [vmem:[%s1211 + $0x38] sm:$0xf]
    %v1793 = vld [vmem:[%s1211 + $0x3c] sm:$0xff]
    %v1794 = vld [vmem:[%s1211 + $0x44] sm:$0xf]
    %v1795 = vld [vmem:[%s1211 + $0x48] sm:$0xff]
    %v1796 = vld [vmem:[%s1211 + $0x50] sm:$0xf]
    %v1797 = vld [vmem:[%s1211 + $0x54] sm:$0xff]
    %v1798 = vld [vmem:[%s1211 + $0x5c] sm:$0xf]
    %v1799 = vld [vmem:[%s1211 + $0x60] sm:$0xff]
    %v1800 = vld [vmem:[%s1211 + $0x68] sm:$0xf]
    %v1801 = vld [vmem:[%s1211 + $0x6c] sm:$0xff]
    %v1802 = vld [vmem:[%s1211 + $0x74] sm:$0xf]
    %v1803 = vld [vmem:[%s1211 + $0x78] sm:$0xff]
    %v1804 = vld [vmem:[%s1211 + $0x80] sm:$0xf]
    %v1805 = vld [vmem:[%s1211 + $0x84] sm:$0xff]
    %v1806 = vld [vmem:[%s1211 + $0x8c] sm:$0xf]
    %v1807 = vld [vmem:[%s1211 + $0x90] sm:$0xff]
    %v1808 = vld [vmem:[%s1211 + $0x98] sm:$0xf]
    %v1809 = vld [vmem:[%s1211 + $0x9c] sm:$0xff]
    %v1810 = vld [vmem:[%s1211 + $0xa4] sm:$0xf]
    %v1811 = vld [vmem:[%s1211 + $0xa8] sm:$0xff]
    %v1812 = vld [vmem:[%s1211 + $0xb0] sm:$0xf]
    %v1813 = vld [vmem:[%s1211 + $0xb4] sm:$0xff]
    %v1814 = vld [vmem:[%s1211 + $0xbc] sm:$0xf]
    %v1815 = vld [vmem:[%s1244] sm:$0x7]
    %v1817 = vlaneseq
    %v1818 = vshrl.u32 %v1817, 7
    %v1819 = vsub.s32 0, %v1818
    %v1820 = vrot.slane %v1815, %v1819
    %v1821 = vlaneseq
    %v1822 = vshrl.u32 %v1821, 7
    %v1823 = vsub.s32 1, %v1822
    %v1824 = vrot.slane %v1815, %v1823
    %v1825 = vlaneseq
    %v1826 = vshrl.u32 %v1825, 7
    %v1827 = vsub.s32 2, %v1826
    %v1828 = vrot.slane %v1815, %v1827
    %v1864 = vunpack.c.l.b16 %v1783
    %v1865 = vunpack.c.h.b16 %v1783
    %v1866 = vunpack.c.l.b16 %v1784
    %v1867 = vunpack.c.l.b16 %v1785
    %v1868 = vunpack.c.h.b16 %v1785
    %v1869 = vunpack.c.l.b16 %v1786
    %v1870 = vunpack.c.l.b16 %v1787
    %v1871 = vunpack.c.h.b16 %v1787
    %v1872 = vunpack.c.l.b16 %v1788
    %v1873 = vunpack.c.l.b16 %v1789
    %v1874 = vunpack.c.h.b16 %v1789
    %v1875 = vunpack.c.l.b16 %v1790
    %v1876 = vunpack.c.l.b16 %v1791
    %v1877 = vunpack.c.h.b16 %v1791
    %v1878 = vunpack.c.l.b16 %v1792
    %v1879 = vunpack.c.l.b16 %v1793
    %v1880 = vunpack.c.h.b16 %v1793
    %v1881 = vunpack.c.l.b16 %v1794
    %v1882 = vunpack.c.l.b16 %v1795
    %v1883 = vunpack.c.h.b16 %v1795
    %v1884 = vunpack.c.l.b16 %v1796
    %v1885 = vunpack.c.l.b16 %v1797
    %v1886 = vunpack.c.h.b16 %v1797
    %v1887 = vunpack.c.l.b16 %v1798
    %v1888 = vunpack.c.l.b16 %v1799
    %v1889 = vunpack.c.h.b16 %v1799
    %v1890 = vunpack.c.l.b16 %v1800
    %v1891 = vunpack.c.l.b16 %v1801
    %v1892 = vunpack.c.h.b16 %v1801
    %v1893 = vunpack.c.l.b16 %v1802
    %v1894 = vunpack.c.l.b16 %v1803
    %v1895 = vunpack.c.h.b16 %v1803
    %v1896 = vunpack.c.l.b16 %v1804
    %v1897 = vunpack.c.l.b16 %v1805
    %v1898 = vunpack.c.h.b16 %v1805
    %v1899 = vunpack.c.l.b16 %v1806
    %v1900 = vunpack.c.l.b16 %v1807
    %v1901 = vunpack.c.h.b16 %v1807
    %v1902 = vunpack.c.l.b16 %v1808
    %v1903 = vunpack.c.l.b16 %v1809
    %v1904 = vunpack.c.h.b16 %v1809
    %v1905 = vunpack.c.l.b16 %v1810
    %v1906 = vunpack.c.l.b16 %v1811
    %v1907 = vunpack.c.h.b16 %v1811
    %v1908 = vunpack.c.l.b16 %v1812
    %v1909 = vunpack.c.l.b16 %v1813
    %v1910 = vunpack.c.h.b16 %v1813
    %v1911 = vunpack.c.l.b16 %v1814
    %v1912 = vpack.c.b16 %v1867, %v1864
    %v1913 = vpack.c.b16 %v1868, %v1865
    %v1914 = vpack.c.b16 %v1869, %v1866
    %v1915 = vpack.c.b16 %v1873, %v1870
    %v1916 = vpack.c.b16 %v1874, %v1871
    %v1917 = vpack.c.b16 %v1875, %v1872
    %v1918 = vpack.c.b16 %v1879, %v1876
    %v1919 = vpack.c.b16 %v1880, %v1877
    %v1920 = vpack.c.b16 %v1881, %v1878
    %v1921 = vpack.c.b16 %v1885, %v1882
    %v1922 = vpack.c.b16 %v1886, %v1883
    %v1923 = vpack.c.b16 %v1887, %v1884
    %v1924 = vpack.c.b16 %v1891, %v1888
    %v1925 = vpack.c.b16 %v1892, %v1889
    %v1926 = vpack.c.b16 %v1893, %v1890
    %v1927 = vpack.c.b16 %v1897, %v1894
    %v1928 = vpack.c.b16 %v1898, %v1895
    %v1929 = vpack.c.b16 %v1899, %v1896
    %v1930 = vpack.c.b16 %v1903, %v1900
    %v1931 = vpack.c.b16 %v1904, %v1901
    %v1932 = vpack.c.b16 %v1905, %v1902
    %v1933 = vpack.c.b16 %v1909, %v1906
    %v1934 = vpack.c.b16 %v1910, %v1907
    %v1935 = vpack.c.b16 %v1911, %v1908
    %1960 = vmatprep.subr.bf16.mxu0 %v1913
    %1961 = vmatpush1.bf16.msra.mxu0 %v1912
    %1962 = vmatprep.subr.bf16.mxu0 %v1916
    %1963 = vmatpush1.bf16.msra.mxu0 %v1915
    %1964 = vmatprep.subr.bf16.mxu0 %v1919
    %1965 = vmatpush1.bf16.msra.mxu0 %v1918
    %1966 = vmatprep.subr.bf16.mxu0 %v1922
    %1967 = vmatpush1.bf16.msra.mxu0 %v1921
    %1968 = vmatprep.subr.bf16.mxu0 %v1925
    %1969 = vmatpush1.bf16.msra.mxu0 %v1924
    %1970 = vmatprep.subr.bf16.mxu0 %v1928
    %1971 = vmatpush1.bf16.msra.mxu0 %v1927
    %1972 = vmatprep.subr.bf16.mxu0 %v1931
    %1973 = vmatpush1.bf16.msra.mxu0 %v1930
    %1974 = vmatprep.subr.bf16.mxu0 %v1934
    %1975 = vmatpush1.bf16.msra.mxu0 %v1933
    %1976 = vmatprep.subr.bf16.mxu0 0
    %1977 = vmatpush1.bf16.msra.mxu0 0
    %1978 = vmatprep.subr.bf16.mxu0 0
    %1979 = vmatpush1.bf16.msra.mxu0 0
    %1980 = vmatprep.subr.bf16.mxu0 0
    %1981 = vmatpush1.bf16.msra.mxu0 0
    %1982 = vmatprep.subr.bf16.mxu0 0
    %1983 = vmatpush1.bf16.msra.mxu0 0
    %1984 = vmatprep.subr.bf16.mxu0 0
    %1985 = vmatpush1.bf16.msra.mxu0 0
    %1986 = vmatprep.subr.bf16.mxu0 0
    %1987 = vmatpush1.bf16.msra.mxu0 0
    %1988 = vmatprep.subr.bf16.mxu0 0
    %1989 = vmatpush1.bf16.msra.mxu0 0
    %1990 = vmatprep.subr.bf16.mxu0 0
    %1991 = vmatpush1.bf16.msra.mxu0 0
    %1992 = vmatprep.mubr.bf16.mxu0 0
    %1993 = vmatmul.mubr.bf16.gmra.mrb[0].mxu0 %v1782
    %v1994 = vpop.f32.mrb[0].mxu0
    %v1995 = vadd.f32 %v1820, %v1994
    %v1996 = vpop.f32.mrb[0].mxu0
    %v1997 = vadd.f32 %v1824, %v1996
    %v1998 = vpop.f32.mrb[0].mxu0
    %v1999 = vpop.f32.mrb[0].mxu0
    %2000 = vdwg.mxu0
    %2001 = vmatprep.subr.bf16.mxu0 0
    %2002 = vmatpush1.bf16.msra.mxu0 %v1914
    %2003 = vmatprep.subr.bf16.mxu0 0
    %2004 = vmatpush1.bf16.msra.mxu0 %v1917
    %2005 = vmatprep.subr.bf16.mxu0 0
    %2006 = vmatpush1.bf16.msra.mxu0 %v1920
    %2007 = vmatprep.subr.bf16.mxu0 0
    %2008 = vmatpush1.bf16.msra.mxu0 %v1923
    %2009 = vmatprep.subr.bf16.mxu0 0
    %2010 = vmatpush1.bf16.msra.mxu0 %v1926
    %2011 = vmatprep.subr.bf16.mxu0 0
    %2012 = vmatpush1.bf16.msra.mxu0 %v1929
    %2013 = vmatprep.subr.bf16.mxu0 0
    %2014 = vmatpush1.bf16.msra.mxu0 %v1932
    %2015 = vmatprep.subr.bf16.mxu0 0
    %2016 = vmatpush1.bf16.msra.mxu0 %v1935
    %2017 = vmatprep.subr.bf16.mxu0 0
    %2018 = vmatpush1.bf16.msra.mxu0 0
    %2019 = vmatprep.subr.bf16.mxu0 0
    %2020 = vmatpush1.bf16.msra.mxu0 0
    %2021 = vmatprep.subr.bf16.mxu0 0
    %2022 = vmatpush1.bf16.msra.mxu0 0
    %2023 = vmatprep.subr.bf16.mxu0 0
    %2024 = vmatpush1.bf16.msra.mxu0 0
    %2025 = vmatprep.subr.bf16.mxu0 0
    %2026 = vmatpush1.bf16.msra.mxu0 0
    %2027 = vmatprep.subr.bf16.mxu0 0
    %2028 = vmatpush1.bf16.msra.mxu0 0
    %2029 = vmatprep.subr.bf16.mxu0 0
    %2030 = vmatpush1.bf16.msra.mxu0 0
    %2031 = vmatprep.subr.bf16.mxu0 0
    %2032 = vmatpush1.bf16.msra.mxu0 0
    %2033 = vmatprep.mubr.bf16.mxu0 0
    %2034 = vmatmul.mubr.bf16.gmra.mrb[0].mxu0 %v1782
    %v2035 = vpop.f32.mrb[0].mxu0
    %v2036 = vadd.f32 %v1828, %v2035
    %v2037 = vpop.f32.mrb[0].mxu0
    %v2038 = vpop.f32.mrb[0].mxu0
    %v2039 = vpop.f32.mrb[0].mxu0
    %2040 = vdwg.mxu0
    %v2041 = vadd.f32 %v1779, %v1995
    %v2042 = vxor.u32 %v2041, 2147483648
    %v2043 = vmul.f32 %v2042, 1.442695
    %v2044 = vpow.pop %v2043
    %v2045 = vadd.f32 %v2044, 1.0
    %v2046 = vrcp.pop %v2045
    %v2047 = vmul.f32 1.0, %v2046
    %v2048 = vadd.f32 %v1780, %v1997
    %v2049 = vxor.u32 %v2048, 2147483648
    %v2050 = vmul.f32 %v2049, 1.442695
    %v2051 = vpow.pop %v2050
    %v2052 = vadd.f32 %v2051, 1.0
    %v2053 = vrcp.pop %v2052
    %v2054 = vmul.f32 1.0, %v2053
    %v2055 = vmul.f32 %v2047, %v2036
    %v2056 = vadd.f32 %v1781, %v2055
    %v2057 = vtanh.pop %v2056
    %v2058 = vsub.f32 1.0, %v2054
    %v2059 = vmul.f32 %v2058, %v2057
    %v2060 = vmul.f32 %v2054, %v1491
    %v2061 = vadd.f32 %v2059, %v2060
    %2062 = vst [vmem:[%s1493] sm:$0xff] %v1778
    %2063 = vst [vmem:[%s5 + $0x8] sm:$0xff] %v2061
    // Predicated region
    $region34: #{textrnn_forward.4} parent=1 // pred_check
      _
    $region35: #{textrnn_forward.4} parent=1 // pred_check_branch
      %2065 = sbr.rel (0) target = $region37
    $region36: #{textrnn_forward.4} parent=1 // pred_region
      _
    $region37: #{textrnn_forward.4} parent=1 // pred_fallthru
      _
    // Predicated region
    $region38: #{textrnn_forward.4} parent=1 // pred_check
      _
    $region39: #{textrnn_forward.4} parent=1 // pred_check_branch
      %2067 = sbr.rel (0) target = $region41
    $region40: #{textrnn_forward.4} parent=1 // pred_region
      _
    $region41: #{textrnn_forward.4} parent=1 // pred_fallthru
      _
    %2068 = vsyncpa [#allocation4], 1
    %2069 = vsyncpa [#allocation6], 1

// kernel: textrnn_forward.5
$region0: #{textrnn_forward.5}
  #allocation0 [shape = 'u32[]', space=smem, size = 0x4, offset = 0x4, fixed_abs, tag = 'smem constant byte address 0x4 - core index']
  #allocation1 [shape = 'u32[144,128]{1,0:T(1,128)}', space=vmem, size = 0x12000, scoped, tag = 'internal scratch']
  %s0 = inlined_call_operand.vmem [shape: f32[2,128], index: 0, kind: input, shape index: {}]
  %s1 = inlined_call_operand.vmem [shape: f32[128,64], index: 1, kind: input, shape index: {}]
  %s2 = inlined_call_operand.vmem [shape: f32[1,64], index: 2, kind: input, shape index: {}]
  %s3 = inlined_call_operand.vmem [shape: f32[64,5], index: 3, kind: input, shape index: {}]
  %s4 = inlined_call_operand.vmem [shape: f32[1,5], index: 4, kind: input, shape index: {}]
  %s5 = inlined_call_operand.hbm [shape: f32[2,5], index: 5, kind: output, shape index: {}]
  %s6 = sld [smem:[#allocation0]]
  $region30: #{textrnn_forward.5} parent=0
    _
  %s8 = ssub.s32 1, %s6
  %s9 = scalar_select 0, %s8, %s6
  $region1: #{textrnn_forward.5} parent=0
    #allocation2 [shape = 'u8[1024]{0}', space=vmem, size = 0x400, scoped, tag = 'output window, operand 0, single buffered']
    #allocation3 [shape = 's32[1]{0}', space=sflag, size = 0x4, scoped, tag = 'scoped memory for textrnn_forward.5']
    %10 = vsyncpa [#allocation3], 0
    // Predicated region
    $region2: #{textrnn_forward.5} parent=1 // pred_check
      _
    $region3: #{textrnn_forward.5} parent=1 // pred_check_branch
      %12 = sbr.rel (0) target = $region5
    $region4: #{textrnn_forward.5} parent=1 // pred_region
      _
    $region5: #{textrnn_forward.5} parent=1 // pred_fallthru
      _
    // Predicated region
    $region6: #{textrnn_forward.5} parent=1 // pred_check
      _
    $region7: #{textrnn_forward.5} parent=1 // pred_check_branch
      %14 = sbr.rel (0) target = $region9
    $region8: #{textrnn_forward.5} parent=1 // pred_region
      _
    $region9: #{textrnn_forward.5} parent=1 // pred_fallthru
      _
    // Predicated region
    $region10: #{textrnn_forward.5} parent=1 // pred_check
      _
    $region11: #{textrnn_forward.5} parent=1 // pred_check_branch
      %16 = sbr.rel (0) target = $region13
    $region12: #{textrnn_forward.5} parent=1 // pred_region
      _
    $region13: #{textrnn_forward.5} parent=1 // pred_fallthru
      _
    // Predicated region
    $region14: #{textrnn_forward.5} parent=1 // pred_check
      _
    $region15: #{textrnn_forward.5} parent=1 // pred_check_branch
      %18 = sbr.rel (0) target = $region17
    $region16: #{textrnn_forward.5} parent=1 // pred_region
      _
    $region17: #{textrnn_forward.5} parent=1 // pred_fallthru
      _
    // Predicated region
    $region18: #{textrnn_forward.5} parent=1 // pred_check
      _
    $region19: #{textrnn_forward.5} parent=1 // pred_check_branch
      %20 = sbr.rel (0) target = $region21
    $region20: #{textrnn_forward.5} parent=1 // pred_region
      _
    $region21: #{textrnn_forward.5} parent=1 // pred_fallthru
      _
    %v21 = vld [vmem:[%s0] sm:$0x3]
    %v22 = vld [vmem:[%s1] sm:$0xff]
    %v23 = vld [vmem:[%s1 + $0x8] sm:$0xff]
    %v24 = vld [vmem:[%s1 + $0x10] sm:$0xff]
    %v25 = vld [vmem:[%s1 + $0x18] sm:$0xff]
    %v26 = vld [vmem:[%s1 + $0x20] sm:$0xff]
    %v27 = vld [vmem:[%s1 + $0x28] sm:$0xff]
    %v28 = vld [vmem:[%s1 + $0x30] sm:$0xff]
    %v29 = vld [vmem:[%s1 + $0x38] sm:$0xff]
    %v30 = vld [vmem:[%s1 + $0x40] sm:$0xff]
    %v31 = vld [vmem:[%s1 + $0x48] sm:$0xff]
    %v32 = vld [vmem:[%s1 + $0x50] sm:$0xff]
    %v33 = vld [vmem:[%s1 + $0x58] sm:$0xff]
    %v34 = vld [vmem:[%s1 + $0x60] sm:$0xff]
    %v35 = vld [vmem:[%s1 + $0x68] sm:$0xff]
    %v36 = vld [vmem:[%s1 + $0x70] sm:$0xff]
    %v37 = vld [vmem:[%s1 + $0x78] sm:$0xff]
    %v38 = vld [vmem:[%s2] sm:$0x1]
    %v40 = vlaneseq
    %v41 = vshrl.u32 %v40, 7
    %v42 = vsub.s32 0, %v41
    %v43 = vrot.slane %v38, %v42
    %45 = vmatprep.subr.mxu0 0.0
    %46 = vmatpush1.msra.mxu0 %v22
    %47 = vmatprep.subr.mxu0 0.0
    %48 = vmatpush1.msra.mxu0 %v23
    %49 = vmatprep.subr.mxu0 0.0
    %50 = vmatpush1.msra.mxu0 %v24
    %51 = vmatprep.subr.mxu0 0.0
    %52 = vmatpush1.msra.mxu0 %v25
    %53 = vmatprep.subr.mxu0 0.0
    %54 = vmatpush1.msra.mxu0 %v26
    %55 = vmatprep.subr.mxu0 0.0
    %56 = vmatpush1.msra.mxu0 %v27
    %57 = vmatprep.subr.mxu0 0.0
    %58 = vmatpush1.msra.mxu0 %v28
    %59 = vmatprep.subr.mxu0 0.0
    %60 = vmatpush1.msra.mxu0 %v29
    %61 = vmatprep.subr.mxu0 0.0
    %62 = vmatpush1.msra.mxu0 %v30
    %63 = vmatprep.subr.mxu0 0.0
    %64 = vmatpush1.msra.mxu0 %v31
    %65 = vmatprep.subr.mxu0 0.0
    %66 = vmatpush1.msra.mxu0 %v32
    %67 = vmatprep.subr.mxu0 0.0
    %68 = vmatpush1.msra.mxu0 %v33
    %69 = vmatprep.subr.mxu0 0.0
    %70 = vmatpush1.msra.mxu0 %v34
    %71 = vmatprep.subr.mxu0 0.0
    %72 = vmatpush1.msra.mxu0 %v35
    %73 = vmatprep.subr.mxu0 0.0
    %74 = vmatpush1.msra.mxu0 %v36
    %75 = vmatprep.subr.mxu0 0.0
    %76 = vmatpush1.msra.mxu0 %v37
    %77 = vmatprep.subr.mxu0 0.0
    %78 = vmatpush1.msra.mxu0 0.0
    %79 = vmatprep.subr.mxu0 0.0
    %80 = vmatpush1.msra.mxu0 0.0
    %81 = vmatprep.subr.mxu0 0.0
    %82 = vmatpush1.msra.mxu0 0.0
    %83 = vmatprep.subr.mxu0 0.0
    %84 = vmatpush1.msra.mxu0 0.0
    %85 = vmatprep.subr.mxu0 0.0
    %86 = vmatpush1.msra.mxu0 0.0
    %87 = vmatprep.subr.mxu0 0.0
    %88 = vmatpush1.msra.mxu0 0.0
    %89 = vmatprep.subr.mxu0 0.0
    %90 = vmatpush1.msra.mxu0 0.0
    %91 = vmatprep.subr.mxu0 0.0
    %92 = vmatpush1.msra.mxu0 0.0
    %93 = vmatprep.subr.mxu0 0.0
    %94 = vmatpush1.msra.mxu0 0.0
    %95 = vmatprep.subr.mxu0 0.0
    %96 = vmatpush1.msra.mxu0 0.0
    %97 = vmatprep.subr.mxu0 0.0
    %98 = vmatpush1.msra.mxu0 0.0
    %99 = vmatprep.subr.mxu0 0.0
    %100 = vmatpush1.msra.mxu0 0.0
    %101 = vmatprep.subr.mxu0 0.0
    %102 = vmatpush1.msra.mxu0 0.0
    %103 = vmatprep.subr.mxu0 0.0
    %104 = vmatpush1.msra.mxu0 0.0
    %105 = vmatprep.subr.mxu0 0.0
    %106 = vmatpush1.msra.mxu0 0.0
    %107 = vmatprep.subr.mxu0 0.0
    %108 = vmatpush1.msra.mxu0 0.0
    %109 = vmatprep.mubr.f32.mxu0 0.0
    %110 = vmatmul.mubr.f32.gmra.mrb[0].mxu0 %v21
    %v111 = vpop.f32.mrb[0].mxu0
    %v112 = vadd.f32 %v43, %v111
    %v113 = vpop.f32.mrb[0].mxu0
    %114 = vdwg.mxu0
    %v115 = vmax.f32 %v112, 0.0
    %v116 = vld [vmem:[%s3] sm:$0xff]
    %v117 = vld [vmem:[%s3 + $0x8] sm:$0xff]
    %v118 = vld [vmem:[%s3 + $0x10] sm:$0xff]
    %v119 = vld [vmem:[%s3 + $0x18] sm:$0xff]
    %v120 = vld [vmem:[%s3 + $0x20] sm:$0xff]
    %v121 = vld [vmem:[%s3 + $0x28] sm:$0xff]
    %v122 = vld [vmem:[%s3 + $0x30] sm:$0xff]
    %v123 = vld [vmem:[%s3 + $0x38] sm:$0xff]
    %v124 = vld [vmem:[%s4] sm:$0x1]
    %v126 = vlaneseq
    %v127 = vshrl.u32 %v126, 7
    %v128 = vsub.s32 0, %v127
    %v129 = vrot.slane %v124, %v128
    %vm131 = vcmask 523264
    %v133 = vsel %vm131, %v115, 0
    %135 = vmatprep.subr.mxu0 0.0
    %136 = vmatpush1.msra.mxu0 %v116
    %137 = vmatprep.subr.mxu0 0.0
    %138 = vmatpush1.msra.mxu0 %v117
    %139 = vmatprep.subr.mxu0 0.0
    %140 = vmatpush1.msra.mxu0 %v118
    %141 = vmatprep.subr.mxu0 0.0
    %142 = vmatpush1.msra.mxu0 %v119
    %143 = vmatprep.subr.mxu0 0.0
    %144 = vmatpush1.msra.mxu0 %v120
    %145 = vmatprep.subr.mxu0 0.0
    %146 = vmatpush1.msra.mxu0 %v121
    %147 = vmatprep.subr.mxu0 0.0
    %148 = vmatpush1.msra.mxu0 %v122
    %149 = vmatprep.subr.mxu0 0.0
    %150 = vmatpush1.msra.mxu0 %v123
    %151 = vmatprep.subr.mxu0 0.0
    %152 = vmatpush1.msra.mxu0 0.0
    %153 = vmatprep.subr.mxu0 0.0
    %154 = vmatpush1.msra.mxu0 0.0
    %155 = vmatprep.subr.mxu0 0.0
    %156 = vmatpush1.msra.mxu0 0.0
    %157 = vmatprep.subr.mxu0 0.0
    %158 = vmatpush1.msra.mxu0 0.0
    %159 = vmatprep.subr.mxu0 0.0
    %160 = vmatpush1.msra.mxu0 0.0
    %161 = vmatprep.subr.mxu0 0.0
    %162 = vmatpush1.msra.mxu0 0.0
    %163 = vmatprep.subr.mxu0 0.0
    %164 = vmatpush1.msra.mxu0 0.0
    %165 = vmatprep.subr.mxu0 0.0
    %166 = vmatpush1.msra.mxu0 0.0
    %167 = vmatprep.subr.mxu0 0.0
    %168 = vmatpush1.msra.mxu0 0.0
    %169 = vmatprep.subr.mxu0 0.0
    %170 = vmatpush1.msra.mxu0 0.0
    %171 = vmatprep.subr.mxu0 0.0
    %172 = vmatpush1.msra.mxu0 0.0
    %173 = vmatprep.subr.mxu0 0.0
    %174 = vmatpush1.msra.mxu0 0.0
    %175 = vmatprep.subr.mxu0 0.0
    %176 = vmatpush1.msra.mxu0 0.0
    %177 = vmatprep.subr.mxu0 0.0
    %178 = vmatpush1.msra.mxu0 0.0
    %179 = vmatprep.subr.mxu0 0.0
    %180 = vmatpush1.msra.mxu0 0.0
    %181 = vmatprep.subr.mxu0 0.0
    %182 = vmatpush1.msra.mxu0 0.0
    %183 = vmatprep.subr.mxu0 0.0
    %184 = vmatpush1.msra.mxu0 0.0
    %185 = vmatprep.subr.mxu0 0.0
    %186 = vmatpush1.msra.mxu0 0.0
    %187 = vmatprep.subr.mxu0 0.0
    %188 = vmatpush1.msra.mxu0 0.0
    %189 = vmatprep.subr.mxu0 0.0
    %190 = vmatpush1.msra.mxu0 0.0
    %191 = vmatprep.subr.mxu0 0.0
    %192 = vmatpush1.msra.mxu0 0.0
    %193 = vmatprep.subr.mxu0 0.0
    %194 = vmatpush1.msra.mxu0 0.0
    %195 = vmatprep.subr.mxu0 0.0
    %196 = vmatpush1.msra.mxu0 0.0
    %197 = vmatprep.subr.mxu0 0.0
    %198 = vmatpush1.msra.mxu0 0.0
    %199 = vmatprep.mubr.f32.mxu0 0.0
    %200 = vmatmul.mubr.f32.gmra.mrb[0].mxu0 %v133
    %v201 = vpop.f32.mrb[0].mxu0
    %v202 = vadd.f32 %v129, %v201
    %v203 = vpop.f32.mrb[0].mxu0
    %204 = vdwg.mxu0
    %vm205 = vcmask 33792
    %206 = vst.msk [vmem:[#allocation2] sm:$0x3] %vm205, %v202
    // Predicated region
    $region22: #{textrnn_forward.5} parent=1 // pred_check
      _
    $region23: #{textrnn_forward.5} parent=1 // pred_check_branch
      %208 = sbr.rel (0) target = $region25
    $region24: #{textrnn_forward.5} parent=1 // pred_region
      %s210 = ssub.s32 32, 32
      %211 = vsyncadd [#allocation3], %s210
      %s213 = sshll.u32 [#allocation2], 4
      %s214 = int_to_ptr.vmem [resolvable:$true] %s213
      %216 = dma.vmem_to_hbm [thread:$0]  %s214, 32, %s5, [#allocation3]
    $region25: #{textrnn_forward.5} parent=1 // pred_fallthru
      _
    // Predicated region
    $region26: #{textrnn_forward.5} parent=1 // pred_check
      _
    $region27: #{textrnn_forward.5} parent=1 // pred_check_branch
      %218 = sbr.rel (0) target = $region29
    $region28: #{textrnn_forward.5} parent=1 // pred_region
      %219 = dma.done [#allocation3], 32
    $region29: #{textrnn_forward.5} parent=1 // pred_fallthru
      _
    %220 = vsyncpa [#allocation3], 1

</llo_original>
